<compile_context>
chip_gen: v6e
topology: v6e:2x2x1
jax: 0.10.0
libtpu: 0.0.40
codegen_flags: <defaults>
</compile_context>

<pallas_src>
import functools
import math

import jax
import jax.numpy as jnp
import numpy as np
from jax import lax
from jax.experimental import pallas as pl
from jax.experimental.pallas import tpu as pltpu  # noqa: F401  (kept for TPU-specific tweaks)

D_MODEL = 32
NHEAD = 4
DIM_FF = 64
HEAD_DIM = D_MODEL // NHEAD
LN_EPS = 1e-5

# ---- static column offsets into the packed weight / bias slabs --------------------
_QKV1 = 0
_WO1 = _QKV1 + 3 * D_MODEL          # 96
_QKV2 = _WO1 + D_MODEL              # 128
_WO2 = _QKV2 + 3 * D_MODEL          # 224
_W1 = _WO2 + D_MODEL                # 256
_W2T = _W1 + DIM_FF                 # 320   (w2 stored transposed: (D, FF))
_WCOLS = _W2T + DIM_FF              # 384

_B_QKV1 = 0
_B_O1 = _B_QKV1 + 3 * D_MODEL       # 96
_B_QKV2 = _B_O1 + D_MODEL           # 128
_B_O2 = _B_QKV2 + 3 * D_MODEL       # 224
_B_1 = _B_O2 + D_MODEL              # 256
_B_2 = _B_1 + DIM_FF                # 320
_BCOLS = _B_2 + D_MODEL             # 352

_NEG = -1e30


def _layer_kernel(x_ref, w_ref, b_ref, ln_ref, o_ref, *, batch):
    """Full decoder layer on a flat (L*B, D) slab; row r ~ (l = r // batch, b = r % batch)."""
    n = x_ref.shape[0]                       # L*B rows
    x = x_ref[...].astype(jnp.float32)       # (N, D)

    # Static cross-batch attention bias: -inf where row batch != col batch.
    row_i = lax.broadcasted_iota(jnp.int32, (n, n), 0)
    col_i = lax.broadcasted_iota(jnp.int32, (n, n), 1)
    if (batch & (batch - 1)) == 0:           # power-of-two batch -> cheap bitwise AND
        row_b = row_i & (batch - 1)
        col_b = col_i & (batch - 1)
    else:
        row_b = lax.rem(row_i, batch)
        col_b = lax.rem(col_i, batch)
    attn_bias = jnp.where(row_b == col_b, 0.0, _NEG).astype(jnp.float32)

    scale = 1.0 / math.sqrt(HEAD_DIM)

    def layernorm(v, idx):
        g = ln_ref[idx:idx + 1, :]           # (1, D)
        b = ln_ref[idx + 3:idx + 4, :]       # (1, D)
        mu = jnp.mean(v, axis=-1, keepdims=True)
        var = jnp.mean((v - mu) ** 2, axis=-1, keepdims=True)
        return (v - mu) * lax.rsqrt(var + LN_EPS) * g + b

    def mha(v, qkv_off, bqkv_off, wo_off, bo_off):
        # Single fused QKV projection over the whole (N, D) slab (batch folded into M).
        wqkv = w_ref[:, qkv_off:qkv_off + 3 * D_MODEL]          # (D, 3D)
        bqkv = b_ref[:, bqkv_off:bqkv_off + 3 * D_MODEL]        # (1, 3D)
        qkv = jnp.dot(v, wqkv, preferred_element_type=jnp.float32) + bqkv

        acc = jnp.zeros((n, D_MODEL), jnp.float32)
        for h in range(NHEAD):                                   # static unroll over heads
            c = h * HEAD_DIM
            qh = qkv[:, c:c + HEAD_DIM] * scale                  # (N, hd)
            kh = qkv[:, D_MODEL + c:D_MODEL + c + HEAD_DIM]      # (N, hd)
            vh = qkv[:, 2 * D_MODEL + c:2 * D_MODEL + c + HEAD_DIM]
            # scores for the whole slab; cross-batch pairs killed by attn_bias
            s = lax.dot_general(qh, kh, (((1,), (1,)), ((), ())),
                                preferred_element_type=jnp.float32)
            s = s + attn_bias
            s = s - jnp.max(s, axis=-1, keepdims=True)
            p = jnp.exp(s)                                       # unnormalized probs
            # Fold softmax denominator into the (N, hd) PV output (cheaper than scaling p).
            # approx=False keeps the 1e-4 tolerance guaranteed; approx=True would use the
            # EUP slot but risks the tolerance budget.
            inv = pl.reciprocal(jnp.sum(p, axis=-1, keepdims=True))
            pv = jnp.dot(p, vh, preferred_element_type=jnp.float32) * inv
            # accumulate per-head output projection (no lane-axis concat)
            woh = w_ref[c:c + HEAD_DIM, wo_off:wo_off + D_MODEL]  # (hd, D), static slice
            acc = acc + jnp.dot(pv, woh, preferred_element_type=jnp.float32)
        return acc + b_ref[:, bo_off:bo_off + D_MODEL]

    # --- block 1: self-attn, residual, LayerNorm1
    t = layernorm(x + mha(x, _QKV1, _B_QKV1, _WO1, _B_O1), 0)
    # --- block 2: second self-attn, residual, LayerNorm2
    t = layernorm(t + mha(t, _QKV2, _B_QKV2, _WO2, _B_O2), 1)
    # --- FFN: linear1 -> relu -> linear2, residual, LayerNorm3
    w1 = w_ref[:, _W1:_W1 + DIM_FF]                              # (D, FF)
    b1 = b_ref[:, _B_1:_B_1 + DIM_FF]                            # (1, FF)
    w2t = w_ref[:, _W2T:_W2T + DIM_FF]                           # (D, FF) == w2.T
    b2 = b_ref[:, _B_2:_B_2 + D_MODEL]                           # (1, D)
    hid = jnp.maximum(jnp.dot(t, w1, preferred_element_type=jnp.float32) + b1, 0.0)
    # hid @ w2 computed as a contraction against the stored w2.T (no in-kernel transpose)
    ffn = lax.dot_general(hid, w2t, (((1,), (1,)), ((), ())),
                          preferred_element_type=jnp.float32) + b2
    t = layernorm(t + ffn, 2)

    o_ref[...] = t.astype(o_ref.dtype)


def pack_params(p):
    """Pack the 14 per-op parameters into 3 DMA-friendly slabs."""
    wpack = jnp.concatenate(
        [p["wqkv1"], p["wo1"], p["wqkv2"], p["wo2"], p["w1"], p["w2"].T], axis=1)
    assert wpack.shape == (D_MODEL, _WCOLS)
    bpack = jnp.concatenate(
        [p["bqkv1"], p["bo1"], p["bqkv2"], p["bo2"], p["b1"], p["b2"]], axis=1)
    assert bpack.shape == (1, _BCOLS)
    lnpack = jnp.concatenate([p["ln_g"], p["ln_b"]], axis=0)     # (6, D)
    return wpack, bpack, lnpack


def self_attn_decoder_layer(tgt, packed):
    """tgt: (seq, batch, d_model) -- PyTorch nn.MultiheadAttention default layout."""
    L, B, D = tgt.shape
    assert D == D_MODEL
    wpack, bpack, lnpack = packed
    # Free metadata reshape (no transpose, no HBM round trip): row r -> (l=r//B, b=r%B).
    x2d = tgt.reshape(L * B, D)
    out2d = pl.pallas_call(
        functools.partial(_layer_kernel, batch=B),
        out_shape=jax.ShapeDtypeStruct((L * B, D), tgt.dtype),
    )(x2d, wpack, bpack, lnpack)
    return out2d.reshape(L, B, D)


def init_params(key):
    ks = jax.random.split(key, 16)
    s = 0.1
    p = {
        "wqkv1": jax.random.normal(ks[0], (D_MODEL, 3 * D_MODEL), jnp.float32) * s,
        "bqkv1": jax.random.normal(ks[1], (1, 3 * D_MODEL), jnp.float32) * s,
        "wo1":   jax.random.normal(ks[2], (D_MODEL, D_MODEL), jnp.float32) * s,
        "bo1":   jax.random.normal(ks[3], (1, D_MODEL), jnp.float32) * s,
        "wqkv2": jax.random.normal(ks[4], (D_MODEL, 3 * D_MODEL), jnp.float32) * s,
        "bqkv2": jax.random.normal(ks[5], (1, 3 * D_MODEL), jnp.float32) * s,
        "wo2":   jax.random.normal(ks[6], (D_MODEL, D_MODEL), jnp.float32) * s,
        "bo2":   jax.random.normal(ks[7], (1, D_MODEL), jnp.float32) * s,
        "w1":    jax.random.normal(ks[8], (D_MODEL, DIM_FF), jnp.float32) * s,
        "b1":    jax.random.normal(ks[9], (1, DIM_FF), jnp.float32) * s,
        "w2":    jax.random.normal(ks[10], (DIM_FF, D_MODEL), jnp.float32) * s,
        "b2":    jax.random.normal(ks[11], (1, D_MODEL), jnp.float32) * s,
        # LayerNorm 1/2/3 affine params stacked: row i = norm{i+1}
        "ln_g":  jnp.ones((3, D_MODEL), jnp.float32)
                 + jax.random.normal(ks[12], (3, D_MODEL), jnp.float32) * 0.01,
        "ln_b":  jax.random.normal(ks[13], (3, D_MODEL), jnp.float32) * 0.01,
    }
    return p


def reference(tgt, p):
    """Pure-JAX reference matching PyTorch SelfAttnDecoderLayer (eval, no masks/pos)."""
    def ln(x, g, b):
        mu = x.mean(-1, keepdims=True)
        var = ((x - mu) ** 2).mean(-1, keepdims=True)
        return (x - mu) / jnp.sqrt(var + LN_EPS) * g + b

    def mha(x, wqkv, bqkv, wo, bo):
        L, B, D = x.shape
        qkv = x @ wqkv + bqkv
        q, k, v = qkv[..., :D], qkv[..., D:2 * D], qkv[..., 2 * D:]
        q = q.reshape(L, B, NHEAD, HEAD_DIM) / math.sqrt(HEAD_DIM)
        k = k.reshape(L, B, NHEAD, HEAD_DIM)
        v = v.reshape(L, B, NHEAD, HEAD_DIM)
        s = jnp.einsum("qbhd,kbhd->bhqk", q, k)
        pr = jax.nn.softmax(s, axis=-1)
        o = jnp.einsum("bhqk,kbhd->qbhd", pr, v).reshape(L, B, D)
        return o @ wo + bo

    t = tgt
    t = ln(t + mha(t, p["wqkv1"], p["bqkv1"], p["wo1"], p["bo1"]), p["ln_g"][0], p["ln_b"][0])
    t = ln(t + mha(t, p["wqkv2"], p["bqkv2"], p["wo2"], p["bo2"]), p["ln_g"][1], p["ln_b"][1])
    h = jax.nn.relu(t @ p["w1"] + p["b1"])
    t = ln(t + h @ p["w2"] + p["b2"], p["ln_g"][2], p["ln_b"][2])
    return t


if __name__ == "__main__":
    key = jax.random.PRNGKey(0)
    k_in, k_par = jax.random.split(key)

    L, B = 8, 2  # seq=8, batch=2, d_model=32, nhead=4, dim_feedforward=64
    tgt = jax.random.normal(k_in, (L, B, D_MODEL), jnp.float32)
    params = init_params(k_par)
    packed = pack_params(params)

    out = self_attn_decoder_layer(tgt, packed)
    out = jax.block_until_ready(out)

    ref = reference(tgt, params)
    np.testing.assert_allclose(np.asarray(out), np.asarray(ref), rtol=1e-4, atol=1e-4)

    print("KERNEL_OK")
</pallas_src>

<mosaic_0001>
module attributes {stable_mosaic.version = 11 : i64} {
  func.func @_layer_kernel(%arg0: memref<16x32xf32, #tpu.memory_space<vmem>>, %arg1: memref<32x384xf32, #tpu.memory_space<vmem>>, %arg2: memref<1x352xf32, #tpu.memory_space<vmem>>, %arg3: memref<6x32xf32, #tpu.memory_space<vmem>>, %arg4: memref<16x32xf32, #tpu.memory_space<vmem>>) attributes {dimension_semantics = [], scalar_prefetch = 0 : i64, scratch_operands = 0 : i64, tpu.core_type = #tpu.core_type<tc>} {
    %c0 = arith.constant 0 : index
    %c0_0 = arith.constant 0 : index
    %0 = vector.load %arg0[%c0, %c0_0] : memref<16x32xf32, #tpu.memory_space<vmem>>, vector<16x32xf32>
    %1 = tpu.iota {dimensions = array<i32: 0>} : vector<16x16xi32>
    %2 = tpu.iota {dimensions = array<i32: 1>} : vector<16x16xi32>
    %c1_i32 = arith.constant 1 : i32
    %3 = vector.broadcast %c1_i32 : i32 to vector<16x16xi32>
    %4 = arith.andi %1, %3 : vector<16x16xi32>
    %c1_i32_1 = arith.constant 1 : i32
    %5 = vector.broadcast %c1_i32_1 : i32 to vector<16x16xi32>
    %6 = arith.andi %2, %5 : vector<16x16xi32>
    %7 = arith.cmpi eq, %4, %6 : vector<16x16xi32>
    %cst = arith.constant 0.000000e+00 : f32
    %cst_2 = arith.constant -1.000000e+30 : f32
    %8 = vector.broadcast %cst : f32 to vector<16x16xf32>
    %9 = vector.broadcast %cst_2 : f32 to vector<16x16xf32>
    %10 = arith.select %7, %8, %9 : vector<16x16xi1>, vector<16x16xf32>
    %c0_3 = arith.constant 0 : index
    %c0_4 = arith.constant 0 : index
    %11 = vector.load %arg1[%c0_3, %c0_4] : memref<32x384xf32, #tpu.memory_space<vmem>>, vector<32x96xf32>
    %c0_5 = arith.constant 0 : index
    %c0_6 = arith.constant 0 : index
    %12 = vector.load %arg2[%c0_5, %c0_6] : memref<1x352xf32, #tpu.memory_space<vmem>>, vector<1x96xf32>
    %cst_7 = arith.constant dense<0.000000e+00> : vector<16x96xf32>
    %13 = tpu.matmul %0, %11, %cst_7 {dimension_numbers = #tpu.dot_dimension_numbers<[1], [0], [0], [1], [0, 0, 1, 1], [], []>} : vector<16x32xf32>, vector<32x96xf32>, vector<16x96xf32> -> vector<16x96xf32>
    %14 = vector.broadcast %12 : vector<1x96xf32> to vector<16x96xf32>
    %15 = arith.addf %13, %14 : vector<16x96xf32>
    %cst_8 = arith.constant 0.000000e+00 : f32
    %16 = vector.broadcast %cst_8 : f32 to vector<16x32xf32>
    %17 = vector.extract_strided_slice %15 {offsets = [0, 0], sizes = [16, 8], strides = [1, 1]} : vector<16x96xf32> to vector<16x8xf32>
    %cst_9 = arith.constant 0.353553385 : f32
    %18 = vector.broadcast %cst_9 : f32 to vector<16x8xf32>
    %19 = arith.mulf %17, %18 : vector<16x8xf32>
    %20 = vector.extract_strided_slice %15 {offsets = [0, 32], sizes = [16, 8], strides = [1, 1]} : vector<16x96xf32> to vector<16x8xf32>
    %21 = vector.extract_strided_slice %15 {offsets = [0, 64], sizes = [16, 8], strides = [1, 1]} : vector<16x96xf32> to vector<16x8xf32>
    %cst_10 = arith.constant dense<0.000000e+00> : vector<16x16xf32>
    %22 = tpu.matmul %19, %20, %cst_10 {dimension_numbers = #tpu.dot_dimension_numbers<[1], [1], [0], [0], [0, 0, 1, 0], [], []>} : vector<16x8xf32>, vector<16x8xf32>, vector<16x16xf32> -> vector<16x16xf32>
    %23 = arith.addf %22, %10 : vector<16x16xf32>
    %cst_11 = arith.constant dense<0xFF800000> : vector<16xf32>
    %24 = vector.multi_reduction <maximumf>, %23, %cst_11 [1] : vector<16x16xf32> to vector<16xf32>
    %25 = vector.shape_cast %24 : vector<16xf32> to vector<16x1xf32>
    %26 = vector.broadcast %25 : vector<16x1xf32> to vector<16x16xf32>
    %27 = arith.subf %23, %26 : vector<16x16xf32>
    %28 = math.exp %27 : vector<16x16xf32>
    %cst_12 = arith.constant dense<0.000000e+00> : vector<16xf32>
    %29 = vector.multi_reduction <add>, %28, %cst_12 [1] : vector<16x16xf32> to vector<16xf32>
    %30 = vector.shape_cast %29 : vector<16xf32> to vector<16x1xf32>
    %31 = tpu.reciprocal %30 : vector<16x1xf32> -> vector<16x1xf32>
    %cst_13 = arith.constant dense<0.000000e+00> : vector<16x8xf32>
    %32 = tpu.matmul %28, %21, %cst_13 {dimension_numbers = #tpu.dot_dimension_numbers<[1], [0], [0], [1], [0, 0, 1, 1], [], []>} : vector<16x16xf32>, vector<16x8xf32>, vector<16x8xf32> -> vector<16x8xf32>
    %33 = vector.broadcast %31 : vector<16x1xf32> to vector<16x8xf32>
    %34 = arith.mulf %32, %33 : vector<16x8xf32>
    %c0_14 = arith.constant 0 : index
    %c96 = arith.constant 96 : index
    %35 = vector.load %arg1[%c0_14, %c96] : memref<32x384xf32, #tpu.memory_space<vmem>>, vector<8x32xf32>
    %cst_15 = arith.constant dense<0.000000e+00> : vector<16x32xf32>
    %36 = tpu.matmul %34, %35, %cst_15 {dimension_numbers = #tpu.dot_dimension_numbers<[1], [0], [0], [1], [0, 0, 1, 1], [], []>} : vector<16x8xf32>, vector<8x32xf32>, vector<16x32xf32> -> vector<16x32xf32>
    %37 = arith.addf %16, %36 : vector<16x32xf32>
    %38 = vector.extract_strided_slice %15 {offsets = [0, 8], sizes = [16, 8], strides = [1, 1]} : vector<16x96xf32> to vector<16x8xf32>
    %cst_16 = arith.constant 0.353553385 : f32
    %39 = vector.broadcast %cst_16 : f32 to vector<16x8xf32>
    %40 = arith.mulf %38, %39 : vector<16x8xf32>
    %41 = vector.extract_strided_slice %15 {offsets = [0, 40], sizes = [16, 8], strides = [1, 1]} : vector<16x96xf32> to vector<16x8xf32>
    %42 = vector.extract_strided_slice %15 {offsets = [0, 72], sizes = [16, 8], strides = [1, 1]} : vector<16x96xf32> to vector<16x8xf32>
    %cst_17 = arith.constant dense<0.000000e+00> : vector<16x16xf32>
    %43 = tpu.matmul %40, %41, %cst_17 {dimension_numbers = #tpu.dot_dimension_numbers<[1], [1], [0], [0], [0, 0, 1, 0], [], []>} : vector<16x8xf32>, vector<16x8xf32>, vector<16x16xf32> -> vector<16x16xf32>
    %44 = arith.addf %43, %10 : vector<16x16xf32>
    %cst_18 = arith.constant dense<0xFF800000> : vector<16xf32>
    %45 = vector.multi_reduction <maximumf>, %44, %cst_18 [1] : vector<16x16xf32> to vector<16xf32>
    %46 = vector.shape_cast %45 : vector<16xf32> to vector<16x1xf32>
    %47 = vector.broadcast %46 : vector<16x1xf32> to vector<16x16xf32>
    %48 = arith.subf %44, %47 : vector<16x16xf32>
    %49 = math.exp %48 : vector<16x16xf32>
    %cst_19 = arith.constant dense<0.000000e+00> : vector<16xf32>
    %50 = vector.multi_reduction <add>, %49, %cst_19 [1] : vector<16x16xf32> to vector<16xf32>
    %51 = vector.shape_cast %50 : vector<16xf32> to vector<16x1xf32>
    %52 = tpu.reciprocal %51 : vector<16x1xf32> -> vector<16x1xf32>
    %cst_20 = arith.constant dense<0.000000e+00> : vector<16x8xf32>
    %53 = tpu.matmul %49, %42, %cst_20 {dimension_numbers = #tpu.dot_dimension_numbers<[1], [0], [0], [1], [0, 0, 1, 1], [], []>} : vector<16x16xf32>, vector<16x8xf32>, vector<16x8xf32> -> vector<16x8xf32>
    %54 = vector.broadcast %52 : vector<16x1xf32> to vector<16x8xf32>
    %55 = arith.mulf %53, %54 : vector<16x8xf32>
    %c8 = arith.constant 8 : index
    %c96_21 = arith.constant 96 : index
    %56 = vector.load %arg1[%c8, %c96_21] : memref<32x384xf32, #tpu.memory_space<vmem>>, vector<8x32xf32>
    %cst_22 = arith.constant dense<0.000000e+00> : vector<16x32xf32>
    %57 = tpu.matmul %55, %56, %cst_22 {dimension_numbers = #tpu.dot_dimension_numbers<[1], [0], [0], [1], [0, 0, 1, 1], [], []>} : vector<16x8xf32>, vector<8x32xf32>, vector<16x32xf32> -> vector<16x32xf32>
    %58 = arith.addf %37, %57 : vector<16x32xf32>
    %59 = vector.extract_strided_slice %15 {offsets = [0, 16], sizes = [16, 8], strides = [1, 1]} : vector<16x96xf32> to vector<16x8xf32>
    %cst_23 = arith.constant 0.353553385 : f32
    %60 = vector.broadcast %cst_23 : f32 to vector<16x8xf32>
    %61 = arith.mulf %59, %60 : vector<16x8xf32>
    %62 = vector.extract_strided_slice %15 {offsets = [0, 48], sizes = [16, 8], strides = [1, 1]} : vector<16x96xf32> to vector<16x8xf32>
    %63 = vector.extract_strided_slice %15 {offsets = [0, 80], sizes = [16, 8], strides = [1, 1]} : vector<16x96xf32> to vector<16x8xf32>
    %cst_24 = arith.constant dense<0.000000e+00> : vector<16x16xf32>
    %64 = tpu.matmul %61, %62, %cst_24 {dimension_numbers = #tpu.dot_dimension_numbers<[1], [1], [0], [0], [0, 0, 1, 0], [], []>} : vector<16x8xf32>, vector<16x8xf32>, vector<16x16xf32> -> vector<16x16xf32>
    %65 = arith.addf %64, %10 : vector<16x16xf32>
    %cst_25 = arith.constant dense<0xFF800000> : vector<16xf32>
    %66 = vector.multi_reduction <maximumf>, %65, %cst_25 [1] : vector<16x16xf32> to vector<16xf32>
    %67 = vector.shape_cast %66 : vector<16xf32> to vector<16x1xf32>
    %68 = vector.broadcast %67 : vector<16x1xf32> to vector<16x16xf32>
    %69 = arith.subf %65, %68 : vector<16x16xf32>
    %70 = math.exp %69 : vector<16x16xf32>
    %cst_26 = arith.constant dense<0.000000e+00> : vector<16xf32>
    %71 = vector.multi_reduction <add>, %70, %cst_26 [1] : vector<16x16xf32> to vector<16xf32>
    %72 = vector.shape_cast %71 : vector<16xf32> to vector<16x1xf32>
    %73 = tpu.reciprocal %72 : vector<16x1xf32> -> vector<16x1xf32>
    %cst_27 = arith.constant dense<0.000000e+00> : vector<16x8xf32>
    %74 = tpu.matmul %70, %63, %cst_27 {dimension_numbers = #tpu.dot_dimension_numbers<[1], [0], [0], [1], [0, 0, 1, 1], [], []>} : vector<16x16xf32>, vector<16x8xf32>, vector<16x8xf32> -> vector<16x8xf32>
    %75 = vector.broadcast %73 : vector<16x1xf32> to vector<16x8xf32>
    %76 = arith.mulf %74, %75 : vector<16x8xf32>
    %c16 = arith.constant 16 : index
    %c96_28 = arith.constant 96 : index
    %77 = vector.load %arg1[%c16, %c96_28] : memref<32x384xf32, #tpu.memory_space<vmem>>, vector<8x32xf32>
    %cst_29 = arith.constant dense<0.000000e+00> : vector<16x32xf32>
    %78 = tpu.matmul %76, %77, %cst_29 {dimension_numbers = #tpu.dot_dimension_numbers<[1], [0], [0], [1], [0, 0, 1, 1], [], []>} : vector<16x8xf32>, vector<8x32xf32>, vector<16x32xf32> -> vector<16x32xf32>
    %79 = arith.addf %58, %78 : vector<16x32xf32>
    %80 = vector.extract_strided_slice %15 {offsets = [0, 24], sizes = [16, 8], strides = [1, 1]} : vector<16x96xf32> to vector<16x8xf32>
    %cst_30 = arith.constant 0.353553385 : f32
    %81 = vector.broadcast %cst_30 : f32 to vector<16x8xf32>
    %82 = arith.mulf %80, %81 : vector<16x8xf32>
    %83 = vector.extract_strided_slice %15 {offsets = [0, 56], sizes = [16, 8], strides = [1, 1]} : vector<16x96xf32> to vector<16x8xf32>
    %84 = vector.extract_strided_slice %15 {offsets = [0, 88], sizes = [16, 8], strides = [1, 1]} : vector<16x96xf32> to vector<16x8xf32>
    %cst_31 = arith.constant dense<0.000000e+00> : vector<16x16xf32>
    %85 = tpu.matmul %82, %83, %cst_31 {dimension_numbers = #tpu.dot_dimension_numbers<[1], [1], [0], [0], [0, 0, 1, 0], [], []>} : vector<16x8xf32>, vector<16x8xf32>, vector<16x16xf32> -> vector<16x16xf32>
    %86 = arith.addf %85, %10 : vector<16x16xf32>
    %cst_32 = arith.constant dense<0xFF800000> : vector<16xf32>
    %87 = vector.multi_reduction <maximumf>, %86, %cst_32 [1] : vector<16x16xf32> to vector<16xf32>
    %88 = vector.shape_cast %87 : vector<16xf32> to vector<16x1xf32>
    %89 = vector.broadcast %88 : vector<16x1xf32> to vector<16x16xf32>
    %90 = arith.subf %86, %89 : vector<16x16xf32>
    %91 = math.exp %90 : vector<16x16xf32>
    %cst_33 = arith.constant dense<0.000000e+00> : vector<16xf32>
    %92 = vector.multi_reduction <add>, %91, %cst_33 [1] : vector<16x16xf32> to vector<16xf32>
    %93 = vector.shape_cast %92 : vector<16xf32> to vector<16x1xf32>
    %94 = tpu.reciprocal %93 : vector<16x1xf32> -> vector<16x1xf32>
    %cst_34 = arith.constant dense<0.000000e+00> : vector<16x8xf32>
    %95 = tpu.matmul %91, %84, %cst_34 {dimension_numbers = #tpu.dot_dimension_numbers<[1], [0], [0], [1], [0, 0, 1, 1], [], []>} : vector<16x16xf32>, vector<16x8xf32>, vector<16x8xf32> -> vector<16x8xf32>
    %96 = vector.broadcast %94 : vector<16x1xf32> to vector<16x8xf32>
    %97 = arith.mulf %95, %96 : vector<16x8xf32>
    %c24 = arith.constant 24 : index
    %c96_35 = arith.constant 96 : index
    %98 = vector.load %arg1[%c24, %c96_35] : memref<32x384xf32, #tpu.memory_space<vmem>>, vector<8x32xf32>
    %cst_36 = arith.constant dense<0.000000e+00> : vector<16x32xf32>
    %99 = tpu.matmul %97, %98, %cst_36 {dimension_numbers = #tpu.dot_dimension_numbers<[1], [0], [0], [1], [0, 0, 1, 1], [], []>} : vector<16x8xf32>, vector<8x32xf32>, vector<16x32xf32> -> vector<16x32xf32>
    %100 = arith.addf %79, %99 : vector<16x32xf32>
    %c0_37 = arith.constant 0 : index
    %c96_38 = arith.constant 96 : index
    %101 = vector.load %arg2[%c0_37, %c96_38] : memref<1x352xf32, #tpu.memory_space<vmem>>, vector<1x32xf32>
    %102 = vector.broadcast %101 : vector<1x32xf32> to vector<16x32xf32>
    %103 = arith.addf %100, %102 : vector<16x32xf32>
    %104 = arith.addf %0, %103 : vector<16x32xf32>
    %c0_39 = arith.constant 0 : index
    %c0_40 = arith.constant 0 : index
    %105 = vector.load %arg3[%c0_39, %c0_40] : memref<6x32xf32, #tpu.memory_space<vmem>>, vector<1x32xf32>
    %c3 = arith.constant 3 : index
    %c0_41 = arith.constant 0 : index
    %106 = vector.load %arg3[%c3, %c0_41] : memref<6x32xf32, #tpu.memory_space<vmem>>, vector<1x32xf32>
    %cst_42 = arith.constant dense<0.000000e+00> : vector<16xf32>
    %107 = vector.multi_reduction <add>, %104, %cst_42 [1] : vector<16x32xf32> to vector<16xf32>
    %108 = vector.shape_cast %107 : vector<16xf32> to vector<16x1xf32>
    %cst_43 = arith.constant 3.200000e+01 : f32
    %109 = vector.broadcast %cst_43 : f32 to vector<16x1xf32>
    %110 = arith.divf %108, %109 : vector<16x1xf32>
    %111 = vector.broadcast %110 : vector<16x1xf32> to vector<16x32xf32>
    %112 = arith.subf %104, %111 : vector<16x32xf32>
    %113 = arith.mulf %112, %112 : vector<16x32xf32>
    %cst_44 = arith.constant dense<0.000000e+00> : vector<16xf32>
    %114 = vector.multi_reduction <add>, %113, %cst_44 [1] : vector<16x32xf32> to vector<16xf32>
    %115 = vector.shape_cast %114 : vector<16xf32> to vector<16x1xf32>
    %cst_45 = arith.constant 3.200000e+01 : f32
    %116 = vector.broadcast %cst_45 : f32 to vector<16x1xf32>
    %117 = arith.divf %115, %116 : vector<16x1xf32>
    %118 = vector.broadcast %110 : vector<16x1xf32> to vector<16x32xf32>
    %119 = arith.subf %104, %118 : vector<16x32xf32>
    %cst_46 = arith.constant 9.99999974E-6 : f32
    %120 = vector.broadcast %cst_46 : f32 to vector<16x1xf32>
    %121 = arith.addf %117, %120 : vector<16x1xf32>
    %122 = math.rsqrt %121 : vector<16x1xf32>
    %123 = vector.broadcast %122 : vector<16x1xf32> to vector<16x32xf32>
    %124 = arith.mulf %119, %123 : vector<16x32xf32>
    %125 = vector.broadcast %105 : vector<1x32xf32> to vector<16x32xf32>
    %126 = arith.mulf %124, %125 : vector<16x32xf32>
    %127 = vector.broadcast %106 : vector<1x32xf32> to vector<16x32xf32>
    %128 = arith.addf %126, %127 : vector<16x32xf32>
    %c0_47 = arith.constant 0 : index
    %c128 = arith.constant 128 : index
    %129 = vector.load %arg1[%c0_47, %c128] : memref<32x384xf32, #tpu.memory_space<vmem>>, vector<32x96xf32>
    %c0_48 = arith.constant 0 : index
    %c128_49 = arith.constant 128 : index
    %130 = vector.load %arg2[%c0_48, %c128_49] : memref<1x352xf32, #tpu.memory_space<vmem>>, vector<1x96xf32>
    %cst_50 = arith.constant dense<0.000000e+00> : vector<16x96xf32>
    %131 = tpu.matmul %128, %129, %cst_50 {dimension_numbers = #tpu.dot_dimension_numbers<[1], [0], [0], [1], [0, 0, 1, 1], [], []>} : vector<16x32xf32>, vector<32x96xf32>, vector<16x96xf32> -> vector<16x96xf32>
    %132 = vector.broadcast %130 : vector<1x96xf32> to vector<16x96xf32>
    %133 = arith.addf %131, %132 : vector<16x96xf32>
    %cst_51 = arith.constant 0.000000e+00 : f32
    %134 = vector.broadcast %cst_51 : f32 to vector<16x32xf32>
    %135 = vector.extract_strided_slice %133 {offsets = [0, 0], sizes = [16, 8], strides = [1, 1]} : vector<16x96xf32> to vector<16x8xf32>
    %cst_52 = arith.constant 0.353553385 : f32
    %136 = vector.broadcast %cst_52 : f32 to vector<16x8xf32>
    %137 = arith.mulf %135, %136 : vector<16x8xf32>
    %138 = vector.extract_strided_slice %133 {offsets = [0, 32], sizes = [16, 8], strides = [1, 1]} : vector<16x96xf32> to vector<16x8xf32>
    %139 = vector.extract_strided_slice %133 {offsets = [0, 64], sizes = [16, 8], strides = [1, 1]} : vector<16x96xf32> to vector<16x8xf32>
    %cst_53 = arith.constant dense<0.000000e+00> : vector<16x16xf32>
    %140 = tpu.matmul %137, %138, %cst_53 {dimension_numbers = #tpu.dot_dimension_numbers<[1], [1], [0], [0], [0, 0, 1, 0], [], []>} : vector<16x8xf32>, vector<16x8xf32>, vector<16x16xf32> -> vector<16x16xf32>
    %141 = arith.addf %140, %10 : vector<16x16xf32>
    %cst_54 = arith.constant dense<0xFF800000> : vector<16xf32>
    %142 = vector.multi_reduction <maximumf>, %141, %cst_54 [1] : vector<16x16xf32> to vector<16xf32>
    %143 = vector.shape_cast %142 : vector<16xf32> to vector<16x1xf32>
    %144 = vector.broadcast %143 : vector<16x1xf32> to vector<16x16xf32>
    %145 = arith.subf %141, %144 : vector<16x16xf32>
    %146 = math.exp %145 : vector<16x16xf32>
    %cst_55 = arith.constant dense<0.000000e+00> : vector<16xf32>
    %147 = vector.multi_reduction <add>, %146, %cst_55 [1] : vector<16x16xf32> to vector<16xf32>
    %148 = vector.shape_cast %147 : vector<16xf32> to vector<16x1xf32>
    %149 = tpu.reciprocal %148 : vector<16x1xf32> -> vector<16x1xf32>
    %cst_56 = arith.constant dense<0.000000e+00> : vector<16x8xf32>
    %150 = tpu.matmul %146, %139, %cst_56 {dimension_numbers = #tpu.dot_dimension_numbers<[1], [0], [0], [1], [0, 0, 1, 1], [], []>} : vector<16x16xf32>, vector<16x8xf32>, vector<16x8xf32> -> vector<16x8xf32>
    %151 = vector.broadcast %149 : vector<16x1xf32> to vector<16x8xf32>
    %152 = arith.mulf %150, %151 : vector<16x8xf32>
    %c0_57 = arith.constant 0 : index
    %c224 = arith.constant 224 : index
    %153 = vector.load %arg1[%c0_57, %c224] : memref<32x384xf32, #tpu.memory_space<vmem>>, vector<8x32xf32>
    %cst_58 = arith.constant dense<0.000000e+00> : vector<16x32xf32>
    %154 = tpu.matmul %152, %153, %cst_58 {dimension_numbers = #tpu.dot_dimension_numbers<[1], [0], [0], [1], [0, 0, 1, 1], [], []>} : vector<16x8xf32>, vector<8x32xf32>, vector<16x32xf32> -> vector<16x32xf32>
    %155 = arith.addf %134, %154 : vector<16x32xf32>
    %156 = vector.extract_strided_slice %133 {offsets = [0, 8], sizes = [16, 8], strides = [1, 1]} : vector<16x96xf32> to vector<16x8xf32>
    %cst_59 = arith.constant 0.353553385 : f32
    %157 = vector.broadcast %cst_59 : f32 to vector<16x8xf32>
    %158 = arith.mulf %156, %157 : vector<16x8xf32>
    %159 = vector.extract_strided_slice %133 {offsets = [0, 40], sizes = [16, 8], strides = [1, 1]} : vector<16x96xf32> to vector<16x8xf32>
    %160 = vector.extract_strided_slice %133 {offsets = [0, 72], sizes = [16, 8], strides = [1, 1]} : vector<16x96xf32> to vector<16x8xf32>
    %cst_60 = arith.constant dense<0.000000e+00> : vector<16x16xf32>
    %161 = tpu.matmul %158, %159, %cst_60 {dimension_numbers = #tpu.dot_dimension_numbers<[1], [1], [0], [0], [0, 0, 1, 0], [], []>} : vector<16x8xf32>, vector<16x8xf32>, vector<16x16xf32> -> vector<16x16xf32>
    %162 = arith.addf %161, %10 : vector<16x16xf32>
    %cst_61 = arith.constant dense<0xFF800000> : vector<16xf32>
    %163 = vector.multi_reduction <maximumf>, %162, %cst_61 [1] : vector<16x16xf32> to vector<16xf32>
    %164 = vector.shape_cast %163 : vector<16xf32> to vector<16x1xf32>
    %165 = vector.broadcast %164 : vector<16x1xf32> to vector<16x16xf32>
    %166 = arith.subf %162, %165 : vector<16x16xf32>
    %167 = math.exp %166 : vector<16x16xf32>
    %cst_62 = arith.constant dense<0.000000e+00> : vector<16xf32>
    %168 = vector.multi_reduction <add>, %167, %cst_62 [1] : vector<16x16xf32> to vector<16xf32>
    %169 = vector.shape_cast %168 : vector<16xf32> to vector<16x1xf32>
    %170 = tpu.reciprocal %169 : vector<16x1xf32> -> vector<16x1xf32>
    %cst_63 = arith.constant dense<0.000000e+00> : vector<16x8xf32>
    %171 = tpu.matmul %167, %160, %cst_63 {dimension_numbers = #tpu.dot_dimension_numbers<[1], [0], [0], [1], [0, 0, 1, 1], [], []>} : vector<16x16xf32>, vector<16x8xf32>, vector<16x8xf32> -> vector<16x8xf32>
    %172 = vector.broadcast %170 : vector<16x1xf32> to vector<16x8xf32>
    %173 = arith.mulf %171, %172 : vector<16x8xf32>
    %c8_64 = arith.constant 8 : index
    %c224_65 = arith.constant 224 : index
    %174 = vector.load %arg1[%c8_64, %c224_65] : memref<32x384xf32, #tpu.memory_space<vmem>>, vector<8x32xf32>
    %cst_66 = arith.constant dense<0.000000e+00> : vector<16x32xf32>
    %175 = tpu.matmul %173, %174, %cst_66 {dimension_numbers = #tpu.dot_dimension_numbers<[1], [0], [0], [1], [0, 0, 1, 1], [], []>} : vector<16x8xf32>, vector<8x32xf32>, vector<16x32xf32> -> vector<16x32xf32>
    %176 = arith.addf %155, %175 : vector<16x32xf32>
    %177 = vector.extract_strided_slice %133 {offsets = [0, 16], sizes = [16, 8], strides = [1, 1]} : vector<16x96xf32> to vector<16x8xf32>
    %cst_67 = arith.constant 0.353553385 : f32
    %178 = vector.broadcast %cst_67 : f32 to vector<16x8xf32>
    %179 = arith.mulf %177, %178 : vector<16x8xf32>
    %180 = vector.extract_strided_slice %133 {offsets = [0, 48], sizes = [16, 8], strides = [1, 1]} : vector<16x96xf32> to vector<16x8xf32>
    %181 = vector.extract_strided_slice %133 {offsets = [0, 80], sizes = [16, 8], strides = [1, 1]} : vector<16x96xf32> to vector<16x8xf32>
    %cst_68 = arith.constant dense<0.000000e+00> : vector<16x16xf32>
    %182 = tpu.matmul %179, %180, %cst_68 {dimension_numbers = #tpu.dot_dimension_numbers<[1], [1], [0], [0], [0, 0, 1, 0], [], []>} : vector<16x8xf32>, vector<16x8xf32>, vector<16x16xf32> -> vector<16x16xf32>
    %183 = arith.addf %182, %10 : vector<16x16xf32>
    %cst_69 = arith.constant dense<0xFF800000> : vector<16xf32>
    %184 = vector.multi_reduction <maximumf>, %183, %cst_69 [1] : vector<16x16xf32> to vector<16xf32>
    %185 = vector.shape_cast %184 : vector<16xf32> to vector<16x1xf32>
    %186 = vector.broadcast %185 : vector<16x1xf32> to vector<16x16xf32>
    %187 = arith.subf %183, %186 : vector<16x16xf32>
    %188 = math.exp %187 : vector<16x16xf32>
    %cst_70 = arith.constant dense<0.000000e+00> : vector<16xf32>
    %189 = vector.multi_reduction <add>, %188, %cst_70 [1] : vector<16x16xf32> to vector<16xf32>
    %190 = vector.shape_cast %189 : vector<16xf32> to vector<16x1xf32>
    %191 = tpu.reciprocal %190 : vector<16x1xf32> -> vector<16x1xf32>
    %cst_71 = arith.constant dense<0.000000e+00> : vector<16x8xf32>
    %192 = tpu.matmul %188, %181, %cst_71 {dimension_numbers = #tpu.dot_dimension_numbers<[1], [0], [0], [1], [0, 0, 1, 1], [], []>} : vector<16x16xf32>, vector<16x8xf32>, vector<16x8xf32> -> vector<16x8xf32>
    %193 = vector.broadcast %191 : vector<16x1xf32> to vector<16x8xf32>
    %194 = arith.mulf %192, %193 : vector<16x8xf32>
    %c16_72 = arith.constant 16 : index
    %c224_73 = arith.constant 224 : index
    %195 = vector.load %arg1[%c16_72, %c224_73] : memref<32x384xf32, #tpu.memory_space<vmem>>, vector<8x32xf32>
    %cst_74 = arith.constant dense<0.000000e+00> : vector<16x32xf32>
    %196 = tpu.matmul %194, %195, %cst_74 {dimension_numbers = #tpu.dot_dimension_numbers<[1], [0], [0], [1], [0, 0, 1, 1], [], []>} : vector<16x8xf32>, vector<8x32xf32>, vector<16x32xf32> -> vector<16x32xf32>
    %197 = arith.addf %176, %196 : vector<16x32xf32>
    %198 = vector.extract_strided_slice %133 {offsets = [0, 24], sizes = [16, 8], strides = [1, 1]} : vector<16x96xf32> to vector<16x8xf32>
    %cst_75 = arith.constant 0.353553385 : f32
    %199 = vector.broadcast %cst_75 : f32 to vector<16x8xf32>
    %200 = arith.mulf %198, %199 : vector<16x8xf32>
    %201 = vector.extract_strided_slice %133 {offsets = [0, 56], sizes = [16, 8], strides = [1, 1]} : vector<16x96xf32> to vector<16x8xf32>
    %202 = vector.extract_strided_slice %133 {offsets = [0, 88], sizes = [16, 8], strides = [1, 1]} : vector<16x96xf32> to vector<16x8xf32>
    %cst_76 = arith.constant dense<0.000000e+00> : vector<16x16xf32>
    %203 = tpu.matmul %200, %201, %cst_76 {dimension_numbers = #tpu.dot_dimension_numbers<[1], [1], [0], [0], [0, 0, 1, 0], [], []>} : vector<16x8xf32>, vector<16x8xf32>, vector<16x16xf32> -> vector<16x16xf32>
    %204 = arith.addf %203, %10 : vector<16x16xf32>
    %cst_77 = arith.constant dense<0xFF800000> : vector<16xf32>
    %205 = vector.multi_reduction <maximumf>, %204, %cst_77 [1] : vector<16x16xf32> to vector<16xf32>
    %206 = vector.shape_cast %205 : vector<16xf32> to vector<16x1xf32>
    %207 = vector.broadcast %206 : vector<16x1xf32> to vector<16x16xf32>
    %208 = arith.subf %204, %207 : vector<16x16xf32>
    %209 = math.exp %208 : vector<16x16xf32>
    %cst_78 = arith.constant dense<0.000000e+00> : vector<16xf32>
    %210 = vector.multi_reduction <add>, %209, %cst_78 [1] : vector<16x16xf32> to vector<16xf32>
    %211 = vector.shape_cast %210 : vector<16xf32> to vector<16x1xf32>
    %212 = tpu.reciprocal %211 : vector<16x1xf32> -> vector<16x1xf32>
    %cst_79 = arith.constant dense<0.000000e+00> : vector<16x8xf32>
    %213 = tpu.matmul %209, %202, %cst_79 {dimension_numbers = #tpu.dot_dimension_numbers<[1], [0], [0], [1], [0, 0, 1, 1], [], []>} : vector<16x16xf32>, vector<16x8xf32>, vector<16x8xf32> -> vector<16x8xf32>
    %214 = vector.broadcast %212 : vector<16x1xf32> to vector<16x8xf32>
    %215 = arith.mulf %213, %214 : vector<16x8xf32>
    %c24_80 = arith.constant 24 : index
    %c224_81 = arith.constant 224 : index
    %216 = vector.load %arg1[%c24_80, %c224_81] : memref<32x384xf32, #tpu.memory_space<vmem>>, vector<8x32xf32>
    %cst_82 = arith.constant dense<0.000000e+00> : vector<16x32xf32>
    %217 = tpu.matmul %215, %216, %cst_82 {dimension_numbers = #tpu.dot_dimension_numbers<[1], [0], [0], [1], [0, 0, 1, 1], [], []>} : vector<16x8xf32>, vector<8x32xf32>, vector<16x32xf32> -> vector<16x32xf32>
    %218 = arith.addf %197, %217 : vector<16x32xf32>
    %c0_83 = arith.constant 0 : index
    %c224_84 = arith.constant 224 : index
    %219 = vector.load %arg2[%c0_83, %c224_84] : memref<1x352xf32, #tpu.memory_space<vmem>>, vector<1x32xf32>
    %220 = vector.broadcast %219 : vector<1x32xf32> to vector<16x32xf32>
    %221 = arith.addf %218, %220 : vector<16x32xf32>
    %222 = arith.addf %128, %221 : vector<16x32xf32>
    %c1 = arith.constant 1 : index
    %c0_85 = arith.constant 0 : index
    %223 = vector.load %arg3[%c1, %c0_85] : memref<6x32xf32, #tpu.memory_space<vmem>>, vector<1x32xf32>
    %c4 = arith.constant 4 : index
    %c0_86 = arith.constant 0 : index
    %224 = vector.load %arg3[%c4, %c0_86] : memref<6x32xf32, #tpu.memory_space<vmem>>, vector<1x32xf32>
    %cst_87 = arith.constant dense<0.000000e+00> : vector<16xf32>
    %225 = vector.multi_reduction <add>, %222, %cst_87 [1] : vector<16x32xf32> to vector<16xf32>
    %226 = vector.shape_cast %225 : vector<16xf32> to vector<16x1xf32>
    %cst_88 = arith.constant 3.200000e+01 : f32
    %227 = vector.broadcast %cst_88 : f32 to vector<16x1xf32>
    %228 = arith.divf %226, %227 : vector<16x1xf32>
    %229 = vector.broadcast %228 : vector<16x1xf32> to vector<16x32xf32>
    %230 = arith.subf %222, %229 : vector<16x32xf32>
    %231 = arith.mulf %230, %230 : vector<16x32xf32>
    %cst_89 = arith.constant dense<0.000000e+00> : vector<16xf32>
    %232 = vector.multi_reduction <add>, %231, %cst_89 [1] : vector<16x32xf32> to vector<16xf32>
    %233 = vector.shape_cast %232 : vector<16xf32> to vector<16x1xf32>
    %cst_90 = arith.constant 3.200000e+01 : f32
    %234 = vector.broadcast %cst_90 : f32 to vector<16x1xf32>
    %235 = arith.divf %233, %234 : vector<16x1xf32>
    %236 = vector.broadcast %228 : vector<16x1xf32> to vector<16x32xf32>
    %237 = arith.subf %222, %236 : vector<16x32xf32>
    %cst_91 = arith.constant 9.99999974E-6 : f32
    %238 = vector.broadcast %cst_91 : f32 to vector<16x1xf32>
    %239 = arith.addf %235, %238 : vector<16x1xf32>
    %240 = math.rsqrt %239 : vector<16x1xf32>
    %241 = vector.broadcast %240 : vector<16x1xf32> to vector<16x32xf32>
    %242 = arith.mulf %237, %241 : vector<16x32xf32>
    %243 = vector.broadcast %223 : vector<1x32xf32> to vector<16x32xf32>
    %244 = arith.mulf %242, %243 : vector<16x32xf32>
    %245 = vector.broadcast %224 : vector<1x32xf32> to vector<16x32xf32>
    %246 = arith.addf %244, %245 : vector<16x32xf32>
    %c0_92 = arith.constant 0 : index
    %c256 = arith.constant 256 : index
    %247 = vector.load %arg1[%c0_92, %c256] : memref<32x384xf32, #tpu.memory_space<vmem>>, vector<32x64xf32>
    %c0_93 = arith.constant 0 : index
    %c256_94 = arith.constant 256 : index
    %248 = vector.load %arg2[%c0_93, %c256_94] : memref<1x352xf32, #tpu.memory_space<vmem>>, vector<1x64xf32>
    %c0_95 = arith.constant 0 : index
    %c320 = arith.constant 320 : index
    %249 = vector.load %arg1[%c0_95, %c320] : memref<32x384xf32, #tpu.memory_space<vmem>>, vector<32x64xf32>
    %c0_96 = arith.constant 0 : index
    %c320_97 = arith.constant 320 : index
    %250 = vector.load %arg2[%c0_96, %c320_97] : memref<1x352xf32, #tpu.memory_space<vmem>>, vector<1x32xf32>
    %cst_98 = arith.constant dense<0.000000e+00> : vector<16x64xf32>
    %251 = tpu.matmul %246, %247, %cst_98 {dimension_numbers = #tpu.dot_dimension_numbers<[1], [0], [0], [1], [0, 0, 1, 1], [], []>} : vector<16x32xf32>, vector<32x64xf32>, vector<16x64xf32> -> vector<16x64xf32>
    %252 = vector.broadcast %248 : vector<1x64xf32> to vector<16x64xf32>
    %253 = arith.addf %251, %252 : vector<16x64xf32>
    %cst_99 = arith.constant 0.000000e+00 : f32
    %254 = vector.broadcast %cst_99 : f32 to vector<16x64xf32>
    %255 = arith.maximumf %253, %254 : vector<16x64xf32>
    %cst_100 = arith.constant dense<0.000000e+00> : vector<16x32xf32>
    %256 = tpu.matmul %255, %249, %cst_100 {dimension_numbers = #tpu.dot_dimension_numbers<[1], [1], [0], [0], [0, 0, 1, 0], [], []>} : vector<16x64xf32>, vector<32x64xf32>, vector<16x32xf32> -> vector<16x32xf32>
    %257 = vector.broadcast %250 : vector<1x32xf32> to vector<16x32xf32>
    %258 = arith.addf %256, %257 : vector<16x32xf32>
    %259 = arith.addf %246, %258 : vector<16x32xf32>
    %c2 = arith.constant 2 : index
    %c0_101 = arith.constant 0 : index
    %260 = vector.load %arg3[%c2, %c0_101] : memref<6x32xf32, #tpu.memory_space<vmem>>, vector<1x32xf32>
    %c5 = arith.constant 5 : index
    %c0_102 = arith.constant 0 : index
    %261 = vector.load %arg3[%c5, %c0_102] : memref<6x32xf32, #tpu.memory_space<vmem>>, vector<1x32xf32>
    %cst_103 = arith.constant dense<0.000000e+00> : vector<16xf32>
    %262 = vector.multi_reduction <add>, %259, %cst_103 [1] : vector<16x32xf32> to vector<16xf32>
    %263 = vector.shape_cast %262 : vector<16xf32> to vector<16x1xf32>
    %cst_104 = arith.constant 3.200000e+01 : f32
    %264 = vector.broadcast %cst_104 : f32 to vector<16x1xf32>
    %265 = arith.divf %263, %264 : vector<16x1xf32>
    %266 = vector.broadcast %265 : vector<16x1xf32> to vector<16x32xf32>
    %267 = arith.subf %259, %266 : vector<16x32xf32>
    %268 = arith.mulf %267, %267 : vector<16x32xf32>
    %cst_105 = arith.constant dense<0.000000e+00> : vector<16xf32>
    %269 = vector.multi_reduction <add>, %268, %cst_105 [1] : vector<16x32xf32> to vector<16xf32>
    %270 = vector.shape_cast %269 : vector<16xf32> to vector<16x1xf32>
    %cst_106 = arith.constant 3.200000e+01 : f32
    %271 = vector.broadcast %cst_106 : f32 to vector<16x1xf32>
    %272 = arith.divf %270, %271 : vector<16x1xf32>
    %273 = vector.broadcast %265 : vector<16x1xf32> to vector<16x32xf32>
    %274 = arith.subf %259, %273 : vector<16x32xf32>
    %cst_107 = arith.constant 9.99999974E-6 : f32
    %275 = vector.broadcast %cst_107 : f32 to vector<16x1xf32>
    %276 = arith.addf %272, %275 : vector<16x1xf32>
    %277 = math.rsqrt %276 : vector<16x1xf32>
    %278 = vector.broadcast %277 : vector<16x1xf32> to vector<16x32xf32>
    %279 = arith.mulf %274, %278 : vector<16x32xf32>
    %280 = vector.broadcast %260 : vector<1x32xf32> to vector<16x32xf32>
    %281 = arith.mulf %279, %280 : vector<16x32xf32>
    %282 = vector.broadcast %261 : vector<1x32xf32> to vector<16x32xf32>
    %283 = arith.addf %281, %282 : vector<16x32xf32>
    %c0_108 = arith.constant 0 : index
    %c0_109 = arith.constant 0 : index
    %284 = vector.load %arg4[%c0_108, %c0_109] : memref<16x32xf32, #tpu.memory_space<vmem>>, vector<16x32xf32>
    tpu.vector_store %arg4[%c0_108, %c0_109], %283 {strides = array<i32>} : memref<16x32xf32, #tpu.memory_space<vmem>>, vector<16x32xf32>,
    return
  }
}

</mosaic_0001>

<llo_original>
// kernel: tpu_custom_call.1
$region0: #{tpu_custom_call.1}
  #allocation0 [shape = 'u32[]', space=smem, size = 0x4, offset = 0x4, fixed_abs, tag = 'smem constant byte address 0x4 - core index']
  #allocation1 [shape = 'u32[144,128]{1,0:T(1,128)}', space=vmem, size = 0x12000, scoped, tag = 'internal scratch']
  %s0 = inlined_call_operand.hbm [shape: f32[16,32], index: 0, kind: input, shape index: {}]
  %s1 = inlined_call_operand.hbm [shape: f32[32,384], index: 1, kind: input, shape index: {}]
  %s2 = inlined_call_operand.vmem [shape: f32[1,352], index: 2, kind: input, shape index: {}]
  %s3 = inlined_call_operand.hbm [shape: f32[6,32], index: 3, kind: input, shape index: {}]
  %s4 = inlined_call_operand.hbm [shape: f32[16,32], index: 4, kind: output, shape index: {}]
  %s5 = sld [smem:[#allocation0]]
  $region38: #{tpu_custom_call.1} parent=0
    _
  %s7 = ssub.s32 1, %s5
  %s8 = scalar_select 0, %s7, %s5
  $region1: #{tpu_custom_call.1} parent=0
    #allocation2 [shape = 'u8[8192]{0}', space=vmem, size = 0x2000, scoped, tag = 'input window, operand 0, single buffered']
    #allocation3 [shape = 's32[1]{0}', space=sflag, size = 0x4, scoped, tag = 'scoped memory for tpu_custom_call.1']
    #allocation4 [shape = 's32[1]{0}', space=sflag, size = 0x4, scoped, tag = 'scoped memory for tpu_custom_call.1']
    #allocation5 [shape = 'u8[49152]{0}', space=vmem, size = 0xc000, scoped, tag = 'input window, operand 1, single buffered']
    #allocation6 [shape = 's32[1]{0}', space=sflag, size = 0x4, scoped, tag = 'scoped memory for tpu_custom_call.1']
    #allocation7 [shape = 'u8[4096]{0}', space=vmem, size = 0x1000, scoped, tag = 'input window, operand 3, single buffered']
    #allocation8 [shape = 'u8[8192]{0}', space=vmem, size = 0x2000, scoped, tag = 'output window, operand 0, single buffered']
    %9 = vsyncpa [#allocation3], 0
    %10 = vsyncpa [#allocation6], 0
    %11 = vsyncpa [#allocation4], 0
    // Predicated region
    $region2: #{tpu_custom_call.1} parent=1 // pred_check
      _
    $region3: #{tpu_custom_call.1} parent=1 // pred_check_branch
      %13 = sbr.rel (0) target = $region5
    $region4: #{tpu_custom_call.1} parent=1 // pred_region
      %s15 = ssub.s32 256, 256
      %16 = vsyncadd [#allocation3], %s15
      %s17 = sshll.u32 [#allocation2], 4
      %s18 = int_to_ptr.vmem [resolvable:$true] %s17
      %23 = dma.hbm_to_vmem [thread:$0]  %s0, 256, %s18, [#allocation3], 128, 128, 8
    $region5: #{tpu_custom_call.1} parent=1 // pred_fallthru
      _
    // Predicated region
    $region6: #{tpu_custom_call.1} parent=1 // pred_check
      _
    $region7: #{tpu_custom_call.1} parent=1 // pred_check_branch
      %25 = sbr.rel (0) target = $region9
    $region8: #{tpu_custom_call.1} parent=1 // pred_region
      %s27 = ssub.s32 1536, 1536
      %28 = vsyncadd [#allocation6], %s27
      %s29 = sshll.u32 [#allocation5], 4
      %s30 = int_to_ptr.vmem [resolvable:$true] %s29
      %35 = dma.hbm_to_vmem [thread:$0]  %s1, 1536, %s30, [#allocation6], 384, 384, 24
    $region9: #{tpu_custom_call.1} parent=1 // pred_fallthru
      _
    // Predicated region
    $region10: #{tpu_custom_call.1} parent=1 // pred_check
      _
    $region11: #{tpu_custom_call.1} parent=1 // pred_check_branch
      %37 = sbr.rel (0) target = $region13
    $region12: #{tpu_custom_call.1} parent=1 // pred_region
      _
    $region13: #{tpu_custom_call.1} parent=1 // pred_fallthru
      _
    // Predicated region
    $region14: #{tpu_custom_call.1} parent=1 // pred_check
      _
    $region15: #{tpu_custom_call.1} parent=1 // pred_check_branch
      %39 = sbr.rel (0) target = $region17
    $region16: #{tpu_custom_call.1} parent=1 // pred_region
      %s41 = ssub.s32 128, 128
      %42 = vsyncadd [#allocation6], %s41
      %s44 = sshll.u32 [#allocation7], 4
      %s45 = int_to_ptr.vmem [resolvable:$true] %s44
      %47 = dma.hbm_to_vmem [thread:$0]  %s3, 128, %s45, [#allocation6]
    $region17: #{tpu_custom_call.1} parent=1 // pred_fallthru
      _
    // Predicated region
    $region18: #{tpu_custom_call.1} parent=1 // pred_check
      _
    $region19: #{tpu_custom_call.1} parent=1 // pred_check_branch
      %49 = sbr.rel (0) target = $region21
    $region20: #{tpu_custom_call.1} parent=1 // pred_region
      %50 = dma.done [#allocation3], 256
    $region21: #{tpu_custom_call.1} parent=1 // pred_fallthru
      _
    // Predicated region
    $region22: #{tpu_custom_call.1} parent=1 // pred_check
      _
    $region23: #{tpu_custom_call.1} parent=1 // pred_check_branch
      %52 = sbr.rel (0) target = $region25
    $region24: #{tpu_custom_call.1} parent=1 // pred_region
      %53 = dma.done [#allocation6], 1536
    $region25: #{tpu_custom_call.1} parent=1 // pred_fallthru
      _
    // Predicated region
    $region26: #{tpu_custom_call.1} parent=1 // pred_check
      _
    $region27: #{tpu_custom_call.1} parent=1 // pred_check_branch
      %55 = sbr.rel (0) target = $region29
    $region28: #{tpu_custom_call.1} parent=1 // pred_region
      %56 = dma.done [#allocation6], 128
    $region29: #{tpu_custom_call.1} parent=1 // pred_fallthru
      _
    %v57 = vld [vmem:[#allocation2] sm:$0xff]
    %v58 = vld [vmem:[#allocation2 + $0x8] sm:$0xff]
    %v59 = vlaneseq
    %v60 = vshrl.u32 %v59, 7
    %v61 = vadd.s32 %v60, 8
    %v62 = vlaneseq
    %v63 = vand.u32 %v62, 127
    %v64 = vand.u32 %v60, 1
    %v65 = vand.u32 %v61, 1
    %v66 = vand.u32 %v63, 1
    %vm67 = vcmp.eq.s32.totalorder %v64, %v66
    %vm68 = vcmp.eq.s32.totalorder %v65, %v66
    %v69 = vsel %vm67, 0.0, -1e+30
    %v70 = vsel %vm68, 0.0, -1e+30
    %v71 = vld [vmem:[#allocation5] sm:$0xff]
    %v72 = vld [vmem:[#allocation5 + $0x18] sm:$0xff]
    %v73 = vld [vmem:[#allocation5 + $0x30] sm:$0xff]
    %v74 = vld [vmem:[#allocation5 + $0x48] sm:$0xff]
    %v75 = vld [vmem:[%s2] sm:$0x1]
    %v77 = vlaneseq
    %v78 = vshrl.u32 %v77, 7
    %v79 = vsub.s32 0, %v78
    %v80 = vrot.slane %v75, %v79
    %vm82 = vcmask 261120
    %v84 = vsel %vm82, %v57, 0
    %v87 = vsel %vm82, %v58, 0
    %89 = vmatprep.subr.mxu0 0.0
    %90 = vmatpush1.msra.mxu0 0.0
    %91 = vmatprep.subr.mxu0 0.0
    %92 = vmatpush1.msra.mxu0 0.0
    %93 = vmatprep.subr.mxu0 0.0
    %94 = vmatpush1.msra.mxu0 0.0
    %95 = vmatprep.subr.mxu0 0.0
    %96 = vmatpush1.msra.mxu0 0.0
    %97 = vmatprep.subr.mxu0 0.0
    %98 = vmatpush1.msra.mxu0 0.0
    %99 = vmatprep.subr.mxu0 0.0
    %100 = vmatpush1.msra.mxu0 0.0
    %101 = vmatprep.subr.mxu0 0.0
    %102 = vmatpush1.msra.mxu0 0.0
    %103 = vmatprep.subr.mxu0 0.0
    %104 = vmatpush1.msra.mxu0 0.0
    %105 = vmatprep.subr.mxu0 0.0
    %106 = vmatpush1.msra.mxu0 0.0
    %107 = vmatprep.subr.mxu0 0.0
    %108 = vmatpush1.msra.mxu0 0.0
    %109 = vmatprep.subr.mxu0 0.0
    %110 = vmatpush1.msra.mxu0 0.0
    %111 = vmatprep.subr.mxu0 0.0
    %112 = vmatpush1.msra.mxu0 0.0
    %113 = vmatprep.subr.mxu0 0.0
    %114 = vmatpush1.msra.mxu0 %v74
    %115 = vmatprep.subr.mxu0 0.0
    %116 = vmatpush1.msra.mxu0 %v73
    %117 = vmatprep.subr.mxu0 0.0
    %118 = vmatpush1.msra.mxu0 %v72
    %119 = vmatprep.subr.mxu0 0.0
    %120 = vmatpush1.msra.mxu0 %v71
    %121 = vmatprep.subr.mxu0 0.0
    %122 = vmatpush2.msra.mxu0 0.0
    %123 = vmatprep.subr.mxu0 0.0
    %124 = vmatpush2.msra.mxu0 0.0
    %125 = vmatprep.subr.mxu0 0.0
    %126 = vmatpush2.msra.mxu0 0.0
    %127 = vmatprep.subr.mxu0 0.0
    %128 = vmatpush2.msra.mxu0 0.0
    %129 = vmatprep.subr.mxu0 0.0
    %130 = vmatpush2.msra.mxu0 0.0
    %131 = vmatprep.subr.mxu0 0.0
    %132 = vmatpush2.msra.mxu0 0.0
    %133 = vmatprep.subr.mxu0 0.0
    %134 = vmatpush2.msra.mxu0 0.0
    %135 = vmatprep.subr.mxu0 0.0
    %136 = vmatpush2.msra.mxu0 0.0
    %137 = vmatprep.subr.mxu0 0.0
    %138 = vmatpush2.msra.mxu0 0.0
    %139 = vmatprep.subr.mxu0 0.0
    %140 = vmatpush2.msra.mxu0 0.0
    %141 = vmatprep.subr.mxu0 0.0
    %142 = vmatpush2.msra.mxu0 0.0
    %143 = vmatprep.subr.mxu0 0.0
    %144 = vmatpush2.msra.mxu0 0.0
    %145 = vmatprep.subr.mxu0 0.0
    %146 = vmatpush2.msra.mxu0 0.0
    %147 = vmatprep.subr.mxu0 0.0
    %148 = vmatpush2.msra.mxu0 0.0
    %149 = vmatprep.subr.mxu0 0.0
    %150 = vmatpush2.msra.mxu0 0.0
    %151 = vmatprep.subr.mxu0 0.0
    %152 = vmatpush2.msra.mxu0 0.0
    %153 = vmatprep.mubr.f32.mxu0 0.0
    %154 = vmatmul.mubr.f32.gmra.mxu0 %v84
    %v155 = vpop.f32.mrf.mxu0
    %v156 = vadd.f32 %v80, %v155
    %v157 = vpop.f32.mrf.mxu0
    %158 = vmatprep.mubr.f32.mxu0 0.0
    %159 = vmatmul.mubr.f32.gmra.mxu0 %v87
    %v160 = vpop.f32.mrf.mxu0
    %v161 = vadd.f32 %v80, %v160
    %v162 = vpop.f32.mrf.mxu0
    %163 = vdwg.mxu0
    %v164 = vmul.f32 %v156, 0.35355338
    %v165 = vmul.f32 %v161, 0.35355338
    %168 = vrot.lane.b32.xlu0 %v156, 96
    %v169 = vpop.permute.xlu0 %168
    %170 = vrot.lane.b32.xlu0 %v161, 96
    %v171 = vpop.permute.xlu0 %170
    %vm172 = vcmask 64512
    %v174 = vsel %vm172, %v164, 0
    %v177 = vsel %vm172, %v165, 0
    %v179 = vsel %vm172, %v169, 0
    %v181 = vsel %vm172, %v171, 0
    %183 = vmatprep.subr.mxu0 0.0
    %184 = vmatpush1.xpose.msra.mxu0 0.0
    %185 = vmatprep.subr.mxu0 0.0
    %186 = vmatpush1.xpose.msra.mxu0 0.0
    %187 = vmatprep.subr.mxu0 0.0
    %188 = vmatpush1.xpose.msra.mxu0 0.0
    %189 = vmatprep.subr.mxu0 0.0
    %190 = vmatpush1.xpose.msra.mxu0 0.0
    %191 = vmatprep.subr.mxu0 0.0
    %192 = vmatpush1.xpose.msra.mxu0 0.0
    %193 = vmatprep.subr.mxu0 0.0
    %194 = vmatpush1.xpose.msra.mxu0 0.0
    %195 = vmatprep.subr.mxu0 0.0
    %196 = vmatpush1.xpose.msra.mxu0 0.0
    %197 = vmatprep.subr.mxu0 0.0
    %198 = vmatpush1.xpose.msra.mxu0 0.0
    %199 = vmatprep.subr.mxu0 0.0
    %200 = vmatpush1.xpose.msra.mxu0 0.0
    %201 = vmatprep.subr.mxu0 0.0
    %202 = vmatpush1.xpose.msra.mxu0 0.0
    %203 = vmatprep.subr.mxu0 0.0
    %204 = vmatpush1.xpose.msra.mxu0 0.0
    %205 = vmatprep.subr.mxu0 0.0
    %206 = vmatpush1.xpose.msra.mxu0 0.0
    %207 = vmatprep.subr.mxu0 0.0
    %208 = vmatpush1.xpose.msra.mxu0 0.0
    %209 = vmatprep.subr.mxu0 0.0
    %210 = vmatpush1.xpose.msra.mxu0 0.0
    %211 = vmatprep.subr.mxu0 0.0
    %212 = vmatpush1.xpose.msra.mxu0 %v181
    %213 = vmatprep.subr.mxu0 0.0
    %214 = vmatpush1.xpose.msra.mxu0 %v179
    %215 = vmatprep.subr.mxu0 0.0
    %216 = vmatpush2.xpose.msra.mxu0 0.0
    %217 = vmatprep.subr.mxu0 0.0
    %218 = vmatpush2.xpose.msra.mxu0 0.0
    %219 = vmatprep.subr.mxu0 0.0
    %220 = vmatpush2.xpose.msra.mxu0 0.0
    %221 = vmatprep.subr.mxu0 0.0
    %222 = vmatpush2.xpose.msra.mxu0 0.0
    %223 = vmatprep.subr.mxu0 0.0
    %224 = vmatpush2.xpose.msra.mxu0 0.0
    %225 = vmatprep.subr.mxu0 0.0
    %226 = vmatpush2.xpose.msra.mxu0 0.0
    %227 = vmatprep.subr.mxu0 0.0
    %228 = vmatpush2.xpose.msra.mxu0 0.0
    %229 = vmatprep.subr.mxu0 0.0
    %230 = vmatpush2.xpose.msra.mxu0 0.0
    %231 = vmatprep.subr.mxu0 0.0
    %232 = vmatpush2.xpose.msra.mxu0 0.0
    %233 = vmatprep.subr.mxu0 0.0
    %234 = vmatpush2.xpose.msra.mxu0 0.0
    %235 = vmatprep.subr.mxu0 0.0
    %236 = vmatpush2.xpose.msra.mxu0 0.0
    %237 = vmatprep.subr.mxu0 0.0
    %238 = vmatpush2.xpose.msra.mxu0 0.0
    %239 = vmatprep.subr.mxu0 0.0
    %240 = vmatpush2.xpose.msra.mxu0 0.0
    %241 = vmatprep.subr.mxu0 0.0
    %242 = vmatpush2.xpose.msra.mxu0 0.0
    %243 = vmatprep.subr.mxu0 0.0
    %244 = vmatpush2.xpose.msra.mxu0 0.0
    %245 = vmatprep.subr.mxu0 0.0
    %246 = vmatpush2.xpose.msra.mxu0 0.0
    %247 = vmatprep.mubr.f32.mxu0 0.0
    %248 = vmatmul.mubr.f32.gmra.mxu0 %v174
    %v249 = vpop.f32.mrf.mxu0
    %v250 = vadd.f32 %v69, %v249
    %v251 = vpop.f32.mrf.mxu0
    %252 = vmatprep.mubr.f32.mxu0 0.0
    %253 = vmatmul.mubr.f32.gmra.mxu0 %v177
    %v254 = vpop.f32.mrf.mxu0
    %v255 = vadd.f32 %v70, %v254
    %v256 = vpop.f32.mrf.mxu0
    %257 = vdwg.mxu0
    %vm258 = vcmask 130048
    %v259 = vsel %vm258, %v250, -inf
    %260 = vmax.xlane.f32.xlu0 %v259
    %v261 = vpop.xlane.xlu0 %260
    %v262 = vsel %vm258, %v255, -inf
    %263 = vmax.xlane.f32.xlu0 %v262
    %v264 = vpop.xlane.xlu0 %263
    %v265 = vsub.f32 %v250, %v261
    %v266 = vsub.f32 %v255, %v264
    %v267 = vmul.f32 %v265, 1.442695
    %v268 = vpow.pop %v267
    %v269 = vmul.f32 %v266, 1.442695
    %v270 = vpow.pop %v269
    %v271 = vsel %vm258, %v268, 0.0
    %272 = vadd.xlane.f32.xlu0 %v271
    %v273 = vpop.xlane.xlu0 %272
    %v274 = vsel %vm258, %v270, 0.0
    %275 = vadd.xlane.f32.xlu0 %v274
    %v276 = vpop.xlane.xlu0 %275
    %v277 = vrcp.pop %v273
    %v278 = vrcp.pop %v276
    %279 = vrot.lane.b32.xlu0 %v156, 64
    %v280 = vpop.permute.xlu0 %279
    %281 = vrot.lane.b32.xlu0 %v161, 64
    %v282 = vpop.permute.xlu0 %281
    %v286 = vsel %vm258, %v268, 0
    %v289 = vsel %vm258, %v270, 0
    %291 = vmatprep.subr.mxu0 0.0
    %292 = vmatpush1.msra.mxu0 0.0
    %293 = vmatprep.subr.mxu0 0.0
    %294 = vmatpush1.msra.mxu0 0.0
    %295 = vmatprep.subr.mxu0 0.0
    %296 = vmatpush1.msra.mxu0 0.0
    %297 = vmatprep.subr.mxu0 0.0
    %298 = vmatpush1.msra.mxu0 0.0
    %299 = vmatprep.subr.mxu0 0.0
    %300 = vmatpush1.msra.mxu0 0.0
    %301 = vmatprep.subr.mxu0 0.0
    %302 = vmatpush1.msra.mxu0 0.0
    %303 = vmatprep.subr.mxu0 0.0
    %304 = vmatpush1.msra.mxu0 0.0
    %305 = vmatprep.subr.mxu0 0.0
    %306 = vmatpush1.msra.mxu0 0.0
    %307 = vmatprep.subr.mxu0 0.0
    %308 = vmatpush1.msra.mxu0 0.0
    %309 = vmatprep.subr.mxu0 0.0
    %310 = vmatpush1.msra.mxu0 0.0
    %311 = vmatprep.subr.mxu0 0.0
    %312 = vmatpush1.msra.mxu0 0.0
    %313 = vmatprep.subr.mxu0 0.0
    %314 = vmatpush1.msra.mxu0 0.0
    %315 = vmatprep.subr.mxu0 0.0
    %316 = vmatpush1.msra.mxu0 0.0
    %317 = vmatprep.subr.mxu0 0.0
    %318 = vmatpush1.msra.mxu0 0.0
    %319 = vmatprep.subr.mxu0 0.0
    %320 = vmatpush1.msra.mxu0 %v282
    %321 = vmatprep.subr.mxu0 0.0
    %322 = vmatpush1.msra.mxu0 %v280
    %323 = vmatprep.subr.mxu0 0.0
    %324 = vmatpush2.msra.mxu0 0.0
    %325 = vmatprep.subr.mxu0 0.0
    %326 = vmatpush2.msra.mxu0 0.0
    %327 = vmatprep.subr.mxu0 0.0
    %328 = vmatpush2.msra.mxu0 0.0
    %329 = vmatprep.subr.mxu0 0.0
    %330 = vmatpush2.msra.mxu0 0.0
    %331 = vmatprep.subr.mxu0 0.0
    %332 = vmatpush2.msra.mxu0 0.0
    %333 = vmatprep.subr.mxu0 0.0
    %334 = vmatpush2.msra.mxu0 0.0
    %335 = vmatprep.subr.mxu0 0.0
    %336 = vmatpush2.msra.mxu0 0.0
    %337 = vmatprep.subr.mxu0 0.0
    %338 = vmatpush2.msra.mxu0 0.0
    %339 = vmatprep.subr.mxu0 0.0
    %340 = vmatpush2.msra.mxu0 0.0
    %341 = vmatprep.subr.mxu0 0.0
    %342 = vmatpush2.msra.mxu0 0.0
    %343 = vmatprep.subr.mxu0 0.0
    %344 = vmatpush2.msra.mxu0 0.0
    %345 = vmatprep.subr.mxu0 0.0
    %346 = vmatpush2.msra.mxu0 0.0
    %347 = vmatprep.subr.mxu0 0.0
    %348 = vmatpush2.msra.mxu0 0.0
    %349 = vmatprep.subr.mxu0 0.0
    %350 = vmatpush2.msra.mxu0 0.0
    %351 = vmatprep.subr.mxu0 0.0
    %352 = vmatpush2.msra.mxu0 0.0
    %353 = vmatprep.subr.mxu0 0.0
    %354 = vmatpush2.msra.mxu0 0.0
    %355 = vmatprep.mubr.f32.mxu0 0.0
    %356 = vmatmul.mubr.f32.gmra.mxu0 %v286
    %v357 = vpop.f32.mrf.mxu0
    %v358 = vadd.f32 0.0, %v357
    %v359 = vpop.f32.mrf.mxu0
    %360 = vmatprep.mubr.f32.mxu0 0.0
    %361 = vmatmul.mubr.f32.gmra.mxu0 %v289
    %v362 = vpop.f32.mrf.mxu0
    %v363 = vadd.f32 0.0, %v362
    %v364 = vpop.f32.mrf.mxu0
    %365 = vdwg.mxu0
    %v366 = vmul.f32 %v358, %v277
    %v367 = vmul.f32 %v363, %v278
    %v368 = vld [vmem:[#allocation5] sm:$0xff]
    %369 = vrot.lane.b32.xlu0 %v164, 120
    %v370 = vpop.permute.xlu0 %369
    %371 = vrot.lane.b32.xlu0 %v165, 120
    %v372 = vpop.permute.xlu0 %371
    %373 = vrot.lane.b32.xlu0 %v156, 88
    %v374 = vpop.permute.xlu0 %373
    %375 = vrot.lane.b32.xlu0 %v161, 88
    %v376 = vpop.permute.xlu0 %375
    %v377 = vsel %vm172, %v370, 0
    %v379 = vsel %vm172, %v372, 0
    %v381 = vsel %vm172, %v374, 0
    %v383 = vsel %vm172, %v376, 0
    %385 = vmatprep.subr.mxu0 0.0
    %386 = vmatpush1.xpose.msra.mxu0 0.0
    %387 = vmatprep.subr.mxu0 0.0
    %388 = vmatpush1.xpose.msra.mxu0 0.0
    %389 = vmatprep.subr.mxu0 0.0
    %390 = vmatpush1.xpose.msra.mxu0 0.0
    %391 = vmatprep.subr.mxu0 0.0
    %392 = vmatpush1.xpose.msra.mxu0 0.0
    %393 = vmatprep.subr.mxu0 0.0
    %394 = vmatpush1.xpose.msra.mxu0 0.0
    %395 = vmatprep.subr.mxu0 0.0
    %396 = vmatpush1.xpose.msra.mxu0 0.0
    %397 = vmatprep.subr.mxu0 0.0
    %398 = vmatpush1.xpose.msra.mxu0 0.0
    %399 = vmatprep.subr.mxu0 0.0
    %400 = vmatpush1.xpose.msra.mxu0 0.0
    %401 = vmatprep.subr.mxu0 0.0
    %402 = vmatpush1.xpose.msra.mxu0 0.0
    %403 = vmatprep.subr.mxu0 0.0
    %404 = vmatpush1.xpose.msra.mxu0 0.0
    %405 = vmatprep.subr.mxu0 0.0
    %406 = vmatpush1.xpose.msra.mxu0 0.0
    %407 = vmatprep.subr.mxu0 0.0
    %408 = vmatpush1.xpose.msra.mxu0 0.0
    %409 = vmatprep.subr.mxu0 0.0
    %410 = vmatpush1.xpose.msra.mxu0 0.0
    %411 = vmatprep.subr.mxu0 0.0
    %412 = vmatpush1.xpose.msra.mxu0 0.0
    %413 = vmatprep.subr.mxu0 0.0
    %414 = vmatpush1.xpose.msra.mxu0 %v383
    %415 = vmatprep.subr.mxu0 0.0
    %416 = vmatpush1.xpose.msra.mxu0 %v381
    %417 = vmatprep.subr.mxu0 0.0
    %418 = vmatpush2.xpose.msra.mxu0 0.0
    %419 = vmatprep.subr.mxu0 0.0
    %420 = vmatpush2.xpose.msra.mxu0 0.0
    %421 = vmatprep.subr.mxu0 0.0
    %422 = vmatpush2.xpose.msra.mxu0 0.0
    %423 = vmatprep.subr.mxu0 0.0
    %424 = vmatpush2.xpose.msra.mxu0 0.0
    %425 = vmatprep.subr.mxu0 0.0
    %426 = vmatpush2.xpose.msra.mxu0 0.0
    %427 = vmatprep.subr.mxu0 0.0
    %428 = vmatpush2.xpose.msra.mxu0 0.0
    %429 = vmatprep.subr.mxu0 0.0
    %430 = vmatpush2.xpose.msra.mxu0 0.0
    %431 = vmatprep.subr.mxu0 0.0
    %432 = vmatpush2.xpose.msra.mxu0 0.0
    %433 = vmatprep.subr.mxu0 0.0
    %434 = vmatpush2.xpose.msra.mxu0 0.0
    %435 = vmatprep.subr.mxu0 0.0
    %436 = vmatpush2.xpose.msra.mxu0 0.0
    %437 = vmatprep.subr.mxu0 0.0
    %438 = vmatpush2.xpose.msra.mxu0 0.0
    %439 = vmatprep.subr.mxu0 0.0
    %440 = vmatpush2.xpose.msra.mxu0 0.0
    %441 = vmatprep.subr.mxu0 0.0
    %442 = vmatpush2.xpose.msra.mxu0 0.0
    %443 = vmatprep.subr.mxu0 0.0
    %444 = vmatpush2.xpose.msra.mxu0 0.0
    %445 = vmatprep.subr.mxu0 0.0
    %446 = vmatpush2.xpose.msra.mxu0 0.0
    %447 = vmatprep.subr.mxu0 0.0
    %448 = vmatpush2.xpose.msra.mxu0 0.0
    %449 = vmatprep.mubr.f32.mxu0 0.0
    %450 = vmatmul.mubr.f32.gmra.mxu0 %v377
    %v451 = vpop.f32.mrf.mxu0
    %v452 = vadd.f32 %v69, %v451
    %v453 = vpop.f32.mrf.mxu0
    %454 = vmatprep.mubr.f32.mxu0 0.0
    %455 = vmatmul.mubr.f32.gmra.mxu0 %v379
    %v456 = vpop.f32.mrf.mxu0
    %v457 = vadd.f32 %v70, %v456
    %v458 = vpop.f32.mrf.mxu0
    %459 = vdwg.mxu0
    %v460 = vsel %vm258, %v452, -inf
    %461 = vmax.xlane.f32.xlu0 %v460
    %v462 = vpop.xlane.xlu0 %461
    %v463 = vsel %vm258, %v457, -inf
    %464 = vmax.xlane.f32.xlu0 %v463
    %v465 = vpop.xlane.xlu0 %464
    %v466 = vsub.f32 %v452, %v462
    %v467 = vsub.f32 %v457, %v465
    %v468 = vmul.f32 %v466, 1.442695
    %v469 = vpow.pop %v468
    %v470 = vmul.f32 %v467, 1.442695
    %v471 = vpow.pop %v470
    %v472 = vsel %vm258, %v469, 0.0
    %473 = vadd.xlane.f32.xlu0 %v472
    %v474 = vpop.xlane.xlu0 %473
    %v475 = vsel %vm258, %v471, 0.0
    %476 = vadd.xlane.f32.xlu0 %v475
    %v477 = vpop.xlane.xlu0 %476
    %v478 = vrcp.pop %v474
    %v479 = vrcp.pop %v477
    %480 = vrot.lane.b32.xlu0 %v156, 56
    %v481 = vpop.permute.xlu0 %480
    %482 = vrot.lane.b32.xlu0 %v161, 56
    %v483 = vpop.permute.xlu0 %482
    %v487 = vsel %vm258, %v469, 0
    %v490 = vsel %vm258, %v471, 0
    %492 = vmatprep.subr.mxu0 0.0
    %493 = vmatpush1.msra.mxu0 0.0
    %494 = vmatprep.subr.mxu0 0.0
    %495 = vmatpush1.msra.mxu0 0.0
    %496 = vmatprep.subr.mxu0 0.0
    %497 = vmatpush1.msra.mxu0 0.0
    %498 = vmatprep.subr.mxu0 0.0
    %499 = vmatpush1.msra.mxu0 0.0
    %500 = vmatprep.subr.mxu0 0.0
    %501 = vmatpush1.msra.mxu0 0.0
    %502 = vmatprep.subr.mxu0 0.0
    %503 = vmatpush1.msra.mxu0 0.0
    %504 = vmatprep.subr.mxu0 0.0
    %505 = vmatpush1.msra.mxu0 0.0
    %506 = vmatprep.subr.mxu0 0.0
    %507 = vmatpush1.msra.mxu0 0.0
    %508 = vmatprep.subr.mxu0 0.0
    %509 = vmatpush1.msra.mxu0 0.0
    %510 = vmatprep.subr.mxu0 0.0
    %511 = vmatpush1.msra.mxu0 0.0
    %512 = vmatprep.subr.mxu0 0.0
    %513 = vmatpush1.msra.mxu0 0.0
    %514 = vmatprep.subr.mxu0 0.0
    %515 = vmatpush1.msra.mxu0 0.0
    %516 = vmatprep.subr.mxu0 0.0
    %517 = vmatpush1.msra.mxu0 0.0
    %518 = vmatprep.subr.mxu0 0.0
    %519 = vmatpush1.msra.mxu0 0.0
    %520 = vmatprep.subr.mxu0 0.0
    %521 = vmatpush1.msra.mxu0 %v483
    %522 = vmatprep.subr.mxu0 0.0
    %523 = vmatpush1.msra.mxu0 %v481
    %524 = vmatprep.subr.mxu0 0.0
    %525 = vmatpush2.msra.mxu0 0.0
    %526 = vmatprep.subr.mxu0 0.0
    %527 = vmatpush2.msra.mxu0 0.0
    %528 = vmatprep.subr.mxu0 0.0
    %529 = vmatpush2.msra.mxu0 0.0
    %530 = vmatprep.subr.mxu0 0.0
    %531 = vmatpush2.msra.mxu0 0.0
    %532 = vmatprep.subr.mxu0 0.0
    %533 = vmatpush2.msra.mxu0 0.0
    %534 = vmatprep.subr.mxu0 0.0
    %535 = vmatpush2.msra.mxu0 0.0
    %536 = vmatprep.subr.mxu0 0.0
    %537 = vmatpush2.msra.mxu0 0.0
    %538 = vmatprep.subr.mxu0 0.0
    %539 = vmatpush2.msra.mxu0 0.0
    %540 = vmatprep.subr.mxu0 0.0
    %541 = vmatpush2.msra.mxu0 0.0
    %542 = vmatprep.subr.mxu0 0.0
    %543 = vmatpush2.msra.mxu0 0.0
    %544 = vmatprep.subr.mxu0 0.0
    %545 = vmatpush2.msra.mxu0 0.0
    %546 = vmatprep.subr.mxu0 0.0
    %547 = vmatpush2.msra.mxu0 0.0
    %548 = vmatprep.subr.mxu0 0.0
    %549 = vmatpush2.msra.mxu0 0.0
    %550 = vmatprep.subr.mxu0 0.0
    %551 = vmatpush2.msra.mxu0 0.0
    %552 = vmatprep.subr.mxu0 0.0
    %553 = vmatpush2.msra.mxu0 0.0
    %554 = vmatprep.subr.mxu0 0.0
    %555 = vmatpush2.msra.mxu0 0.0
    %556 = vmatprep.mubr.f32.mxu0 0.0
    %557 = vmatmul.mubr.f32.gmra.mxu0 %v487
    %v558 = vpop.f32.mrf.mxu0
    %v559 = vadd.f32 0.0, %v558
    %v560 = vpop.f32.mrf.mxu0
    %561 = vmatprep.mubr.f32.mxu0 0.0
    %562 = vmatmul.mubr.f32.gmra.mxu0 %v490
    %v563 = vpop.f32.mrf.mxu0
    %v564 = vadd.f32 0.0, %v563
    %v565 = vpop.f32.mrf.mxu0
    %566 = vdwg.mxu0
    %v567 = vmul.f32 %v559, %v478
    %v568 = vmul.f32 %v564, %v479
    %v569 = vld [vmem:[#allocation5 + $0x18] sm:$0xff]
    %571 = vrot.lane.b32.xlu0 %v569, 32
    %v572 = vpop.permute.xlu0 %571
    %v575 = vsel %vm172, %v567, 0
    %v578 = vsel %vm172, %v568, 0
    %580 = vmatprep.subr.mxu0 0.0
    %581 = vmatpush1.msra.mxu0 0.0
    %582 = vmatprep.subr.mxu0 0.0
    %583 = vmatpush1.msra.mxu0 0.0
    %584 = vmatprep.subr.mxu0 0.0
    %585 = vmatpush1.msra.mxu0 0.0
    %586 = vmatprep.subr.mxu0 0.0
    %587 = vmatpush1.msra.mxu0 0.0
    %588 = vmatprep.subr.mxu0 0.0
    %589 = vmatpush1.msra.mxu0 0.0
    %590 = vmatprep.subr.mxu0 0.0
    %591 = vmatpush1.msra.mxu0 0.0
    %592 = vmatprep.subr.mxu0 0.0
    %593 = vmatpush1.msra.mxu0 0.0
    %594 = vmatprep.subr.mxu0 0.0
    %595 = vmatpush1.msra.mxu0 0.0
    %596 = vmatprep.subr.mxu0 0.0
    %597 = vmatpush1.msra.mxu0 0.0
    %598 = vmatprep.subr.mxu0 0.0
    %599 = vmatpush1.msra.mxu0 0.0
    %600 = vmatprep.subr.mxu0 0.0
    %601 = vmatpush1.msra.mxu0 0.0
    %602 = vmatprep.subr.mxu0 0.0
    %603 = vmatpush1.msra.mxu0 0.0
    %604 = vmatprep.subr.mxu0 0.0
    %605 = vmatpush1.msra.mxu0 0.0
    %606 = vmatprep.subr.mxu0 0.0
    %607 = vmatpush1.msra.mxu0 0.0
    %608 = vmatprep.subr.mxu0 0.0
    %609 = vmatpush1.msra.mxu0 0.0
    %610 = vmatprep.subr.mxu0 0.0
    %611 = vmatpush1.msra.mxu0 %v572
    %612 = vmatprep.subr.mxu0 0.0
    %613 = vmatpush2.msra.mxu0 0.0
    %614 = vmatprep.subr.mxu0 0.0
    %615 = vmatpush2.msra.mxu0 0.0
    %616 = vmatprep.subr.mxu0 0.0
    %617 = vmatpush2.msra.mxu0 0.0
    %618 = vmatprep.subr.mxu0 0.0
    %619 = vmatpush2.msra.mxu0 0.0
    %620 = vmatprep.subr.mxu0 0.0
    %621 = vmatpush2.msra.mxu0 0.0
    %622 = vmatprep.subr.mxu0 0.0
    %623 = vmatpush2.msra.mxu0 0.0
    %624 = vmatprep.subr.mxu0 0.0
    %625 = vmatpush2.msra.mxu0 0.0
    %626 = vmatprep.subr.mxu0 0.0
    %627 = vmatpush2.msra.mxu0 0.0
    %628 = vmatprep.subr.mxu0 0.0
    %629 = vmatpush2.msra.mxu0 0.0
    %630 = vmatprep.subr.mxu0 0.0
    %631 = vmatpush2.msra.mxu0 0.0
    %632 = vmatprep.subr.mxu0 0.0
    %633 = vmatpush2.msra.mxu0 0.0
    %634 = vmatprep.subr.mxu0 0.0
    %635 = vmatpush2.msra.mxu0 0.0
    %636 = vmatprep.subr.mxu0 0.0
    %637 = vmatpush2.msra.mxu0 0.0
    %638 = vmatprep.subr.mxu0 0.0
    %639 = vmatpush2.msra.mxu0 0.0
    %640 = vmatprep.subr.mxu0 0.0
    %641 = vmatpush2.msra.mxu0 0.0
    %642 = vmatprep.subr.mxu0 0.0
    %643 = vmatpush2.msra.mxu0 0.0
    %644 = vmatprep.mubr.f32.mxu0 0.0
    %645 = vmatmul.mubr.f32.gmra.mxu0 %v575
    %v646 = vpop.f32.mrf.mxu0
    %v647 = vadd.f32 0.0, %v646
    %v648 = vpop.f32.mrf.mxu0
    %649 = vmatprep.mubr.f32.mxu0 0.0
    %650 = vmatmul.mubr.f32.gmra.mxu0 %v578
    %v651 = vpop.f32.mrf.mxu0
    %v652 = vadd.f32 0.0, %v651
    %v653 = vpop.f32.mrf.mxu0
    %654 = vdwg.mxu0
    %656 = vrot.lane.b32.xlu0 %v368, 32
    %v657 = vpop.permute.xlu0 %656
    %v660 = vsel %vm172, %v366, 0
    %v663 = vsel %vm172, %v367, 0
    %665 = vmatprep.subr.mxu0 0.0
    %666 = vmatpush1.msra.mxu0 0.0
    %667 = vmatprep.subr.mxu0 0.0
    %668 = vmatpush1.msra.mxu0 0.0
    %669 = vmatprep.subr.mxu0 0.0
    %670 = vmatpush1.msra.mxu0 0.0
    %671 = vmatprep.subr.mxu0 0.0
    %672 = vmatpush1.msra.mxu0 0.0
    %673 = vmatprep.subr.mxu0 0.0
    %674 = vmatpush1.msra.mxu0 0.0
    %675 = vmatprep.subr.mxu0 0.0
    %676 = vmatpush1.msra.mxu0 0.0
    %677 = vmatprep.subr.mxu0 0.0
    %678 = vmatpush1.msra.mxu0 0.0
    %679 = vmatprep.subr.mxu0 0.0
    %680 = vmatpush1.msra.mxu0 0.0
    %681 = vmatprep.subr.mxu0 0.0
    %682 = vmatpush1.msra.mxu0 0.0
    %683 = vmatprep.subr.mxu0 0.0
    %684 = vmatpush1.msra.mxu0 0.0
    %685 = vmatprep.subr.mxu0 0.0
    %686 = vmatpush1.msra.mxu0 0.0
    %687 = vmatprep.subr.mxu0 0.0
    %688 = vmatpush1.msra.mxu0 0.0
    %689 = vmatprep.subr.mxu0 0.0
    %690 = vmatpush1.msra.mxu0 0.0
    %691 = vmatprep.subr.mxu0 0.0
    %692 = vmatpush1.msra.mxu0 0.0
    %693 = vmatprep.subr.mxu0 0.0
    %694 = vmatpush1.msra.mxu0 0.0
    %695 = vmatprep.subr.mxu0 0.0
    %696 = vmatpush1.msra.mxu0 %v657
    %697 = vmatprep.subr.mxu0 0.0
    %698 = vmatpush2.msra.mxu0 0.0
    %699 = vmatprep.subr.mxu0 0.0
    %700 = vmatpush2.msra.mxu0 0.0
    %701 = vmatprep.subr.mxu0 0.0
    %702 = vmatpush2.msra.mxu0 0.0
    %703 = vmatprep.subr.mxu0 0.0
    %704 = vmatpush2.msra.mxu0 0.0
    %705 = vmatprep.subr.mxu0 0.0
    %706 = vmatpush2.msra.mxu0 0.0
    %707 = vmatprep.subr.mxu0 0.0
    %708 = vmatpush2.msra.mxu0 0.0
    %709 = vmatprep.subr.mxu0 0.0
    %710 = vmatpush2.msra.mxu0 0.0
    %711 = vmatprep.subr.mxu0 0.0
    %712 = vmatpush2.msra.mxu0 0.0
    %713 = vmatprep.subr.mxu0 0.0
    %714 = vmatpush2.msra.mxu0 0.0
    %715 = vmatprep.subr.mxu0 0.0
    %716 = vmatpush2.msra.mxu0 0.0
    %717 = vmatprep.subr.mxu0 0.0
    %718 = vmatpush2.msra.mxu0 0.0
    %719 = vmatprep.subr.mxu0 0.0
    %720 = vmatpush2.msra.mxu0 0.0
    %721 = vmatprep.subr.mxu0 0.0
    %722 = vmatpush2.msra.mxu0 0.0
    %723 = vmatprep.subr.mxu0 0.0
    %724 = vmatpush2.msra.mxu0 0.0
    %725 = vmatprep.subr.mxu0 0.0
    %726 = vmatpush2.msra.mxu0 0.0
    %727 = vmatprep.subr.mxu0 0.0
    %728 = vmatpush2.msra.mxu0 0.0
    %729 = vmatprep.mubr.f32.mxu0 0.0
    %730 = vmatmul.mubr.f32.gmra.mxu0 %v660
    %v731 = vpop.f32.mrf.mxu0
    %v732 = vadd.f32 %v647, %v731
    %v733 = vpop.f32.mrf.mxu0
    %734 = vmatprep.mubr.f32.mxu0 0.0
    %735 = vmatmul.mubr.f32.gmra.mxu0 %v663
    %v736 = vpop.f32.mrf.mxu0
    %v737 = vadd.f32 %v652, %v736
    %v738 = vpop.f32.mrf.mxu0
    %739 = vdwg.mxu0
    %740 = vrot.lane.b32.xlu0 %v164, 112
    %v741 = vpop.permute.xlu0 %740
    %742 = vrot.lane.b32.xlu0 %v165, 112
    %v743 = vpop.permute.xlu0 %742
    %744 = vrot.lane.b32.xlu0 %v156, 80
    %v745 = vpop.permute.xlu0 %744
    %746 = vrot.lane.b32.xlu0 %v161, 80
    %v747 = vpop.permute.xlu0 %746
    %v748 = vsel %vm172, %v741, 0
    %v750 = vsel %vm172, %v743, 0
    %v752 = vsel %vm172, %v745, 0
    %v754 = vsel %vm172, %v747, 0
    %756 = vmatprep.subr.mxu0 0.0
    %757 = vmatpush1.xpose.msra.mxu0 0.0
    %758 = vmatprep.subr.mxu0 0.0
    %759 = vmatpush1.xpose.msra.mxu0 0.0
    %760 = vmatprep.subr.mxu0 0.0
    %761 = vmatpush1.xpose.msra.mxu0 0.0
    %762 = vmatprep.subr.mxu0 0.0
    %763 = vmatpush1.xpose.msra.mxu0 0.0
    %764 = vmatprep.subr.mxu0 0.0
    %765 = vmatpush1.xpose.msra.mxu0 0.0
    %766 = vmatprep.subr.mxu0 0.0
    %767 = vmatpush1.xpose.msra.mxu0 0.0
    %768 = vmatprep.subr.mxu0 0.0
    %769 = vmatpush1.xpose.msra.mxu0 0.0
    %770 = vmatprep.subr.mxu0 0.0
    %771 = vmatpush1.xpose.msra.mxu0 0.0
    %772 = vmatprep.subr.mxu0 0.0
    %773 = vmatpush1.xpose.msra.mxu0 0.0
    %774 = vmatprep.subr.mxu0 0.0
    %775 = vmatpush1.xpose.msra.mxu0 0.0
    %776 = vmatprep.subr.mxu0 0.0
    %777 = vmatpush1.xpose.msra.mxu0 0.0
    %778 = vmatprep.subr.mxu0 0.0
    %779 = vmatpush1.xpose.msra.mxu0 0.0
    %780 = vmatprep.subr.mxu0 0.0
    %781 = vmatpush1.xpose.msra.mxu0 0.0
    %782 = vmatprep.subr.mxu0 0.0
    %783 = vmatpush1.xpose.msra.mxu0 0.0
    %784 = vmatprep.subr.mxu0 0.0
    %785 = vmatpush1.xpose.msra.mxu0 %v754
    %786 = vmatprep.subr.mxu0 0.0
    %787 = vmatpush1.xpose.msra.mxu0 %v752
    %788 = vmatprep.subr.mxu0 0.0
    %789 = vmatpush2.xpose.msra.mxu0 0.0
    %790 = vmatprep.subr.mxu0 0.0
    %791 = vmatpush2.xpose.msra.mxu0 0.0
    %792 = vmatprep.subr.mxu0 0.0
    %793 = vmatpush2.xpose.msra.mxu0 0.0
    %794 = vmatprep.subr.mxu0 0.0
    %795 = vmatpush2.xpose.msra.mxu0 0.0
    %796 = vmatprep.subr.mxu0 0.0
    %797 = vmatpush2.xpose.msra.mxu0 0.0
    %798 = vmatprep.subr.mxu0 0.0
    %799 = vmatpush2.xpose.msra.mxu0 0.0
    %800 = vmatprep.subr.mxu0 0.0
    %801 = vmatpush2.xpose.msra.mxu0 0.0
    %802 = vmatprep.subr.mxu0 0.0
    %803 = vmatpush2.xpose.msra.mxu0 0.0
    %804 = vmatprep.subr.mxu0 0.0
    %805 = vmatpush2.xpose.msra.mxu0 0.0
    %806 = vmatprep.subr.mxu0 0.0
    %807 = vmatpush2.xpose.msra.mxu0 0.0
    %808 = vmatprep.subr.mxu0 0.0
    %809 = vmatpush2.xpose.msra.mxu0 0.0
    %810 = vmatprep.subr.mxu0 0.0
    %811 = vmatpush2.xpose.msra.mxu0 0.0
    %812 = vmatprep.subr.mxu0 0.0
    %813 = vmatpush2.xpose.msra.mxu0 0.0
    %814 = vmatprep.subr.mxu0 0.0
    %815 = vmatpush2.xpose.msra.mxu0 0.0
    %816 = vmatprep.subr.mxu0 0.0
    %817 = vmatpush2.xpose.msra.mxu0 0.0
    %818 = vmatprep.subr.mxu0 0.0
    %819 = vmatpush2.xpose.msra.mxu0 0.0
    %820 = vmatprep.mubr.f32.mxu0 0.0
    %821 = vmatmul.mubr.f32.gmra.mxu0 %v748
    %v822 = vpop.f32.mrf.mxu0
    %v823 = vadd.f32 %v69, %v822
    %v824 = vpop.f32.mrf.mxu0
    %825 = vmatprep.mubr.f32.mxu0 0.0
    %826 = vmatmul.mubr.f32.gmra.mxu0 %v750
    %v827 = vpop.f32.mrf.mxu0
    %v828 = vadd.f32 %v70, %v827
    %v829 = vpop.f32.mrf.mxu0
    %830 = vdwg.mxu0
    %v831 = vsel %vm258, %v823, -inf
    %832 = vmax.xlane.f32.xlu0 %v831
    %v833 = vpop.xlane.xlu0 %832
    %v834 = vsel %vm258, %v828, -inf
    %835 = vmax.xlane.f32.xlu0 %v834
    %v836 = vpop.xlane.xlu0 %835
    %v837 = vsub.f32 %v823, %v833
    %v838 = vsub.f32 %v828, %v836
    %v839 = vmul.f32 %v837, 1.442695
    %v840 = vpow.pop %v839
    %v841 = vmul.f32 %v838, 1.442695
    %v842 = vpow.pop %v841
    %v843 = vsel %vm258, %v840, 0.0
    %844 = vadd.xlane.f32.xlu0 %v843
    %v845 = vpop.xlane.xlu0 %844
    %v846 = vsel %vm258, %v842, 0.0
    %847 = vadd.xlane.f32.xlu0 %v846
    %v848 = vpop.xlane.xlu0 %847
    %v849 = vrcp.pop %v845
    %v850 = vrcp.pop %v848
    %851 = vrot.lane.b32.xlu0 %v156, 48
    %v852 = vpop.permute.xlu0 %851
    %853 = vrot.lane.b32.xlu0 %v161, 48
    %v854 = vpop.permute.xlu0 %853
    %v858 = vsel %vm258, %v840, 0
    %v861 = vsel %vm258, %v842, 0
    %863 = vmatprep.subr.mxu0 0.0
    %864 = vmatpush1.msra.mxu0 0.0
    %865 = vmatprep.subr.mxu0 0.0
    %866 = vmatpush1.msra.mxu0 0.0
    %867 = vmatprep.subr.mxu0 0.0
    %868 = vmatpush1.msra.mxu0 0.0
    %869 = vmatprep.subr.mxu0 0.0
    %870 = vmatpush1.msra.mxu0 0.0
    %871 = vmatprep.subr.mxu0 0.0
    %872 = vmatpush1.msra.mxu0 0.0
    %873 = vmatprep.subr.mxu0 0.0
    %874 = vmatpush1.msra.mxu0 0.0
    %875 = vmatprep.subr.mxu0 0.0
    %876 = vmatpush1.msra.mxu0 0.0
    %877 = vmatprep.subr.mxu0 0.0
    %878 = vmatpush1.msra.mxu0 0.0
    %879 = vmatprep.subr.mxu0 0.0
    %880 = vmatpush1.msra.mxu0 0.0
    %881 = vmatprep.subr.mxu0 0.0
    %882 = vmatpush1.msra.mxu0 0.0
    %883 = vmatprep.subr.mxu0 0.0
    %884 = vmatpush1.msra.mxu0 0.0
    %885 = vmatprep.subr.mxu0 0.0
    %886 = vmatpush1.msra.mxu0 0.0
    %887 = vmatprep.subr.mxu0 0.0
    %888 = vmatpush1.msra.mxu0 0.0
    %889 = vmatprep.subr.mxu0 0.0
    %890 = vmatpush1.msra.mxu0 0.0
    %891 = vmatprep.subr.mxu0 0.0
    %892 = vmatpush1.msra.mxu0 %v854
    %893 = vmatprep.subr.mxu0 0.0
    %894 = vmatpush1.msra.mxu0 %v852
    %895 = vmatprep.subr.mxu0 0.0
    %896 = vmatpush2.msra.mxu0 0.0
    %897 = vmatprep.subr.mxu0 0.0
    %898 = vmatpush2.msra.mxu0 0.0
    %899 = vmatprep.subr.mxu0 0.0
    %900 = vmatpush2.msra.mxu0 0.0
    %901 = vmatprep.subr.mxu0 0.0
    %902 = vmatpush2.msra.mxu0 0.0
    %903 = vmatprep.subr.mxu0 0.0
    %904 = vmatpush2.msra.mxu0 0.0
    %905 = vmatprep.subr.mxu0 0.0
    %906 = vmatpush2.msra.mxu0 0.0
    %907 = vmatprep.subr.mxu0 0.0
    %908 = vmatpush2.msra.mxu0 0.0
    %909 = vmatprep.subr.mxu0 0.0
    %910 = vmatpush2.msra.mxu0 0.0
    %911 = vmatprep.subr.mxu0 0.0
    %912 = vmatpush2.msra.mxu0 0.0
    %913 = vmatprep.subr.mxu0 0.0
    %914 = vmatpush2.msra.mxu0 0.0
    %915 = vmatprep.subr.mxu0 0.0
    %916 = vmatpush2.msra.mxu0 0.0
    %917 = vmatprep.subr.mxu0 0.0
    %918 = vmatpush2.msra.mxu0 0.0
    %919 = vmatprep.subr.mxu0 0.0
    %920 = vmatpush2.msra.mxu0 0.0
    %921 = vmatprep.subr.mxu0 0.0
    %922 = vmatpush2.msra.mxu0 0.0
    %923 = vmatprep.subr.mxu0 0.0
    %924 = vmatpush2.msra.mxu0 0.0
    %925 = vmatprep.subr.mxu0 0.0
    %926 = vmatpush2.msra.mxu0 0.0
    %927 = vmatprep.mubr.f32.mxu0 0.0
    %928 = vmatmul.mubr.f32.gmra.mxu0 %v858
    %v929 = vpop.f32.mrf.mxu0
    %v930 = vadd.f32 0.0, %v929
    %v931 = vpop.f32.mrf.mxu0
    %932 = vmatprep.mubr.f32.mxu0 0.0
    %933 = vmatmul.mubr.f32.gmra.mxu0 %v861
    %v934 = vpop.f32.mrf.mxu0
    %v935 = vadd.f32 0.0, %v934
    %v936 = vpop.f32.mrf.mxu0
    %937 = vdwg.mxu0
    %v938 = vmul.f32 %v930, %v849
    %v939 = vmul.f32 %v935, %v850
    %v940 = vld [vmem:[#allocation5 + $0x30] sm:$0xff]
    %942 = vrot.lane.b32.xlu0 %v940, 32
    %v943 = vpop.permute.xlu0 %942
    %v946 = vsel %vm172, %v938, 0
    %v949 = vsel %vm172, %v939, 0
    %951 = vmatprep.subr.mxu0 0.0
    %952 = vmatpush1.msra.mxu0 0.0
    %953 = vmatprep.subr.mxu0 0.0
    %954 = vmatpush1.msra.mxu0 0.0
    %955 = vmatprep.subr.mxu0 0.0
    %956 = vmatpush1.msra.mxu0 0.0
    %957 = vmatprep.subr.mxu0 0.0
    %958 = vmatpush1.msra.mxu0 0.0
    %959 = vmatprep.subr.mxu0 0.0
    %960 = vmatpush1.msra.mxu0 0.0
    %961 = vmatprep.subr.mxu0 0.0
    %962 = vmatpush1.msra.mxu0 0.0
    %963 = vmatprep.subr.mxu0 0.0
    %964 = vmatpush1.msra.mxu0 0.0
    %965 = vmatprep.subr.mxu0 0.0
    %966 = vmatpush1.msra.mxu0 0.0
    %967 = vmatprep.subr.mxu0 0.0
    %968 = vmatpush1.msra.mxu0 0.0
    %969 = vmatprep.subr.mxu0 0.0
    %970 = vmatpush1.msra.mxu0 0.0
    %971 = vmatprep.subr.mxu0 0.0
    %972 = vmatpush1.msra.mxu0 0.0
    %973 = vmatprep.subr.mxu0 0.0
    %974 = vmatpush1.msra.mxu0 0.0
    %975 = vmatprep.subr.mxu0 0.0
    %976 = vmatpush1.msra.mxu0 0.0
    %977 = vmatprep.subr.mxu0 0.0
    %978 = vmatpush1.msra.mxu0 0.0
    %979 = vmatprep.subr.mxu0 0.0
    %980 = vmatpush1.msra.mxu0 0.0
    %981 = vmatprep.subr.mxu0 0.0
    %982 = vmatpush1.msra.mxu0 %v943
    %983 = vmatprep.subr.mxu0 0.0
    %984 = vmatpush2.msra.mxu0 0.0
    %985 = vmatprep.subr.mxu0 0.0
    %986 = vmatpush2.msra.mxu0 0.0
    %987 = vmatprep.subr.mxu0 0.0
    %988 = vmatpush2.msra.mxu0 0.0
    %989 = vmatprep.subr.mxu0 0.0
    %990 = vmatpush2.msra.mxu0 0.0
    %991 = vmatprep.subr.mxu0 0.0
    %992 = vmatpush2.msra.mxu0 0.0
    %993 = vmatprep.subr.mxu0 0.0
    %994 = vmatpush2.msra.mxu0 0.0
    %995 = vmatprep.subr.mxu0 0.0
    %996 = vmatpush2.msra.mxu0 0.0
    %997 = vmatprep.subr.mxu0 0.0
    %998 = vmatpush2.msra.mxu0 0.0
    %999 = vmatprep.subr.mxu0 0.0
    %1000 = vmatpush2.msra.mxu0 0.0
    %1001 = vmatprep.subr.mxu0 0.0
    %1002 = vmatpush2.msra.mxu0 0.0
    %1003 = vmatprep.subr.mxu0 0.0
    %1004 = vmatpush2.msra.mxu0 0.0
    %1005 = vmatprep.subr.mxu0 0.0
    %1006 = vmatpush2.msra.mxu0 0.0
    %1007 = vmatprep.subr.mxu0 0.0
    %1008 = vmatpush2.msra.mxu0 0.0
    %1009 = vmatprep.subr.mxu0 0.0
    %1010 = vmatpush2.msra.mxu0 0.0
    %1011 = vmatprep.subr.mxu0 0.0
    %1012 = vmatpush2.msra.mxu0 0.0
    %1013 = vmatprep.subr.mxu0 0.0
    %1014 = vmatpush2.msra.mxu0 0.0
    %1015 = vmatprep.mubr.f32.mxu0 0.0
    %1016 = vmatmul.mubr.f32.gmra.mxu0 %v946
    %v1017 = vpop.f32.mrf.mxu0
    %v1018 = vadd.f32 0.0, %v1017
    %v1019 = vpop.f32.mrf.mxu0
    %1020 = vmatprep.mubr.f32.mxu0 0.0
    %1021 = vmatmul.mubr.f32.gmra.mxu0 %v949
    %v1022 = vpop.f32.mrf.mxu0
    %v1023 = vadd.f32 0.0, %v1022
    %v1024 = vpop.f32.mrf.mxu0
    %1025 = vdwg.mxu0
    %v1026 = vadd.f32 %v732, %v1018
    %v1027 = vadd.f32 %v737, %v1023
    %1028 = vrot.lane.b32.xlu0 %v164, 104
    %v1029 = vpop.permute.xlu0 %1028
    %1030 = vrot.lane.b32.xlu0 %v165, 104
    %v1031 = vpop.permute.xlu0 %1030
    %1032 = vrot.lane.b32.xlu0 %v156, 72
    %v1033 = vpop.permute.xlu0 %1032
    %1034 = vrot.lane.b32.xlu0 %v161, 72
    %v1035 = vpop.permute.xlu0 %1034
    %v1036 = vsel %vm172, %v1029, 0
    %v1038 = vsel %vm172, %v1031, 0
    %v1040 = vsel %vm172, %v1033, 0
    %v1042 = vsel %vm172, %v1035, 0
    %1044 = vmatprep.subr.mxu0 0.0
    %1045 = vmatpush1.xpose.msra.mxu0 0.0
    %1046 = vmatprep.subr.mxu0 0.0
    %1047 = vmatpush1.xpose.msra.mxu0 0.0
    %1048 = vmatprep.subr.mxu0 0.0
    %1049 = vmatpush1.xpose.msra.mxu0 0.0
    %1050 = vmatprep.subr.mxu0 0.0
    %1051 = vmatpush1.xpose.msra.mxu0 0.0
    %1052 = vmatprep.subr.mxu0 0.0
    %1053 = vmatpush1.xpose.msra.mxu0 0.0
    %1054 = vmatprep.subr.mxu0 0.0
    %1055 = vmatpush1.xpose.msra.mxu0 0.0
    %1056 = vmatprep.subr.mxu0 0.0
    %1057 = vmatpush1.xpose.msra.mxu0 0.0
    %1058 = vmatprep.subr.mxu0 0.0
    %1059 = vmatpush1.xpose.msra.mxu0 0.0
    %1060 = vmatprep.subr.mxu0 0.0
    %1061 = vmatpush1.xpose.msra.mxu0 0.0
    %1062 = vmatprep.subr.mxu0 0.0
    %1063 = vmatpush1.xpose.msra.mxu0 0.0
    %1064 = vmatprep.subr.mxu0 0.0
    %1065 = vmatpush1.xpose.msra.mxu0 0.0
    %1066 = vmatprep.subr.mxu0 0.0
    %1067 = vmatpush1.xpose.msra.mxu0 0.0
    %1068 = vmatprep.subr.mxu0 0.0
    %1069 = vmatpush1.xpose.msra.mxu0 0.0
    %1070 = vmatprep.subr.mxu0 0.0
    %1071 = vmatpush1.xpose.msra.mxu0 0.0
    %1072 = vmatprep.subr.mxu0 0.0
    %1073 = vmatpush1.xpose.msra.mxu0 %v1042
    %1074 = vmatprep.subr.mxu0 0.0
    %1075 = vmatpush1.xpose.msra.mxu0 %v1040
    %1076 = vmatprep.subr.mxu0 0.0
    %1077 = vmatpush2.xpose.msra.mxu0 0.0
    %1078 = vmatprep.subr.mxu0 0.0
    %1079 = vmatpush2.xpose.msra.mxu0 0.0
    %1080 = vmatprep.subr.mxu0 0.0
    %1081 = vmatpush2.xpose.msra.mxu0 0.0
    %1082 = vmatprep.subr.mxu0 0.0
    %1083 = vmatpush2.xpose.msra.mxu0 0.0
    %1084 = vmatprep.subr.mxu0 0.0
    %1085 = vmatpush2.xpose.msra.mxu0 0.0
    %1086 = vmatprep.subr.mxu0 0.0
    %1087 = vmatpush2.xpose.msra.mxu0 0.0
    %1088 = vmatprep.subr.mxu0 0.0
    %1089 = vmatpush2.xpose.msra.mxu0 0.0
    %1090 = vmatprep.subr.mxu0 0.0
    %1091 = vmatpush2.xpose.msra.mxu0 0.0
    %1092 = vmatprep.subr.mxu0 0.0
    %1093 = vmatpush2.xpose.msra.mxu0 0.0
    %1094 = vmatprep.subr.mxu0 0.0
    %1095 = vmatpush2.xpose.msra.mxu0 0.0
    %1096 = vmatprep.subr.mxu0 0.0
    %1097 = vmatpush2.xpose.msra.mxu0 0.0
    %1098 = vmatprep.subr.mxu0 0.0
    %1099 = vmatpush2.xpose.msra.mxu0 0.0
    %1100 = vmatprep.subr.mxu0 0.0
    %1101 = vmatpush2.xpose.msra.mxu0 0.0
    %1102 = vmatprep.subr.mxu0 0.0
    %1103 = vmatpush2.xpose.msra.mxu0 0.0
    %1104 = vmatprep.subr.mxu0 0.0
    %1105 = vmatpush2.xpose.msra.mxu0 0.0
    %1106 = vmatprep.subr.mxu0 0.0
    %1107 = vmatpush2.xpose.msra.mxu0 0.0
    %1108 = vmatprep.mubr.f32.mxu0 0.0
    %1109 = vmatmul.mubr.f32.gmra.mxu0 %v1036
    %v1110 = vpop.f32.mrf.mxu0
    %v1111 = vadd.f32 %v69, %v1110
    %v1112 = vpop.f32.mrf.mxu0
    %1113 = vmatprep.mubr.f32.mxu0 0.0
    %1114 = vmatmul.mubr.f32.gmra.mxu0 %v1038
    %v1115 = vpop.f32.mrf.mxu0
    %v1116 = vadd.f32 %v70, %v1115
    %v1117 = vpop.f32.mrf.mxu0
    %1118 = vdwg.mxu0
    %v1119 = vsel %vm258, %v1111, -inf
    %1120 = vmax.xlane.f32.xlu0 %v1119
    %v1121 = vpop.xlane.xlu0 %1120
    %v1122 = vsel %vm258, %v1116, -inf
    %1123 = vmax.xlane.f32.xlu0 %v1122
    %v1124 = vpop.xlane.xlu0 %1123
    %v1125 = vsub.f32 %v1111, %v1121
    %v1126 = vsub.f32 %v1116, %v1124
    %v1127 = vmul.f32 %v1125, 1.442695
    %v1128 = vpow.pop %v1127
    %v1129 = vmul.f32 %v1126, 1.442695
    %v1130 = vpow.pop %v1129
    %v1131 = vsel %vm258, %v1128, 0.0
    %1132 = vadd.xlane.f32.xlu0 %v1131
    %v1133 = vpop.xlane.xlu0 %1132
    %v1134 = vsel %vm258, %v1130, 0.0
    %1135 = vadd.xlane.f32.xlu0 %v1134
    %v1136 = vpop.xlane.xlu0 %1135
    %v1137 = vrcp.pop %v1133
    %v1138 = vrcp.pop %v1136
    %1139 = vrot.lane.b32.xlu0 %v156, 40
    %v1140 = vpop.permute.xlu0 %1139
    %1141 = vrot.lane.b32.xlu0 %v161, 40
    %v1142 = vpop.permute.xlu0 %1141
    %v1146 = vsel %vm258, %v1128, 0
    %v1149 = vsel %vm258, %v1130, 0
    %1151 = vmatprep.subr.mxu0 0.0
    %1152 = vmatpush1.msra.mxu0 0.0
    %1153 = vmatprep.subr.mxu0 0.0
    %1154 = vmatpush1.msra.mxu0 0.0
    %1155 = vmatprep.subr.mxu0 0.0
    %1156 = vmatpush1.msra.mxu0 0.0
    %1157 = vmatprep.subr.mxu0 0.0
    %1158 = vmatpush1.msra.mxu0 0.0
    %1159 = vmatprep.subr.mxu0 0.0
    %1160 = vmatpush1.msra.mxu0 0.0
    %1161 = vmatprep.subr.mxu0 0.0
    %1162 = vmatpush1.msra.mxu0 0.0
    %1163 = vmatprep.subr.mxu0 0.0
    %1164 = vmatpush1.msra.mxu0 0.0
    %1165 = vmatprep.subr.mxu0 0.0
    %1166 = vmatpush1.msra.mxu0 0.0
    %1167 = vmatprep.subr.mxu0 0.0
    %1168 = vmatpush1.msra.mxu0 0.0
    %1169 = vmatprep.subr.mxu0 0.0
    %1170 = vmatpush1.msra.mxu0 0.0
    %1171 = vmatprep.subr.mxu0 0.0
    %1172 = vmatpush1.msra.mxu0 0.0
    %1173 = vmatprep.subr.mxu0 0.0
    %1174 = vmatpush1.msra.mxu0 0.0
    %1175 = vmatprep.subr.mxu0 0.0
    %1176 = vmatpush1.msra.mxu0 0.0
    %1177 = vmatprep.subr.mxu0 0.0
    %1178 = vmatpush1.msra.mxu0 0.0
    %1179 = vmatprep.subr.mxu0 0.0
    %1180 = vmatpush1.msra.mxu0 %v1142
    %1181 = vmatprep.subr.mxu0 0.0
    %1182 = vmatpush1.msra.mxu0 %v1140
    %1183 = vmatprep.subr.mxu0 0.0
    %1184 = vmatpush2.msra.mxu0 0.0
    %1185 = vmatprep.subr.mxu0 0.0
    %1186 = vmatpush2.msra.mxu0 0.0
    %1187 = vmatprep.subr.mxu0 0.0
    %1188 = vmatpush2.msra.mxu0 0.0
    %1189 = vmatprep.subr.mxu0 0.0
    %1190 = vmatpush2.msra.mxu0 0.0
    %1191 = vmatprep.subr.mxu0 0.0
    %1192 = vmatpush2.msra.mxu0 0.0
    %1193 = vmatprep.subr.mxu0 0.0
    %1194 = vmatpush2.msra.mxu0 0.0
    %1195 = vmatprep.subr.mxu0 0.0
    %1196 = vmatpush2.msra.mxu0 0.0
    %1197 = vmatprep.subr.mxu0 0.0
    %1198 = vmatpush2.msra.mxu0 0.0
    %1199 = vmatprep.subr.mxu0 0.0
    %1200 = vmatpush2.msra.mxu0 0.0
    %1201 = vmatprep.subr.mxu0 0.0
    %1202 = vmatpush2.msra.mxu0 0.0
    %1203 = vmatprep.subr.mxu0 0.0
    %1204 = vmatpush2.msra.mxu0 0.0
    %1205 = vmatprep.subr.mxu0 0.0
    %1206 = vmatpush2.msra.mxu0 0.0
    %1207 = vmatprep.subr.mxu0 0.0
    %1208 = vmatpush2.msra.mxu0 0.0
    %1209 = vmatprep.subr.mxu0 0.0
    %1210 = vmatpush2.msra.mxu0 0.0
    %1211 = vmatprep.subr.mxu0 0.0
    %1212 = vmatpush2.msra.mxu0 0.0
    %1213 = vmatprep.subr.mxu0 0.0
    %1214 = vmatpush2.msra.mxu0 0.0
    %1215 = vmatprep.mubr.f32.mxu0 0.0
    %1216 = vmatmul.mubr.f32.gmra.mxu0 %v1146
    %v1217 = vpop.f32.mrf.mxu0
    %v1218 = vadd.f32 0.0, %v1217
    %v1219 = vpop.f32.mrf.mxu0
    %1220 = vmatprep.mubr.f32.mxu0 0.0
    %1221 = vmatmul.mubr.f32.gmra.mxu0 %v1149
    %v1222 = vpop.f32.mrf.mxu0
    %v1223 = vadd.f32 0.0, %v1222
    %v1224 = vpop.f32.mrf.mxu0
    %1225 = vdwg.mxu0
    %v1226 = vmul.f32 %v1218, %v1137
    %v1227 = vmul.f32 %v1223, %v1138
    %1229 = vrot.lane.b32.xlu0 %v74, 32
    %v1230 = vpop.permute.xlu0 %1229
    %v1233 = vsel %vm172, %v1226, 0
    %v1236 = vsel %vm172, %v1227, 0
    %1238 = vmatprep.subr.mxu0 0.0
    %1239 = vmatpush1.msra.mxu0 0.0
    %1240 = vmatprep.subr.mxu0 0.0
    %1241 = vmatpush1.msra.mxu0 0.0
    %1242 = vmatprep.subr.mxu0 0.0
    %1243 = vmatpush1.msra.mxu0 0.0
    %1244 = vmatprep.subr.mxu0 0.0
    %1245 = vmatpush1.msra.mxu0 0.0
    %1246 = vmatprep.subr.mxu0 0.0
    %1247 = vmatpush1.msra.mxu0 0.0
    %1248 = vmatprep.subr.mxu0 0.0
    %1249 = vmatpush1.msra.mxu0 0.0
    %1250 = vmatprep.subr.mxu0 0.0
    %1251 = vmatpush1.msra.mxu0 0.0
    %1252 = vmatprep.subr.mxu0 0.0
    %1253 = vmatpush1.msra.mxu0 0.0
    %1254 = vmatprep.subr.mxu0 0.0
    %1255 = vmatpush1.msra.mxu0 0.0
    %1256 = vmatprep.subr.mxu0 0.0
    %1257 = vmatpush1.msra.mxu0 0.0
    %1258 = vmatprep.subr.mxu0 0.0
    %1259 = vmatpush1.msra.mxu0 0.0
    %1260 = vmatprep.subr.mxu0 0.0
    %1261 = vmatpush1.msra.mxu0 0.0
    %1262 = vmatprep.subr.mxu0 0.0
    %1263 = vmatpush1.msra.mxu0 0.0
    %1264 = vmatprep.subr.mxu0 0.0
    %1265 = vmatpush1.msra.mxu0 0.0
    %1266 = vmatprep.subr.mxu0 0.0
    %1267 = vmatpush1.msra.mxu0 0.0
    %1268 = vmatprep.subr.mxu0 0.0
    %1269 = vmatpush1.msra.mxu0 %v1230
    %1270 = vmatprep.subr.mxu0 0.0
    %1271 = vmatpush2.msra.mxu0 0.0
    %1272 = vmatprep.subr.mxu0 0.0
    %1273 = vmatpush2.msra.mxu0 0.0
    %1274 = vmatprep.subr.mxu0 0.0
    %1275 = vmatpush2.msra.mxu0 0.0
    %1276 = vmatprep.subr.mxu0 0.0
    %1277 = vmatpush2.msra.mxu0 0.0
    %1278 = vmatprep.subr.mxu0 0.0
    %1279 = vmatpush2.msra.mxu0 0.0
    %1280 = vmatprep.subr.mxu0 0.0
    %1281 = vmatpush2.msra.mxu0 0.0
    %1282 = vmatprep.subr.mxu0 0.0
    %1283 = vmatpush2.msra.mxu0 0.0
    %1284 = vmatprep.subr.mxu0 0.0
    %1285 = vmatpush2.msra.mxu0 0.0
    %1286 = vmatprep.subr.mxu0 0.0
    %1287 = vmatpush2.msra.mxu0 0.0
    %1288 = vmatprep.subr.mxu0 0.0
    %1289 = vmatpush2.msra.mxu0 0.0
    %1290 = vmatprep.subr.mxu0 0.0
    %1291 = vmatpush2.msra.mxu0 0.0
    %1292 = vmatprep.subr.mxu0 0.0
    %1293 = vmatpush2.msra.mxu0 0.0
    %1294 = vmatprep.subr.mxu0 0.0
    %1295 = vmatpush2.msra.mxu0 0.0
    %1296 = vmatprep.subr.mxu0 0.0
    %1297 = vmatpush2.msra.mxu0 0.0
    %1298 = vmatprep.subr.mxu0 0.0
    %1299 = vmatpush2.msra.mxu0 0.0
    %1300 = vmatprep.subr.mxu0 0.0
    %1301 = vmatpush2.msra.mxu0 0.0
    %1302 = vmatprep.mubr.f32.mxu0 0.0
    %1303 = vmatmul.mubr.f32.gmra.mxu0 %v1233
    %v1304 = vpop.f32.mrf.mxu0
    %v1305 = vadd.f32 0.0, %v1304
    %v1306 = vpop.f32.mrf.mxu0
    %1307 = vmatprep.mubr.f32.mxu0 0.0
    %1308 = vmatmul.mubr.f32.gmra.mxu0 %v1236
    %v1309 = vpop.f32.mrf.mxu0
    %v1310 = vadd.f32 0.0, %v1309
    %v1311 = vpop.f32.mrf.mxu0
    %1312 = vdwg.mxu0
    %v1313 = vadd.f32 %v1026, %v1305
    %v1314 = vadd.f32 %v1027, %v1310
    %1315 = vrot.lane.b32.xlu0 %v80, 32
    %v1316 = vpop.permute.xlu0 %1315
    %v1318 = vadd.f32 %v1313, %v1316
    %v1319 = vadd.f32 %v1314, %v1316
    %v1320 = vadd.f32 %v57, %v1318
    %v1321 = vadd.f32 %v58, %v1319
    %v1322 = vld [vmem:[#allocation7] sm:$0x1]
    %v1323 = vld [vmem:[#allocation7 + $0x3] sm:$0x1]
    %v1324 = vsel %vm82, %v1320, 0.0
    %1325 = vadd.xlane.f32.xlu0 %v1324
    %v1326 = vpop.xlane.xlu0 %1325
    %v1327 = vsel %vm82, %v1321, 0.0
    %1328 = vadd.xlane.f32.xlu0 %v1327
    %v1329 = vpop.xlane.xlu0 %1328
    %v1330 = vrcp.pop 32.0
    %v1331 = vmul.f32 %v1326, %v1330
    %v1332 = vmul.f32 %v1329, %v1330
    %v1333 = vsub.f32 %v1320, %v1331
    %v1334 = vsub.f32 %v1321, %v1332
    %v1335 = vmul.f32 %v1333, %v1333
    %v1336 = vmul.f32 %v1334, %v1334
    %v1337 = vsel %vm82, %v1335, 0.0
    %1338 = vadd.xlane.f32.xlu0 %v1337
    %v1339 = vpop.xlane.xlu0 %1338
    %v1340 = vsel %vm82, %v1336, 0.0
    %1341 = vadd.xlane.f32.xlu0 %v1340
    %v1342 = vpop.xlane.xlu0 %1341
    %v1343 = vmul.f32 %v1339, %v1330
    %v1344 = vmul.f32 %v1342, %v1330
    %v1345 = vadd.f32 %v1343, 1e-05
    %v1346 = vadd.f32 %v1344, 1e-05
    %v1347 = vrsqrt.pop %v1345
    %v1348 = vrsqrt.pop %v1346
    %v1349 = vmul.f32 %v1333, %v1347
    %v1350 = vmul.f32 %v1334, %v1348
    %v1351 = vlaneseq
    %v1352 = vshrl.u32 %v1351, 7
    %v1353 = vsub.s32 0, %v1352
    %v1354 = vrot.slane %v1322, %v1353
    %v1355 = vmul.f32 %v1349, %v1354
    %v1356 = vmul.f32 %v1350, %v1354
    %v1357 = vlaneseq
    %v1358 = vshrl.u32 %v1357, 7
    %v1359 = vsub.s32 0, %v1358
    %v1360 = vrot.slane %v1323, %v1359
    %v1361 = vadd.f32 %v1355, %v1360
    %v1362 = vadd.f32 %v1356, %v1360
    %v1363 = vld [vmem:[#allocation5 + $0x8] sm:$0xff]
    %v1364 = vld [vmem:[#allocation5 + $0x20] sm:$0xff]
    %v1365 = vld [vmem:[#allocation5 + $0x38] sm:$0xff]
    %v1366 = vld [vmem:[#allocation5 + $0x50] sm:$0xff]
    %v1367 = vld [vmem:[%s2 + $0x1] sm:$0x1]
    %v1369 = vlaneseq
    %v1370 = vshrl.u32 %v1369, 7
    %v1371 = vsub.s32 0, %v1370
    %v1372 = vrot.slane %v1367, %v1371
    %v1375 = vsel %vm82, %v1361, 0
    %v1378 = vsel %vm82, %v1362, 0
    %1380 = vmatprep.subr.mxu0 0.0
    %1381 = vmatpush1.msra.mxu0 0.0
    %1382 = vmatprep.subr.mxu0 0.0
    %1383 = vmatpush1.msra.mxu0 0.0
    %1384 = vmatprep.subr.mxu0 0.0
    %1385 = vmatpush1.msra.mxu0 0.0
    %1386 = vmatprep.subr.mxu0 0.0
    %1387 = vmatpush1.msra.mxu0 0.0
    %1388 = vmatprep.subr.mxu0 0.0
    %1389 = vmatpush1.msra.mxu0 0.0
    %1390 = vmatprep.subr.mxu0 0.0
    %1391 = vmatpush1.msra.mxu0 0.0
    %1392 = vmatprep.subr.mxu0 0.0
    %1393 = vmatpush1.msra.mxu0 0.0
    %1394 = vmatprep.subr.mxu0 0.0
    %1395 = vmatpush1.msra.mxu0 0.0
    %1396 = vmatprep.subr.mxu0 0.0
    %1397 = vmatpush1.msra.mxu0 0.0
    %1398 = vmatprep.subr.mxu0 0.0
    %1399 = vmatpush1.msra.mxu0 0.0
    %1400 = vmatprep.subr.mxu0 0.0
    %1401 = vmatpush1.msra.mxu0 0.0
    %1402 = vmatprep.subr.mxu0 0.0
    %1403 = vmatpush1.msra.mxu0 0.0
    %1404 = vmatprep.subr.mxu0 0.0
    %1405 = vmatpush1.msra.mxu0 %v1366
    %1406 = vmatprep.subr.mxu0 0.0
    %1407 = vmatpush1.msra.mxu0 %v1365
    %1408 = vmatprep.subr.mxu0 0.0
    %1409 = vmatpush1.msra.mxu0 %v1364
    %1410 = vmatprep.subr.mxu0 0.0
    %1411 = vmatpush1.msra.mxu0 %v1363
    %1412 = vmatprep.subr.mxu0 0.0
    %1413 = vmatpush2.msra.mxu0 0.0
    %1414 = vmatprep.subr.mxu0 0.0
    %1415 = vmatpush2.msra.mxu0 0.0
    %1416 = vmatprep.subr.mxu0 0.0
    %1417 = vmatpush2.msra.mxu0 0.0
    %1418 = vmatprep.subr.mxu0 0.0
    %1419 = vmatpush2.msra.mxu0 0.0
    %1420 = vmatprep.subr.mxu0 0.0
    %1421 = vmatpush2.msra.mxu0 0.0
    %1422 = vmatprep.subr.mxu0 0.0
    %1423 = vmatpush2.msra.mxu0 0.0
    %1424 = vmatprep.subr.mxu0 0.0
    %1425 = vmatpush2.msra.mxu0 0.0
    %1426 = vmatprep.subr.mxu0 0.0
    %1427 = vmatpush2.msra.mxu0 0.0
    %1428 = vmatprep.subr.mxu0 0.0
    %1429 = vmatpush2.msra.mxu0 0.0
    %1430 = vmatprep.subr.mxu0 0.0
    %1431 = vmatpush2.msra.mxu0 0.0
    %1432 = vmatprep.subr.mxu0 0.0
    %1433 = vmatpush2.msra.mxu0 0.0
    %1434 = vmatprep.subr.mxu0 0.0
    %1435 = vmatpush2.msra.mxu0 0.0
    %1436 = vmatprep.subr.mxu0 0.0
    %1437 = vmatpush2.msra.mxu0 0.0
    %1438 = vmatprep.subr.mxu0 0.0
    %1439 = vmatpush2.msra.mxu0 0.0
    %1440 = vmatprep.subr.mxu0 0.0
    %1441 = vmatpush2.msra.mxu0 0.0
    %1442 = vmatprep.subr.mxu0 0.0
    %1443 = vmatpush2.msra.mxu0 0.0
    %1444 = vmatprep.mubr.f32.mxu0 0.0
    %1445 = vmatmul.mubr.f32.gmra.mxu0 %v1375
    %v1446 = vpop.f32.mrf.mxu0
    %v1447 = vadd.f32 %v1372, %v1446
    %v1448 = vpop.f32.mrf.mxu0
    %1449 = vmatprep.mubr.f32.mxu0 0.0
    %1450 = vmatmul.mubr.f32.gmra.mxu0 %v1378
    %v1451 = vpop.f32.mrf.mxu0
    %v1452 = vadd.f32 %v1372, %v1451
    %v1453 = vpop.f32.mrf.mxu0
    %1454 = vdwg.mxu0
    %v1455 = vmul.f32 %v1447, 0.35355338
    %v1456 = vmul.f32 %v1452, 0.35355338
    %1459 = vrot.lane.b32.xlu0 %v1447, 96
    %v1460 = vpop.permute.xlu0 %1459
    %1461 = vrot.lane.b32.xlu0 %v1452, 96
    %v1462 = vpop.permute.xlu0 %1461
    %v1464 = vsel %vm172, %v1455, 0
    %v1467 = vsel %vm172, %v1456, 0
    %v1469 = vsel %vm172, %v1460, 0
    %v1471 = vsel %vm172, %v1462, 0
    %1473 = vmatprep.subr.mxu0 0.0
    %1474 = vmatpush1.xpose.msra.mxu0 0.0
    %1475 = vmatprep.subr.mxu0 0.0
    %1476 = vmatpush1.xpose.msra.mxu0 0.0
    %1477 = vmatprep.subr.mxu0 0.0
    %1478 = vmatpush1.xpose.msra.mxu0 0.0
    %1479 = vmatprep.subr.mxu0 0.0
    %1480 = vmatpush1.xpose.msra.mxu0 0.0
    %1481 = vmatprep.subr.mxu0 0.0
    %1482 = vmatpush1.xpose.msra.mxu0 0.0
    %1483 = vmatprep.subr.mxu0 0.0
    %1484 = vmatpush1.xpose.msra.mxu0 0.0
    %1485 = vmatprep.subr.mxu0 0.0
    %1486 = vmatpush1.xpose.msra.mxu0 0.0
    %1487 = vmatprep.subr.mxu0 0.0
    %1488 = vmatpush1.xpose.msra.mxu0 0.0
    %1489 = vmatprep.subr.mxu0 0.0
    %1490 = vmatpush1.xpose.msra.mxu0 0.0
    %1491 = vmatprep.subr.mxu0 0.0
    %1492 = vmatpush1.xpose.msra.mxu0 0.0
    %1493 = vmatprep.subr.mxu0 0.0
    %1494 = vmatpush1.xpose.msra.mxu0 0.0
    %1495 = vmatprep.subr.mxu0 0.0
    %1496 = vmatpush1.xpose.msra.mxu0 0.0
    %1497 = vmatprep.subr.mxu0 0.0
    %1498 = vmatpush1.xpose.msra.mxu0 0.0
    %1499 = vmatprep.subr.mxu0 0.0
    %1500 = vmatpush1.xpose.msra.mxu0 0.0
    %1501 = vmatprep.subr.mxu0 0.0
    %1502 = vmatpush1.xpose.msra.mxu0 %v1471
    %1503 = vmatprep.subr.mxu0 0.0
    %1504 = vmatpush1.xpose.msra.mxu0 %v1469
    %1505 = vmatprep.subr.mxu0 0.0
    %1506 = vmatpush2.xpose.msra.mxu0 0.0
    %1507 = vmatprep.subr.mxu0 0.0
    %1508 = vmatpush2.xpose.msra.mxu0 0.0
    %1509 = vmatprep.subr.mxu0 0.0
    %1510 = vmatpush2.xpose.msra.mxu0 0.0
    %1511 = vmatprep.subr.mxu0 0.0
    %1512 = vmatpush2.xpose.msra.mxu0 0.0
    %1513 = vmatprep.subr.mxu0 0.0
    %1514 = vmatpush2.xpose.msra.mxu0 0.0
    %1515 = vmatprep.subr.mxu0 0.0
    %1516 = vmatpush2.xpose.msra.mxu0 0.0
    %1517 = vmatprep.subr.mxu0 0.0
    %1518 = vmatpush2.xpose.msra.mxu0 0.0
    %1519 = vmatprep.subr.mxu0 0.0
    %1520 = vmatpush2.xpose.msra.mxu0 0.0
    %1521 = vmatprep.subr.mxu0 0.0
    %1522 = vmatpush2.xpose.msra.mxu0 0.0
    %1523 = vmatprep.subr.mxu0 0.0
    %1524 = vmatpush2.xpose.msra.mxu0 0.0
    %1525 = vmatprep.subr.mxu0 0.0
    %1526 = vmatpush2.xpose.msra.mxu0 0.0
    %1527 = vmatprep.subr.mxu0 0.0
    %1528 = vmatpush2.xpose.msra.mxu0 0.0
    %1529 = vmatprep.subr.mxu0 0.0
    %1530 = vmatpush2.xpose.msra.mxu0 0.0
    %1531 = vmatprep.subr.mxu0 0.0
    %1532 = vmatpush2.xpose.msra.mxu0 0.0
    %1533 = vmatprep.subr.mxu0 0.0
    %1534 = vmatpush2.xpose.msra.mxu0 0.0
    %1535 = vmatprep.subr.mxu0 0.0
    %1536 = vmatpush2.xpose.msra.mxu0 0.0
    %1537 = vmatprep.mubr.f32.mxu0 0.0
    %1538 = vmatmul.mubr.f32.gmra.mxu0 %v1464
    %v1539 = vpop.f32.mrf.mxu0
    %v1540 = vadd.f32 %v69, %v1539
    %v1541 = vpop.f32.mrf.mxu0
    %1542 = vmatprep.mubr.f32.mxu0 0.0
    %1543 = vmatmul.mubr.f32.gmra.mxu0 %v1467
    %v1544 = vpop.f32.mrf.mxu0
    %v1545 = vadd.f32 %v70, %v1544
    %v1546 = vpop.f32.mrf.mxu0
    %1547 = vdwg.mxu0
    %v1548 = vsel %vm258, %v1540, -inf
    %1549 = vmax.xlane.f32.xlu0 %v1548
    %v1550 = vpop.xlane.xlu0 %1549
    %v1551 = vsel %vm258, %v1545, -inf
    %1552 = vmax.xlane.f32.xlu0 %v1551
    %v1553 = vpop.xlane.xlu0 %1552
    %v1554 = vsub.f32 %v1540, %v1550
    %v1555 = vsub.f32 %v1545, %v1553
    %v1556 = vmul.f32 %v1554, 1.442695
    %v1557 = vpow.pop %v1556
    %v1558 = vmul.f32 %v1555, 1.442695
    %v1559 = vpow.pop %v1558
    %v1560 = vsel %vm258, %v1557, 0.0
    %1561 = vadd.xlane.f32.xlu0 %v1560
    %v1562 = vpop.xlane.xlu0 %1561
    %v1563 = vsel %vm258, %v1559, 0.0
    %1564 = vadd.xlane.f32.xlu0 %v1563
    %v1565 = vpop.xlane.xlu0 %1564
    %v1566 = vrcp.pop %v1562
    %v1567 = vrcp.pop %v1565
    %1568 = vrot.lane.b32.xlu0 %v1447, 64
    %v1569 = vpop.permute.xlu0 %1568
    %1570 = vrot.lane.b32.xlu0 %v1452, 64
    %v1571 = vpop.permute.xlu0 %1570
    %v1575 = vsel %vm258, %v1557, 0
    %v1578 = vsel %vm258, %v1559, 0
    %1580 = vmatprep.subr.mxu0 0.0
    %1581 = vmatpush1.msra.mxu0 0.0
    %1582 = vmatprep.subr.mxu0 0.0
    %1583 = vmatpush1.msra.mxu0 0.0
    %1584 = vmatprep.subr.mxu0 0.0
    %1585 = vmatpush1.msra.mxu0 0.0
    %1586 = vmatprep.subr.mxu0 0.0
    %1587 = vmatpush1.msra.mxu0 0.0
    %1588 = vmatprep.subr.mxu0 0.0
    %1589 = vmatpush1.msra.mxu0 0.0
    %1590 = vmatprep.subr.mxu0 0.0
    %1591 = vmatpush1.msra.mxu0 0.0
    %1592 = vmatprep.subr.mxu0 0.0
    %1593 = vmatpush1.msra.mxu0 0.0
    %1594 = vmatprep.subr.mxu0 0.0
    %1595 = vmatpush1.msra.mxu0 0.0
    %1596 = vmatprep.subr.mxu0 0.0
    %1597 = vmatpush1.msra.mxu0 0.0
    %1598 = vmatprep.subr.mxu0 0.0
    %1599 = vmatpush1.msra.mxu0 0.0
    %1600 = vmatprep.subr.mxu0 0.0
    %1601 = vmatpush1.msra.mxu0 0.0
    %1602 = vmatprep.subr.mxu0 0.0
    %1603 = vmatpush1.msra.mxu0 0.0
    %1604 = vmatprep.subr.mxu0 0.0
    %1605 = vmatpush1.msra.mxu0 0.0
    %1606 = vmatprep.subr.mxu0 0.0
    %1607 = vmatpush1.msra.mxu0 0.0
    %1608 = vmatprep.subr.mxu0 0.0
    %1609 = vmatpush1.msra.mxu0 %v1571
    %1610 = vmatprep.subr.mxu0 0.0
    %1611 = vmatpush1.msra.mxu0 %v1569
    %1612 = vmatprep.subr.mxu0 0.0
    %1613 = vmatpush2.msra.mxu0 0.0
    %1614 = vmatprep.subr.mxu0 0.0
    %1615 = vmatpush2.msra.mxu0 0.0
    %1616 = vmatprep.subr.mxu0 0.0
    %1617 = vmatpush2.msra.mxu0 0.0
    %1618 = vmatprep.subr.mxu0 0.0
    %1619 = vmatpush2.msra.mxu0 0.0
    %1620 = vmatprep.subr.mxu0 0.0
    %1621 = vmatpush2.msra.mxu0 0.0
    %1622 = vmatprep.subr.mxu0 0.0
    %1623 = vmatpush2.msra.mxu0 0.0
    %1624 = vmatprep.subr.mxu0 0.0
    %1625 = vmatpush2.msra.mxu0 0.0
    %1626 = vmatprep.subr.mxu0 0.0
    %1627 = vmatpush2.msra.mxu0 0.0
    %1628 = vmatprep.subr.mxu0 0.0
    %1629 = vmatpush2.msra.mxu0 0.0
    %1630 = vmatprep.subr.mxu0 0.0
    %1631 = vmatpush2.msra.mxu0 0.0
    %1632 = vmatprep.subr.mxu0 0.0
    %1633 = vmatpush2.msra.mxu0 0.0
    %1634 = vmatprep.subr.mxu0 0.0
    %1635 = vmatpush2.msra.mxu0 0.0
    %1636 = vmatprep.subr.mxu0 0.0
    %1637 = vmatpush2.msra.mxu0 0.0
    %1638 = vmatprep.subr.mxu0 0.0
    %1639 = vmatpush2.msra.mxu0 0.0
    %1640 = vmatprep.subr.mxu0 0.0
    %1641 = vmatpush2.msra.mxu0 0.0
    %1642 = vmatprep.subr.mxu0 0.0
    %1643 = vmatpush2.msra.mxu0 0.0
    %1644 = vmatprep.mubr.f32.mxu0 0.0
    %1645 = vmatmul.mubr.f32.gmra.mxu0 %v1575
    %v1646 = vpop.f32.mrf.mxu0
    %v1647 = vadd.f32 0.0, %v1646
    %v1648 = vpop.f32.mrf.mxu0
    %1649 = vmatprep.mubr.f32.mxu0 0.0
    %1650 = vmatmul.mubr.f32.gmra.mxu0 %v1578
    %v1651 = vpop.f32.mrf.mxu0
    %v1652 = vadd.f32 0.0, %v1651
    %v1653 = vpop.f32.mrf.mxu0
    %1654 = vdwg.mxu0
    %v1655 = vmul.f32 %v1647, %v1566
    %v1656 = vmul.f32 %v1652, %v1567
    %v1657 = vld [vmem:[#allocation5 + $0x8] sm:$0xff]
    %1658 = vrot.lane.b32.xlu0 %v1455, 120
    %v1659 = vpop.permute.xlu0 %1658
    %1660 = vrot.lane.b32.xlu0 %v1456, 120
    %v1661 = vpop.permute.xlu0 %1660
    %1662 = vrot.lane.b32.xlu0 %v1447, 88
    %v1663 = vpop.permute.xlu0 %1662
    %1664 = vrot.lane.b32.xlu0 %v1452, 88
    %v1665 = vpop.permute.xlu0 %1664
    %v1666 = vsel %vm172, %v1659, 0
    %v1668 = vsel %vm172, %v1661, 0
    %v1670 = vsel %vm172, %v1663, 0
    %v1672 = vsel %vm172, %v1665, 0
    %1674 = vmatprep.subr.mxu0 0.0
    %1675 = vmatpush1.xpose.msra.mxu0 0.0
    %1676 = vmatprep.subr.mxu0 0.0
    %1677 = vmatpush1.xpose.msra.mxu0 0.0
    %1678 = vmatprep.subr.mxu0 0.0
    %1679 = vmatpush1.xpose.msra.mxu0 0.0
    %1680 = vmatprep.subr.mxu0 0.0
    %1681 = vmatpush1.xpose.msra.mxu0 0.0
    %1682 = vmatprep.subr.mxu0 0.0
    %1683 = vmatpush1.xpose.msra.mxu0 0.0
    %1684 = vmatprep.subr.mxu0 0.0
    %1685 = vmatpush1.xpose.msra.mxu0 0.0
    %1686 = vmatprep.subr.mxu0 0.0
    %1687 = vmatpush1.xpose.msra.mxu0 0.0
    %1688 = vmatprep.subr.mxu0 0.0
    %1689 = vmatpush1.xpose.msra.mxu0 0.0
    %1690 = vmatprep.subr.mxu0 0.0
    %1691 = vmatpush1.xpose.msra.mxu0 0.0
    %1692 = vmatprep.subr.mxu0 0.0
    %1693 = vmatpush1.xpose.msra.mxu0 0.0
    %1694 = vmatprep.subr.mxu0 0.0
    %1695 = vmatpush1.xpose.msra.mxu0 0.0
    %1696 = vmatprep.subr.mxu0 0.0
    %1697 = vmatpush1.xpose.msra.mxu0 0.0
    %1698 = vmatprep.subr.mxu0 0.0
    %1699 = vmatpush1.xpose.msra.mxu0 0.0
    %1700 = vmatprep.subr.mxu0 0.0
    %1701 = vmatpush1.xpose.msra.mxu0 0.0
    %1702 = vmatprep.subr.mxu0 0.0
    %1703 = vmatpush1.xpose.msra.mxu0 %v1672
    %1704 = vmatprep.subr.mxu0 0.0
    %1705 = vmatpush1.xpose.msra.mxu0 %v1670
    %1706 = vmatprep.subr.mxu0 0.0
    %1707 = vmatpush2.xpose.msra.mxu0 0.0
    %1708 = vmatprep.subr.mxu0 0.0
    %1709 = vmatpush2.xpose.msra.mxu0 0.0
    %1710 = vmatprep.subr.mxu0 0.0
    %1711 = vmatpush2.xpose.msra.mxu0 0.0
    %1712 = vmatprep.subr.mxu0 0.0
    %1713 = vmatpush2.xpose.msra.mxu0 0.0
    %1714 = vmatprep.subr.mxu0 0.0
    %1715 = vmatpush2.xpose.msra.mxu0 0.0
    %1716 = vmatprep.subr.mxu0 0.0
    %1717 = vmatpush2.xpose.msra.mxu0 0.0
    %1718 = vmatprep.subr.mxu0 0.0
    %1719 = vmatpush2.xpose.msra.mxu0 0.0
    %1720 = vmatprep.subr.mxu0 0.0
    %1721 = vmatpush2.xpose.msra.mxu0 0.0
    %1722 = vmatprep.subr.mxu0 0.0
    %1723 = vmatpush2.xpose.msra.mxu0 0.0
    %1724 = vmatprep.subr.mxu0 0.0
    %1725 = vmatpush2.xpose.msra.mxu0 0.0
    %1726 = vmatprep.subr.mxu0 0.0
    %1727 = vmatpush2.xpose.msra.mxu0 0.0
    %1728 = vmatprep.subr.mxu0 0.0
    %1729 = vmatpush2.xpose.msra.mxu0 0.0
    %1730 = vmatprep.subr.mxu0 0.0
    %1731 = vmatpush2.xpose.msra.mxu0 0.0
    %1732 = vmatprep.subr.mxu0 0.0
    %1733 = vmatpush2.xpose.msra.mxu0 0.0
    %1734 = vmatprep.subr.mxu0 0.0
    %1735 = vmatpush2.xpose.msra.mxu0 0.0
    %1736 = vmatprep.subr.mxu0 0.0
    %1737 = vmatpush2.xpose.msra.mxu0 0.0
    %1738 = vmatprep.mubr.f32.mxu0 0.0
    %1739 = vmatmul.mubr.f32.gmra.mxu0 %v1666
    %v1740 = vpop.f32.mrf.mxu0
    %v1741 = vadd.f32 %v69, %v1740
    %v1742 = vpop.f32.mrf.mxu0
    %1743 = vmatprep.mubr.f32.mxu0 0.0
    %1744 = vmatmul.mubr.f32.gmra.mxu0 %v1668
    %v1745 = vpop.f32.mrf.mxu0
    %v1746 = vadd.f32 %v70, %v1745
    %v1747 = vpop.f32.mrf.mxu0
    %1748 = vdwg.mxu0
    %v1749 = vsel %vm258, %v1741, -inf
    %1750 = vmax.xlane.f32.xlu0 %v1749
    %v1751 = vpop.xlane.xlu0 %1750
    %v1752 = vsel %vm258, %v1746, -inf
    %1753 = vmax.xlane.f32.xlu0 %v1752
    %v1754 = vpop.xlane.xlu0 %1753
    %v1755 = vsub.f32 %v1741, %v1751
    %v1756 = vsub.f32 %v1746, %v1754
    %v1757 = vmul.f32 %v1755, 1.442695
    %v1758 = vpow.pop %v1757
    %v1759 = vmul.f32 %v1756, 1.442695
    %v1760 = vpow.pop %v1759
    %v1761 = vsel %vm258, %v1758, 0.0
    %1762 = vadd.xlane.f32.xlu0 %v1761
    %v1763 = vpop.xlane.xlu0 %1762
    %v1764 = vsel %vm258, %v1760, 0.0
    %1765 = vadd.xlane.f32.xlu0 %v1764
    %v1766 = vpop.xlane.xlu0 %1765
    %v1767 = vrcp.pop %v1763
    %v1768 = vrcp.pop %v1766
    %1769 = vrot.lane.b32.xlu0 %v1447, 56
    %v1770 = vpop.permute.xlu0 %1769
    %1771 = vrot.lane.b32.xlu0 %v1452, 56
    %v1772 = vpop.permute.xlu0 %1771
    %v1776 = vsel %vm258, %v1758, 0
    %v1779 = vsel %vm258, %v1760, 0
    %1781 = vmatprep.subr.mxu0 0.0
    %1782 = vmatpush1.msra.mxu0 0.0
    %1783 = vmatprep.subr.mxu0 0.0
    %1784 = vmatpush1.msra.mxu0 0.0
    %1785 = vmatprep.subr.mxu0 0.0
    %1786 = vmatpush1.msra.mxu0 0.0
    %1787 = vmatprep.subr.mxu0 0.0
    %1788 = vmatpush1.msra.mxu0 0.0
    %1789 = vmatprep.subr.mxu0 0.0
    %1790 = vmatpush1.msra.mxu0 0.0
    %1791 = vmatprep.subr.mxu0 0.0
    %1792 = vmatpush1.msra.mxu0 0.0
    %1793 = vmatprep.subr.mxu0 0.0
    %1794 = vmatpush1.msra.mxu0 0.0
    %1795 = vmatprep.subr.mxu0 0.0
    %1796 = vmatpush1.msra.mxu0 0.0
    %1797 = vmatprep.subr.mxu0 0.0
    %1798 = vmatpush1.msra.mxu0 0.0
    %1799 = vmatprep.subr.mxu0 0.0
    %1800 = vmatpush1.msra.mxu0 0.0
    %1801 = vmatprep.subr.mxu0 0.0
    %1802 = vmatpush1.msra.mxu0 0.0
    %1803 = vmatprep.subr.mxu0 0.0
    %1804 = vmatpush1.msra.mxu0 0.0
    %1805 = vmatprep.subr.mxu0 0.0
    %1806 = vmatpush1.msra.mxu0 0.0
    %1807 = vmatprep.subr.mxu0 0.0
    %1808 = vmatpush1.msra.mxu0 0.0
    %1809 = vmatprep.subr.mxu0 0.0
    %1810 = vmatpush1.msra.mxu0 %v1772
    %1811 = vmatprep.subr.mxu0 0.0
    %1812 = vmatpush1.msra.mxu0 %v1770
    %1813 = vmatprep.subr.mxu0 0.0
    %1814 = vmatpush2.msra.mxu0 0.0
    %1815 = vmatprep.subr.mxu0 0.0
    %1816 = vmatpush2.msra.mxu0 0.0
    %1817 = vmatprep.subr.mxu0 0.0
    %1818 = vmatpush2.msra.mxu0 0.0
    %1819 = vmatprep.subr.mxu0 0.0
    %1820 = vmatpush2.msra.mxu0 0.0
    %1821 = vmatprep.subr.mxu0 0.0
    %1822 = vmatpush2.msra.mxu0 0.0
    %1823 = vmatprep.subr.mxu0 0.0
    %1824 = vmatpush2.msra.mxu0 0.0
    %1825 = vmatprep.subr.mxu0 0.0
    %1826 = vmatpush2.msra.mxu0 0.0
    %1827 = vmatprep.subr.mxu0 0.0
    %1828 = vmatpush2.msra.mxu0 0.0
    %1829 = vmatprep.subr.mxu0 0.0
    %1830 = vmatpush2.msra.mxu0 0.0
    %1831 = vmatprep.subr.mxu0 0.0
    %1832 = vmatpush2.msra.mxu0 0.0
    %1833 = vmatprep.subr.mxu0 0.0
    %1834 = vmatpush2.msra.mxu0 0.0
    %1835 = vmatprep.subr.mxu0 0.0
    %1836 = vmatpush2.msra.mxu0 0.0
    %1837 = vmatprep.subr.mxu0 0.0
    %1838 = vmatpush2.msra.mxu0 0.0
    %1839 = vmatprep.subr.mxu0 0.0
    %1840 = vmatpush2.msra.mxu0 0.0
    %1841 = vmatprep.subr.mxu0 0.0
    %1842 = vmatpush2.msra.mxu0 0.0
    %1843 = vmatprep.subr.mxu0 0.0
    %1844 = vmatpush2.msra.mxu0 0.0
    %1845 = vmatprep.mubr.f32.mxu0 0.0
    %1846 = vmatmul.mubr.f32.gmra.mxu0 %v1776
    %v1847 = vpop.f32.mrf.mxu0
    %v1848 = vadd.f32 0.0, %v1847
    %v1849 = vpop.f32.mrf.mxu0
    %1850 = vmatprep.mubr.f32.mxu0 0.0
    %1851 = vmatmul.mubr.f32.gmra.mxu0 %v1779
    %v1852 = vpop.f32.mrf.mxu0
    %v1853 = vadd.f32 0.0, %v1852
    %v1854 = vpop.f32.mrf.mxu0
    %1855 = vdwg.mxu0
    %v1856 = vmul.f32 %v1848, %v1767
    %v1857 = vmul.f32 %v1853, %v1768
    %v1858 = vld [vmem:[#allocation5 + $0x20] sm:$0xff]
    %1860 = vrot.lane.b32.xlu0 %v1858, 32
    %v1861 = vpop.permute.xlu0 %1860
    %v1864 = vsel %vm172, %v1856, 0
    %v1867 = vsel %vm172, %v1857, 0
    %1869 = vmatprep.subr.mxu0 0.0
    %1870 = vmatpush1.msra.mxu0 0.0
    %1871 = vmatprep.subr.mxu0 0.0
    %1872 = vmatpush1.msra.mxu0 0.0
    %1873 = vmatprep.subr.mxu0 0.0
    %1874 = vmatpush1.msra.mxu0 0.0
    %1875 = vmatprep.subr.mxu0 0.0
    %1876 = vmatpush1.msra.mxu0 0.0
    %1877 = vmatprep.subr.mxu0 0.0
    %1878 = vmatpush1.msra.mxu0 0.0
    %1879 = vmatprep.subr.mxu0 0.0
    %1880 = vmatpush1.msra.mxu0 0.0
    %1881 = vmatprep.subr.mxu0 0.0
    %1882 = vmatpush1.msra.mxu0 0.0
    %1883 = vmatprep.subr.mxu0 0.0
    %1884 = vmatpush1.msra.mxu0 0.0
    %1885 = vmatprep.subr.mxu0 0.0
    %1886 = vmatpush1.msra.mxu0 0.0
    %1887 = vmatprep.subr.mxu0 0.0
    %1888 = vmatpush1.msra.mxu0 0.0
    %1889 = vmatprep.subr.mxu0 0.0
    %1890 = vmatpush1.msra.mxu0 0.0
    %1891 = vmatprep.subr.mxu0 0.0
    %1892 = vmatpush1.msra.mxu0 0.0
    %1893 = vmatprep.subr.mxu0 0.0
    %1894 = vmatpush1.msra.mxu0 0.0
    %1895 = vmatprep.subr.mxu0 0.0
    %1896 = vmatpush1.msra.mxu0 0.0
    %1897 = vmatprep.subr.mxu0 0.0
    %1898 = vmatpush1.msra.mxu0 0.0
    %1899 = vmatprep.subr.mxu0 0.0
    %1900 = vmatpush1.msra.mxu0 %v1861
    %1901 = vmatprep.subr.mxu0 0.0
    %1902 = vmatpush2.msra.mxu0 0.0
    %1903 = vmatprep.subr.mxu0 0.0
    %1904 = vmatpush2.msra.mxu0 0.0
    %1905 = vmatprep.subr.mxu0 0.0
    %1906 = vmatpush2.msra.mxu0 0.0
    %1907 = vmatprep.subr.mxu0 0.0
    %1908 = vmatpush2.msra.mxu0 0.0
    %1909 = vmatprep.subr.mxu0 0.0
    %1910 = vmatpush2.msra.mxu0 0.0
    %1911 = vmatprep.subr.mxu0 0.0
    %1912 = vmatpush2.msra.mxu0 0.0
    %1913 = vmatprep.subr.mxu0 0.0
    %1914 = vmatpush2.msra.mxu0 0.0
    %1915 = vmatprep.subr.mxu0 0.0
    %1916 = vmatpush2.msra.mxu0 0.0
    %1917 = vmatprep.subr.mxu0 0.0
    %1918 = vmatpush2.msra.mxu0 0.0
    %1919 = vmatprep.subr.mxu0 0.0
    %1920 = vmatpush2.msra.mxu0 0.0
    %1921 = vmatprep.subr.mxu0 0.0
    %1922 = vmatpush2.msra.mxu0 0.0
    %1923 = vmatprep.subr.mxu0 0.0
    %1924 = vmatpush2.msra.mxu0 0.0
    %1925 = vmatprep.subr.mxu0 0.0
    %1926 = vmatpush2.msra.mxu0 0.0
    %1927 = vmatprep.subr.mxu0 0.0
    %1928 = vmatpush2.msra.mxu0 0.0
    %1929 = vmatprep.subr.mxu0 0.0
    %1930 = vmatpush2.msra.mxu0 0.0
    %1931 = vmatprep.subr.mxu0 0.0
    %1932 = vmatpush2.msra.mxu0 0.0
    %1933 = vmatprep.mubr.f32.mxu0 0.0
    %1934 = vmatmul.mubr.f32.gmra.mxu0 %v1864
    %v1935 = vpop.f32.mrf.mxu0
    %v1936 = vadd.f32 0.0, %v1935
    %v1937 = vpop.f32.mrf.mxu0
    %1938 = vmatprep.mubr.f32.mxu0 0.0
    %1939 = vmatmul.mubr.f32.gmra.mxu0 %v1867
    %v1940 = vpop.f32.mrf.mxu0
    %v1941 = vadd.f32 0.0, %v1940
    %v1942 = vpop.f32.mrf.mxu0
    %1943 = vdwg.mxu0
    %1945 = vrot.lane.b32.xlu0 %v1657, 32
    %v1946 = vpop.permute.xlu0 %1945
    %v1949 = vsel %vm172, %v1655, 0
    %v1952 = vsel %vm172, %v1656, 0
    %1954 = vmatprep.subr.mxu0 0.0
    %1955 = vmatpush1.msra.mxu0 0.0
    %1956 = vmatprep.subr.mxu0 0.0
    %1957 = vmatpush1.msra.mxu0 0.0
    %1958 = vmatprep.subr.mxu0 0.0
    %1959 = vmatpush1.msra.mxu0 0.0
    %1960 = vmatprep.subr.mxu0 0.0
    %1961 = vmatpush1.msra.mxu0 0.0
    %1962 = vmatprep.subr.mxu0 0.0
    %1963 = vmatpush1.msra.mxu0 0.0
    %1964 = vmatprep.subr.mxu0 0.0
    %1965 = vmatpush1.msra.mxu0 0.0
    %1966 = vmatprep.subr.mxu0 0.0
    %1967 = vmatpush1.msra.mxu0 0.0
    %1968 = vmatprep.subr.mxu0 0.0
    %1969 = vmatpush1.msra.mxu0 0.0
    %1970 = vmatprep.subr.mxu0 0.0
    %1971 = vmatpush1.msra.mxu0 0.0
    %1972 = vmatprep.subr.mxu0 0.0
    %1973 = vmatpush1.msra.mxu0 0.0
    %1974 = vmatprep.subr.mxu0 0.0
    %1975 = vmatpush1.msra.mxu0 0.0
    %1976 = vmatprep.subr.mxu0 0.0
    %1977 = vmatpush1.msra.mxu0 0.0
    %1978 = vmatprep.subr.mxu0 0.0
    %1979 = vmatpush1.msra.mxu0 0.0
    %1980 = vmatprep.subr.mxu0 0.0
    %1981 = vmatpush1.msra.mxu0 0.0
    %1982 = vmatprep.subr.mxu0 0.0
    %1983 = vmatpush1.msra.mxu0 0.0
    %1984 = vmatprep.subr.mxu0 0.0
    %1985 = vmatpush1.msra.mxu0 %v1946
    %1986 = vmatprep.subr.mxu0 0.0
    %1987 = vmatpush2.msra.mxu0 0.0
    %1988 = vmatprep.subr.mxu0 0.0
    %1989 = vmatpush2.msra.mxu0 0.0
    %1990 = vmatprep.subr.mxu0 0.0
    %1991 = vmatpush2.msra.mxu0 0.0
    %1992 = vmatprep.subr.mxu0 0.0
    %1993 = vmatpush2.msra.mxu0 0.0
    %1994 = vmatprep.subr.mxu0 0.0
    %1995 = vmatpush2.msra.mxu0 0.0
    %1996 = vmatprep.subr.mxu0 0.0
    %1997 = vmatpush2.msra.mxu0 0.0
    %1998 = vmatprep.subr.mxu0 0.0
    %1999 = vmatpush2.msra.mxu0 0.0
    %2000 = vmatprep.subr.mxu0 0.0
    %2001 = vmatpush2.msra.mxu0 0.0
    %2002 = vmatprep.subr.mxu0 0.0
    %2003 = vmatpush2.msra.mxu0 0.0
    %2004 = vmatprep.subr.mxu0 0.0
    %2005 = vmatpush2.msra.mxu0 0.0
    %2006 = vmatprep.subr.mxu0 0.0
    %2007 = vmatpush2.msra.mxu0 0.0
    %2008 = vmatprep.subr.mxu0 0.0
    %2009 = vmatpush2.msra.mxu0 0.0
    %2010 = vmatprep.subr.mxu0 0.0
    %2011 = vmatpush2.msra.mxu0 0.0
    %2012 = vmatprep.subr.mxu0 0.0
    %2013 = vmatpush2.msra.mxu0 0.0
    %2014 = vmatprep.subr.mxu0 0.0
    %2015 = vmatpush2.msra.mxu0 0.0
    %2016 = vmatprep.subr.mxu0 0.0
    %2017 = vmatpush2.msra.mxu0 0.0
    %2018 = vmatprep.mubr.f32.mxu0 0.0
    %2019 = vmatmul.mubr.f32.gmra.mxu0 %v1949
    %v2020 = vpop.f32.mrf.mxu0
    %v2021 = vadd.f32 %v1936, %v2020
    %v2022 = vpop.f32.mrf.mxu0
    %2023 = vmatprep.mubr.f32.mxu0 0.0
    %2024 = vmatmul.mubr.f32.gmra.mxu0 %v1952
    %v2025 = vpop.f32.mrf.mxu0
    %v2026 = vadd.f32 %v1941, %v2025
    %v2027 = vpop.f32.mrf.mxu0
    %2028 = vdwg.mxu0
    %2029 = vrot.lane.b32.xlu0 %v1455, 112
    %v2030 = vpop.permute.xlu0 %2029
    %2031 = vrot.lane.b32.xlu0 %v1456, 112
    %v2032 = vpop.permute.xlu0 %2031
    %2033 = vrot.lane.b32.xlu0 %v1447, 80
    %v2034 = vpop.permute.xlu0 %2033
    %2035 = vrot.lane.b32.xlu0 %v1452, 80
    %v2036 = vpop.permute.xlu0 %2035
    %v2037 = vsel %vm172, %v2030, 0
    %v2039 = vsel %vm172, %v2032, 0
    %v2041 = vsel %vm172, %v2034, 0
    %v2043 = vsel %vm172, %v2036, 0
    %2045 = vmatprep.subr.mxu0 0.0
    %2046 = vmatpush1.xpose.msra.mxu0 0.0
    %2047 = vmatprep.subr.mxu0 0.0
    %2048 = vmatpush1.xpose.msra.mxu0 0.0
    %2049 = vmatprep.subr.mxu0 0.0
    %2050 = vmatpush1.xpose.msra.mxu0 0.0
    %2051 = vmatprep.subr.mxu0 0.0
    %2052 = vmatpush1.xpose.msra.mxu0 0.0
    %2053 = vmatprep.subr.mxu0 0.0
    %2054 = vmatpush1.xpose.msra.mxu0 0.0
    %2055 = vmatprep.subr.mxu0 0.0
    %2056 = vmatpush1.xpose.msra.mxu0 0.0
    %2057 = vmatprep.subr.mxu0 0.0
    %2058 = vmatpush1.xpose.msra.mxu0 0.0
    %2059 = vmatprep.subr.mxu0 0.0
    %2060 = vmatpush1.xpose.msra.mxu0 0.0
    %2061 = vmatprep.subr.mxu0 0.0
    %2062 = vmatpush1.xpose.msra.mxu0 0.0
    %2063 = vmatprep.subr.mxu0 0.0
    %2064 = vmatpush1.xpose.msra.mxu0 0.0
    %2065 = vmatprep.subr.mxu0 0.0
    %2066 = vmatpush1.xpose.msra.mxu0 0.0
    %2067 = vmatprep.subr.mxu0 0.0
    %2068 = vmatpush1.xpose.msra.mxu0 0.0
    %2069 = vmatprep.subr.mxu0 0.0
    %2070 = vmatpush1.xpose.msra.mxu0 0.0
    %2071 = vmatprep.subr.mxu0 0.0
    %2072 = vmatpush1.xpose.msra.mxu0 0.0
    %2073 = vmatprep.subr.mxu0 0.0
    %2074 = vmatpush1.xpose.msra.mxu0 %v2043
    %2075 = vmatprep.subr.mxu0 0.0
    %2076 = vmatpush1.xpose.msra.mxu0 %v2041
    %2077 = vmatprep.subr.mxu0 0.0
    %2078 = vmatpush2.xpose.msra.mxu0 0.0
    %2079 = vmatprep.subr.mxu0 0.0
    %2080 = vmatpush2.xpose.msra.mxu0 0.0
    %2081 = vmatprep.subr.mxu0 0.0
    %2082 = vmatpush2.xpose.msra.mxu0 0.0
    %2083 = vmatprep.subr.mxu0 0.0
    %2084 = vmatpush2.xpose.msra.mxu0 0.0
    %2085 = vmatprep.subr.mxu0 0.0
    %2086 = vmatpush2.xpose.msra.mxu0 0.0
    %2087 = vmatprep.subr.mxu0 0.0
    %2088 = vmatpush2.xpose.msra.mxu0 0.0
    %2089 = vmatprep.subr.mxu0 0.0
    %2090 = vmatpush2.xpose.msra.mxu0 0.0
    %2091 = vmatprep.subr.mxu0 0.0
    %2092 = vmatpush2.xpose.msra.mxu0 0.0
    %2093 = vmatprep.subr.mxu0 0.0
    %2094 = vmatpush2.xpose.msra.mxu0 0.0
    %2095 = vmatprep.subr.mxu0 0.0
    %2096 = vmatpush2.xpose.msra.mxu0 0.0
    %2097 = vmatprep.subr.mxu0 0.0
    %2098 = vmatpush2.xpose.msra.mxu0 0.0
    %2099 = vmatprep.subr.mxu0 0.0
    %2100 = vmatpush2.xpose.msra.mxu0 0.0
    %2101 = vmatprep.subr.mxu0 0.0
    %2102 = vmatpush2.xpose.msra.mxu0 0.0
    %2103 = vmatprep.subr.mxu0 0.0
    %2104 = vmatpush2.xpose.msra.mxu0 0.0
    %2105 = vmatprep.subr.mxu0 0.0
    %2106 = vmatpush2.xpose.msra.mxu0 0.0
    %2107 = vmatprep.subr.mxu0 0.0
    %2108 = vmatpush2.xpose.msra.mxu0 0.0
    %2109 = vmatprep.mubr.f32.mxu0 0.0
    %2110 = vmatmul.mubr.f32.gmra.mxu0 %v2037
    %v2111 = vpop.f32.mrf.mxu0
    %v2112 = vadd.f32 %v69, %v2111
    %v2113 = vpop.f32.mrf.mxu0
    %2114 = vmatprep.mubr.f32.mxu0 0.0
    %2115 = vmatmul.mubr.f32.gmra.mxu0 %v2039
    %v2116 = vpop.f32.mrf.mxu0
    %v2117 = vadd.f32 %v70, %v2116
    %v2118 = vpop.f32.mrf.mxu0
    %2119 = vdwg.mxu0
    %v2120 = vsel %vm258, %v2112, -inf
    %2121 = vmax.xlane.f32.xlu0 %v2120
    %v2122 = vpop.xlane.xlu0 %2121
    %v2123 = vsel %vm258, %v2117, -inf
    %2124 = vmax.xlane.f32.xlu0 %v2123
    %v2125 = vpop.xlane.xlu0 %2124
    %v2126 = vsub.f32 %v2112, %v2122
    %v2127 = vsub.f32 %v2117, %v2125
    %v2128 = vmul.f32 %v2126, 1.442695
    %v2129 = vpow.pop %v2128
    %v2130 = vmul.f32 %v2127, 1.442695
    %v2131 = vpow.pop %v2130
    %v2132 = vsel %vm258, %v2129, 0.0
    %2133 = vadd.xlane.f32.xlu0 %v2132
    %v2134 = vpop.xlane.xlu0 %2133
    %v2135 = vsel %vm258, %v2131, 0.0
    %2136 = vadd.xlane.f32.xlu0 %v2135
    %v2137 = vpop.xlane.xlu0 %2136
    %v2138 = vrcp.pop %v2134
    %v2139 = vrcp.pop %v2137
    %2140 = vrot.lane.b32.xlu0 %v1447, 48
    %v2141 = vpop.permute.xlu0 %2140
    %2142 = vrot.lane.b32.xlu0 %v1452, 48
    %v2143 = vpop.permute.xlu0 %2142
    %v2147 = vsel %vm258, %v2129, 0
    %v2150 = vsel %vm258, %v2131, 0
    %2152 = vmatprep.subr.mxu0 0.0
    %2153 = vmatpush1.msra.mxu0 0.0
    %2154 = vmatprep.subr.mxu0 0.0
    %2155 = vmatpush1.msra.mxu0 0.0
    %2156 = vmatprep.subr.mxu0 0.0
    %2157 = vmatpush1.msra.mxu0 0.0
    %2158 = vmatprep.subr.mxu0 0.0
    %2159 = vmatpush1.msra.mxu0 0.0
    %2160 = vmatprep.subr.mxu0 0.0
    %2161 = vmatpush1.msra.mxu0 0.0
    %2162 = vmatprep.subr.mxu0 0.0
    %2163 = vmatpush1.msra.mxu0 0.0
    %2164 = vmatprep.subr.mxu0 0.0
    %2165 = vmatpush1.msra.mxu0 0.0
    %2166 = vmatprep.subr.mxu0 0.0
    %2167 = vmatpush1.msra.mxu0 0.0
    %2168 = vmatprep.subr.mxu0 0.0
    %2169 = vmatpush1.msra.mxu0 0.0
    %2170 = vmatprep.subr.mxu0 0.0
    %2171 = vmatpush1.msra.mxu0 0.0
    %2172 = vmatprep.subr.mxu0 0.0
    %2173 = vmatpush1.msra.mxu0 0.0
    %2174 = vmatprep.subr.mxu0 0.0
    %2175 = vmatpush1.msra.mxu0 0.0
    %2176 = vmatprep.subr.mxu0 0.0
    %2177 = vmatpush1.msra.mxu0 0.0
    %2178 = vmatprep.subr.mxu0 0.0
    %2179 = vmatpush1.msra.mxu0 0.0
    %2180 = vmatprep.subr.mxu0 0.0
    %2181 = vmatpush1.msra.mxu0 %v2143
    %2182 = vmatprep.subr.mxu0 0.0
    %2183 = vmatpush1.msra.mxu0 %v2141
    %2184 = vmatprep.subr.mxu0 0.0
    %2185 = vmatpush2.msra.mxu0 0.0
    %2186 = vmatprep.subr.mxu0 0.0
    %2187 = vmatpush2.msra.mxu0 0.0
    %2188 = vmatprep.subr.mxu0 0.0
    %2189 = vmatpush2.msra.mxu0 0.0
    %2190 = vmatprep.subr.mxu0 0.0
    %2191 = vmatpush2.msra.mxu0 0.0
    %2192 = vmatprep.subr.mxu0 0.0
    %2193 = vmatpush2.msra.mxu0 0.0
    %2194 = vmatprep.subr.mxu0 0.0
    %2195 = vmatpush2.msra.mxu0 0.0
    %2196 = vmatprep.subr.mxu0 0.0
    %2197 = vmatpush2.msra.mxu0 0.0
    %2198 = vmatprep.subr.mxu0 0.0
    %2199 = vmatpush2.msra.mxu0 0.0
    %2200 = vmatprep.subr.mxu0 0.0
    %2201 = vmatpush2.msra.mxu0 0.0
    %2202 = vmatprep.subr.mxu0 0.0
    %2203 = vmatpush2.msra.mxu0 0.0
    %2204 = vmatprep.subr.mxu0 0.0
    %2205 = vmatpush2.msra.mxu0 0.0
    %2206 = vmatprep.subr.mxu0 0.0
    %2207 = vmatpush2.msra.mxu0 0.0
    %2208 = vmatprep.subr.mxu0 0.0
    %2209 = vmatpush2.msra.mxu0 0.0
    %2210 = vmatprep.subr.mxu0 0.0
    %2211 = vmatpush2.msra.mxu0 0.0
    %2212 = vmatprep.subr.mxu0 0.0
    %2213 = vmatpush2.msra.mxu0 0.0
    %2214 = vmatprep.subr.mxu0 0.0
    %2215 = vmatpush2.msra.mxu0 0.0
    %2216 = vmatprep.mubr.f32.mxu0 0.0
    %2217 = vmatmul.mubr.f32.gmra.mxu0 %v2147
    %v2218 = vpop.f32.mrf.mxu0
    %v2219 = vadd.f32 0.0, %v2218
    %v2220 = vpop.f32.mrf.mxu0
    %2221 = vmatprep.mubr.f32.mxu0 0.0
    %2222 = vmatmul.mubr.f32.gmra.mxu0 %v2150
    %v2223 = vpop.f32.mrf.mxu0
    %v2224 = vadd.f32 0.0, %v2223
    %v2225 = vpop.f32.mrf.mxu0
    %2226 = vdwg.mxu0
    %v2227 = vmul.f32 %v2219, %v2138
    %v2228 = vmul.f32 %v2224, %v2139
    %v2229 = vld [vmem:[#allocation5 + $0x38] sm:$0xff]
    %2231 = vrot.lane.b32.xlu0 %v2229, 32
    %v2232 = vpop.permute.xlu0 %2231
    %v2235 = vsel %vm172, %v2227, 0
    %v2238 = vsel %vm172, %v2228, 0
    %2240 = vmatprep.subr.mxu0 0.0
    %2241 = vmatpush1.msra.mxu0 0.0
    %2242 = vmatprep.subr.mxu0 0.0
    %2243 = vmatpush1.msra.mxu0 0.0
    %2244 = vmatprep.subr.mxu0 0.0
    %2245 = vmatpush1.msra.mxu0 0.0
    %2246 = vmatprep.subr.mxu0 0.0
    %2247 = vmatpush1.msra.mxu0 0.0
    %2248 = vmatprep.subr.mxu0 0.0
    %2249 = vmatpush1.msra.mxu0 0.0
    %2250 = vmatprep.subr.mxu0 0.0
    %2251 = vmatpush1.msra.mxu0 0.0
    %2252 = vmatprep.subr.mxu0 0.0
    %2253 = vmatpush1.msra.mxu0 0.0
    %2254 = vmatprep.subr.mxu0 0.0
    %2255 = vmatpush1.msra.mxu0 0.0
    %2256 = vmatprep.subr.mxu0 0.0
    %2257 = vmatpush1.msra.mxu0 0.0
    %2258 = vmatprep.subr.mxu0 0.0
    %2259 = vmatpush1.msra.mxu0 0.0
    %2260 = vmatprep.subr.mxu0 0.0
    %2261 = vmatpush1.msra.mxu0 0.0
    %2262 = vmatprep.subr.mxu0 0.0
    %2263 = vmatpush1.msra.mxu0 0.0
    %2264 = vmatprep.subr.mxu0 0.0
    %2265 = vmatpush1.msra.mxu0 0.0
    %2266 = vmatprep.subr.mxu0 0.0
    %2267 = vmatpush1.msra.mxu0 0.0
    %2268 = vmatprep.subr.mxu0 0.0
    %2269 = vmatpush1.msra.mxu0 0.0
    %2270 = vmatprep.subr.mxu0 0.0
    %2271 = vmatpush1.msra.mxu0 %v2232
    %2272 = vmatprep.subr.mxu0 0.0
    %2273 = vmatpush2.msra.mxu0 0.0
    %2274 = vmatprep.subr.mxu0 0.0
    %2275 = vmatpush2.msra.mxu0 0.0
    %2276 = vmatprep.subr.mxu0 0.0
    %2277 = vmatpush2.msra.mxu0 0.0
    %2278 = vmatprep.subr.mxu0 0.0
    %2279 = vmatpush2.msra.mxu0 0.0
    %2280 = vmatprep.subr.mxu0 0.0
    %2281 = vmatpush2.msra.mxu0 0.0
    %2282 = vmatprep.subr.mxu0 0.0
    %2283 = vmatpush2.msra.mxu0 0.0
    %2284 = vmatprep.subr.mxu0 0.0
    %2285 = vmatpush2.msra.mxu0 0.0
    %2286 = vmatprep.subr.mxu0 0.0
    %2287 = vmatpush2.msra.mxu0 0.0
    %2288 = vmatprep.subr.mxu0 0.0
    %2289 = vmatpush2.msra.mxu0 0.0
    %2290 = vmatprep.subr.mxu0 0.0
    %2291 = vmatpush2.msra.mxu0 0.0
    %2292 = vmatprep.subr.mxu0 0.0
    %2293 = vmatpush2.msra.mxu0 0.0
    %2294 = vmatprep.subr.mxu0 0.0
    %2295 = vmatpush2.msra.mxu0 0.0
    %2296 = vmatprep.subr.mxu0 0.0
    %2297 = vmatpush2.msra.mxu0 0.0
    %2298 = vmatprep.subr.mxu0 0.0
    %2299 = vmatpush2.msra.mxu0 0.0
    %2300 = vmatprep.subr.mxu0 0.0
    %2301 = vmatpush2.msra.mxu0 0.0
    %2302 = vmatprep.subr.mxu0 0.0
    %2303 = vmatpush2.msra.mxu0 0.0
    %2304 = vmatprep.mubr.f32.mxu0 0.0
    %2305 = vmatmul.mubr.f32.gmra.mxu0 %v2235
    %v2306 = vpop.f32.mrf.mxu0
    %v2307 = vadd.f32 0.0, %v2306
    %v2308 = vpop.f32.mrf.mxu0
    %2309 = vmatprep.mubr.f32.mxu0 0.0
    %2310 = vmatmul.mubr.f32.gmra.mxu0 %v2238
    %v2311 = vpop.f32.mrf.mxu0
    %v2312 = vadd.f32 0.0, %v2311
    %v2313 = vpop.f32.mrf.mxu0
    %2314 = vdwg.mxu0
    %v2315 = vadd.f32 %v2021, %v2307
    %v2316 = vadd.f32 %v2026, %v2312
    %2317 = vrot.lane.b32.xlu0 %v1455, 104
    %v2318 = vpop.permute.xlu0 %2317
    %2319 = vrot.lane.b32.xlu0 %v1456, 104
    %v2320 = vpop.permute.xlu0 %2319
    %2321 = vrot.lane.b32.xlu0 %v1447, 72
    %v2322 = vpop.permute.xlu0 %2321
    %2323 = vrot.lane.b32.xlu0 %v1452, 72
    %v2324 = vpop.permute.xlu0 %2323
    %v2325 = vsel %vm172, %v2318, 0
    %v2327 = vsel %vm172, %v2320, 0
    %v2329 = vsel %vm172, %v2322, 0
    %v2331 = vsel %vm172, %v2324, 0
    %2333 = vmatprep.subr.mxu0 0.0
    %2334 = vmatpush1.xpose.msra.mxu0 0.0
    %2335 = vmatprep.subr.mxu0 0.0
    %2336 = vmatpush1.xpose.msra.mxu0 0.0
    %2337 = vmatprep.subr.mxu0 0.0
    %2338 = vmatpush1.xpose.msra.mxu0 0.0
    %2339 = vmatprep.subr.mxu0 0.0
    %2340 = vmatpush1.xpose.msra.mxu0 0.0
    %2341 = vmatprep.subr.mxu0 0.0
    %2342 = vmatpush1.xpose.msra.mxu0 0.0
    %2343 = vmatprep.subr.mxu0 0.0
    %2344 = vmatpush1.xpose.msra.mxu0 0.0
    %2345 = vmatprep.subr.mxu0 0.0
    %2346 = vmatpush1.xpose.msra.mxu0 0.0
    %2347 = vmatprep.subr.mxu0 0.0
    %2348 = vmatpush1.xpose.msra.mxu0 0.0
    %2349 = vmatprep.subr.mxu0 0.0
    %2350 = vmatpush1.xpose.msra.mxu0 0.0
    %2351 = vmatprep.subr.mxu0 0.0
    %2352 = vmatpush1.xpose.msra.mxu0 0.0
    %2353 = vmatprep.subr.mxu0 0.0
    %2354 = vmatpush1.xpose.msra.mxu0 0.0
    %2355 = vmatprep.subr.mxu0 0.0
    %2356 = vmatpush1.xpose.msra.mxu0 0.0
    %2357 = vmatprep.subr.mxu0 0.0
    %2358 = vmatpush1.xpose.msra.mxu0 0.0
    %2359 = vmatprep.subr.mxu0 0.0
    %2360 = vmatpush1.xpose.msra.mxu0 0.0
    %2361 = vmatprep.subr.mxu0 0.0
    %2362 = vmatpush1.xpose.msra.mxu0 %v2331
    %2363 = vmatprep.subr.mxu0 0.0
    %2364 = vmatpush1.xpose.msra.mxu0 %v2329
    %2365 = vmatprep.subr.mxu0 0.0
    %2366 = vmatpush2.xpose.msra.mxu0 0.0
    %2367 = vmatprep.subr.mxu0 0.0
    %2368 = vmatpush2.xpose.msra.mxu0 0.0
    %2369 = vmatprep.subr.mxu0 0.0
    %2370 = vmatpush2.xpose.msra.mxu0 0.0
    %2371 = vmatprep.subr.mxu0 0.0
    %2372 = vmatpush2.xpose.msra.mxu0 0.0
    %2373 = vmatprep.subr.mxu0 0.0
    %2374 = vmatpush2.xpose.msra.mxu0 0.0
    %2375 = vmatprep.subr.mxu0 0.0
    %2376 = vmatpush2.xpose.msra.mxu0 0.0
    %2377 = vmatprep.subr.mxu0 0.0
    %2378 = vmatpush2.xpose.msra.mxu0 0.0
    %2379 = vmatprep.subr.mxu0 0.0
    %2380 = vmatpush2.xpose.msra.mxu0 0.0
    %2381 = vmatprep.subr.mxu0 0.0
    %2382 = vmatpush2.xpose.msra.mxu0 0.0
    %2383 = vmatprep.subr.mxu0 0.0
    %2384 = vmatpush2.xpose.msra.mxu0 0.0
    %2385 = vmatprep.subr.mxu0 0.0
    %2386 = vmatpush2.xpose.msra.mxu0 0.0
    %2387 = vmatprep.subr.mxu0 0.0
    %2388 = vmatpush2.xpose.msra.mxu0 0.0
    %2389 = vmatprep.subr.mxu0 0.0
    %2390 = vmatpush2.xpose.msra.mxu0 0.0
    %2391 = vmatprep.subr.mxu0 0.0
    %2392 = vmatpush2.xpose.msra.mxu0 0.0
    %2393 = vmatprep.subr.mxu0 0.0
    %2394 = vmatpush2.xpose.msra.mxu0 0.0
    %2395 = vmatprep.subr.mxu0 0.0
    %2396 = vmatpush2.xpose.msra.mxu0 0.0
    %2397 = vmatprep.mubr.f32.mxu0 0.0
    %2398 = vmatmul.mubr.f32.gmra.mxu0 %v2325
    %v2399 = vpop.f32.mrf.mxu0
    %v2400 = vadd.f32 %v69, %v2399
    %v2401 = vpop.f32.mrf.mxu0
    %2402 = vmatprep.mubr.f32.mxu0 0.0
    %2403 = vmatmul.mubr.f32.gmra.mxu0 %v2327
    %v2404 = vpop.f32.mrf.mxu0
    %v2405 = vadd.f32 %v70, %v2404
    %v2406 = vpop.f32.mrf.mxu0
    %2407 = vdwg.mxu0
    %v2408 = vsel %vm258, %v2400, -inf
    %2409 = vmax.xlane.f32.xlu0 %v2408
    %v2410 = vpop.xlane.xlu0 %2409
    %v2411 = vsel %vm258, %v2405, -inf
    %2412 = vmax.xlane.f32.xlu0 %v2411
    %v2413 = vpop.xlane.xlu0 %2412
    %v2414 = vsub.f32 %v2400, %v2410
    %v2415 = vsub.f32 %v2405, %v2413
    %v2416 = vmul.f32 %v2414, 1.442695
    %v2417 = vpow.pop %v2416
    %v2418 = vmul.f32 %v2415, 1.442695
    %v2419 = vpow.pop %v2418
    %v2420 = vsel %vm258, %v2417, 0.0
    %2421 = vadd.xlane.f32.xlu0 %v2420
    %v2422 = vpop.xlane.xlu0 %2421
    %v2423 = vsel %vm258, %v2419, 0.0
    %2424 = vadd.xlane.f32.xlu0 %v2423
    %v2425 = vpop.xlane.xlu0 %2424
    %v2426 = vrcp.pop %v2422
    %v2427 = vrcp.pop %v2425
    %2428 = vrot.lane.b32.xlu0 %v1447, 40
    %v2429 = vpop.permute.xlu0 %2428
    %2430 = vrot.lane.b32.xlu0 %v1452, 40
    %v2431 = vpop.permute.xlu0 %2430
    %v2435 = vsel %vm258, %v2417, 0
    %v2438 = vsel %vm258, %v2419, 0
    %2440 = vmatprep.subr.mxu0 0.0
    %2441 = vmatpush1.msra.mxu0 0.0
    %2442 = vmatprep.subr.mxu0 0.0
    %2443 = vmatpush1.msra.mxu0 0.0
    %2444 = vmatprep.subr.mxu0 0.0
    %2445 = vmatpush1.msra.mxu0 0.0
    %2446 = vmatprep.subr.mxu0 0.0
    %2447 = vmatpush1.msra.mxu0 0.0
    %2448 = vmatprep.subr.mxu0 0.0
    %2449 = vmatpush1.msra.mxu0 0.0
    %2450 = vmatprep.subr.mxu0 0.0
    %2451 = vmatpush1.msra.mxu0 0.0
    %2452 = vmatprep.subr.mxu0 0.0
    %2453 = vmatpush1.msra.mxu0 0.0
    %2454 = vmatprep.subr.mxu0 0.0
    %2455 = vmatpush1.msra.mxu0 0.0
    %2456 = vmatprep.subr.mxu0 0.0
    %2457 = vmatpush1.msra.mxu0 0.0
    %2458 = vmatprep.subr.mxu0 0.0
    %2459 = vmatpush1.msra.mxu0 0.0
    %2460 = vmatprep.subr.mxu0 0.0
    %2461 = vmatpush1.msra.mxu0 0.0
    %2462 = vmatprep.subr.mxu0 0.0
    %2463 = vmatpush1.msra.mxu0 0.0
    %2464 = vmatprep.subr.mxu0 0.0
    %2465 = vmatpush1.msra.mxu0 0.0
    %2466 = vmatprep.subr.mxu0 0.0
    %2467 = vmatpush1.msra.mxu0 0.0
    %2468 = vmatprep.subr.mxu0 0.0
    %2469 = vmatpush1.msra.mxu0 %v2431
    %2470 = vmatprep.subr.mxu0 0.0
    %2471 = vmatpush1.msra.mxu0 %v2429
    %2472 = vmatprep.subr.mxu0 0.0
    %2473 = vmatpush2.msra.mxu0 0.0
    %2474 = vmatprep.subr.mxu0 0.0
    %2475 = vmatpush2.msra.mxu0 0.0
    %2476 = vmatprep.subr.mxu0 0.0
    %2477 = vmatpush2.msra.mxu0 0.0
    %2478 = vmatprep.subr.mxu0 0.0
    %2479 = vmatpush2.msra.mxu0 0.0
    %2480 = vmatprep.subr.mxu0 0.0
    %2481 = vmatpush2.msra.mxu0 0.0
    %2482 = vmatprep.subr.mxu0 0.0
    %2483 = vmatpush2.msra.mxu0 0.0
    %2484 = vmatprep.subr.mxu0 0.0
    %2485 = vmatpush2.msra.mxu0 0.0
    %2486 = vmatprep.subr.mxu0 0.0
    %2487 = vmatpush2.msra.mxu0 0.0
    %2488 = vmatprep.subr.mxu0 0.0
    %2489 = vmatpush2.msra.mxu0 0.0
    %2490 = vmatprep.subr.mxu0 0.0
    %2491 = vmatpush2.msra.mxu0 0.0
    %2492 = vmatprep.subr.mxu0 0.0
    %2493 = vmatpush2.msra.mxu0 0.0
    %2494 = vmatprep.subr.mxu0 0.0
    %2495 = vmatpush2.msra.mxu0 0.0
    %2496 = vmatprep.subr.mxu0 0.0
    %2497 = vmatpush2.msra.mxu0 0.0
    %2498 = vmatprep.subr.mxu0 0.0
    %2499 = vmatpush2.msra.mxu0 0.0
    %2500 = vmatprep.subr.mxu0 0.0
    %2501 = vmatpush2.msra.mxu0 0.0
    %2502 = vmatprep.subr.mxu0 0.0
    %2503 = vmatpush2.msra.mxu0 0.0
    %2504 = vmatprep.mubr.f32.mxu0 0.0
    %2505 = vmatmul.mubr.f32.gmra.mxu0 %v2435
    %v2506 = vpop.f32.mrf.mxu0
    %v2507 = vadd.f32 0.0, %v2506
    %v2508 = vpop.f32.mrf.mxu0
    %2509 = vmatprep.mubr.f32.mxu0 0.0
    %2510 = vmatmul.mubr.f32.gmra.mxu0 %v2438
    %v2511 = vpop.f32.mrf.mxu0
    %v2512 = vadd.f32 0.0, %v2511
    %v2513 = vpop.f32.mrf.mxu0
    %2514 = vdwg.mxu0
    %v2515 = vmul.f32 %v2507, %v2426
    %v2516 = vmul.f32 %v2512, %v2427
    %2518 = vrot.lane.b32.xlu0 %v1366, 32
    %v2519 = vpop.permute.xlu0 %2518
    %v2522 = vsel %vm172, %v2515, 0
    %v2525 = vsel %vm172, %v2516, 0
    %2527 = vmatprep.subr.mxu0 0.0
    %2528 = vmatpush1.msra.mxu0 0.0
    %2529 = vmatprep.subr.mxu0 0.0
    %2530 = vmatpush1.msra.mxu0 0.0
    %2531 = vmatprep.subr.mxu0 0.0
    %2532 = vmatpush1.msra.mxu0 0.0
    %2533 = vmatprep.subr.mxu0 0.0
    %2534 = vmatpush1.msra.mxu0 0.0
    %2535 = vmatprep.subr.mxu0 0.0
    %2536 = vmatpush1.msra.mxu0 0.0
    %2537 = vmatprep.subr.mxu0 0.0
    %2538 = vmatpush1.msra.mxu0 0.0
    %2539 = vmatprep.subr.mxu0 0.0
    %2540 = vmatpush1.msra.mxu0 0.0
    %2541 = vmatprep.subr.mxu0 0.0
    %2542 = vmatpush1.msra.mxu0 0.0
    %2543 = vmatprep.subr.mxu0 0.0
    %2544 = vmatpush1.msra.mxu0 0.0
    %2545 = vmatprep.subr.mxu0 0.0
    %2546 = vmatpush1.msra.mxu0 0.0
    %2547 = vmatprep.subr.mxu0 0.0
    %2548 = vmatpush1.msra.mxu0 0.0
    %2549 = vmatprep.subr.mxu0 0.0
    %2550 = vmatpush1.msra.mxu0 0.0
    %2551 = vmatprep.subr.mxu0 0.0
    %2552 = vmatpush1.msra.mxu0 0.0
    %2553 = vmatprep.subr.mxu0 0.0
    %2554 = vmatpush1.msra.mxu0 0.0
    %2555 = vmatprep.subr.mxu0 0.0
    %2556 = vmatpush1.msra.mxu0 0.0
    %2557 = vmatprep.subr.mxu0 0.0
    %2558 = vmatpush1.msra.mxu0 %v2519
    %2559 = vmatprep.subr.mxu0 0.0
    %2560 = vmatpush2.msra.mxu0 0.0
    %2561 = vmatprep.subr.mxu0 0.0
    %2562 = vmatpush2.msra.mxu0 0.0
    %2563 = vmatprep.subr.mxu0 0.0
    %2564 = vmatpush2.msra.mxu0 0.0
    %2565 = vmatprep.subr.mxu0 0.0
    %2566 = vmatpush2.msra.mxu0 0.0
    %2567 = vmatprep.subr.mxu0 0.0
    %2568 = vmatpush2.msra.mxu0 0.0
    %2569 = vmatprep.subr.mxu0 0.0
    %2570 = vmatpush2.msra.mxu0 0.0
    %2571 = vmatprep.subr.mxu0 0.0
    %2572 = vmatpush2.msra.mxu0 0.0
    %2573 = vmatprep.subr.mxu0 0.0
    %2574 = vmatpush2.msra.mxu0 0.0
    %2575 = vmatprep.subr.mxu0 0.0
    %2576 = vmatpush2.msra.mxu0 0.0
    %2577 = vmatprep.subr.mxu0 0.0
    %2578 = vmatpush2.msra.mxu0 0.0
    %2579 = vmatprep.subr.mxu0 0.0
    %2580 = vmatpush2.msra.mxu0 0.0
    %2581 = vmatprep.subr.mxu0 0.0
    %2582 = vmatpush2.msra.mxu0 0.0
    %2583 = vmatprep.subr.mxu0 0.0
    %2584 = vmatpush2.msra.mxu0 0.0
    %2585 = vmatprep.subr.mxu0 0.0
    %2586 = vmatpush2.msra.mxu0 0.0
    %2587 = vmatprep.subr.mxu0 0.0
    %2588 = vmatpush2.msra.mxu0 0.0
    %2589 = vmatprep.subr.mxu0 0.0
    %2590 = vmatpush2.msra.mxu0 0.0
    %2591 = vmatprep.mubr.f32.mxu0 0.0
    %2592 = vmatmul.mubr.f32.gmra.mxu0 %v2522
    %v2593 = vpop.f32.mrf.mxu0
    %v2594 = vadd.f32 0.0, %v2593
    %v2595 = vpop.f32.mrf.mxu0
    %2596 = vmatprep.mubr.f32.mxu0 0.0
    %2597 = vmatmul.mubr.f32.gmra.mxu0 %v2525
    %v2598 = vpop.f32.mrf.mxu0
    %v2599 = vadd.f32 0.0, %v2598
    %v2600 = vpop.f32.mrf.mxu0
    %2601 = vdwg.mxu0
    %v2602 = vadd.f32 %v2315, %v2594
    %v2603 = vadd.f32 %v2316, %v2599
    %2604 = vrot.lane.b32.xlu0 %v1372, 32
    %v2605 = vpop.permute.xlu0 %2604
    %v2607 = vadd.f32 %v2602, %v2605
    %v2608 = vadd.f32 %v2603, %v2605
    %v2609 = vadd.f32 %v1361, %v2607
    %v2610 = vadd.f32 %v1362, %v2608
    %v2611 = vld [vmem:[#allocation7 + $0x1] sm:$0x1]
    %v2612 = vld [vmem:[#allocation7 + $0x4] sm:$0x1]
    %v2613 = vsel %vm82, %v2609, 0.0
    %2614 = vadd.xlane.f32.xlu0 %v2613
    %v2615 = vpop.xlane.xlu0 %2614
    %v2616 = vsel %vm82, %v2610, 0.0
    %2617 = vadd.xlane.f32.xlu0 %v2616
    %v2618 = vpop.xlane.xlu0 %2617
    %v2619 = vmul.f32 %v2615, %v1330
    %v2620 = vmul.f32 %v2618, %v1330
    %v2621 = vsub.f32 %v2609, %v2619
    %v2622 = vsub.f32 %v2610, %v2620
    %v2623 = vmul.f32 %v2621, %v2621
    %v2624 = vmul.f32 %v2622, %v2622
    %v2625 = vsel %vm82, %v2623, 0.0
    %2626 = vadd.xlane.f32.xlu0 %v2625
    %v2627 = vpop.xlane.xlu0 %2626
    %v2628 = vsel %vm82, %v2624, 0.0
    %2629 = vadd.xlane.f32.xlu0 %v2628
    %v2630 = vpop.xlane.xlu0 %2629
    %v2631 = vmul.f32 %v2627, %v1330
    %v2632 = vmul.f32 %v2630, %v1330
    %v2633 = vadd.f32 %v2631, 1e-05
    %v2634 = vadd.f32 %v2632, 1e-05
    %v2635 = vrsqrt.pop %v2633
    %v2636 = vrsqrt.pop %v2634
    %v2637 = vmul.f32 %v2621, %v2635
    %v2638 = vmul.f32 %v2622, %v2636
    %v2639 = vlaneseq
    %v2640 = vshrl.u32 %v2639, 7
    %v2641 = vsub.s32 0, %v2640
    %v2642 = vrot.slane %v2611, %v2641
    %v2643 = vmul.f32 %v2637, %v2642
    %v2644 = vmul.f32 %v2638, %v2642
    %v2645 = vlaneseq
    %v2646 = vshrl.u32 %v2645, 7
    %v2647 = vsub.s32 0, %v2646
    %v2648 = vrot.slane %v2612, %v2647
    %v2649 = vadd.f32 %v2643, %v2648
    %v2650 = vadd.f32 %v2644, %v2648
    %v2651 = vld [vmem:[#allocation5 + $0x10] sm:$0xff]
    %v2652 = vld [vmem:[#allocation5 + $0x28] sm:$0xff]
    %v2653 = vld [vmem:[#allocation5 + $0x40] sm:$0xff]
    %v2654 = vld [vmem:[#allocation5 + $0x58] sm:$0xff]
    %v2655 = vld [vmem:[%s2 + $0x2] sm:$0x1]
    %v2657 = vlaneseq
    %v2658 = vshrl.u32 %v2657, 7
    %v2659 = vsub.s32 0, %v2658
    %v2660 = vrot.slane %v2655, %v2659
    %v2663 = vsel %vm82, %v2649, 0
    %v2666 = vsel %vm82, %v2650, 0
    %2668 = vmatprep.subr.mxu0 0.0
    %2669 = vmatpush1.msra.mxu0 0.0
    %2670 = vmatprep.subr.mxu0 0.0
    %2671 = vmatpush1.msra.mxu0 0.0
    %2672 = vmatprep.subr.mxu0 0.0
    %2673 = vmatpush1.msra.mxu0 0.0
    %2674 = vmatprep.subr.mxu0 0.0
    %2675 = vmatpush1.msra.mxu0 0.0
    %2676 = vmatprep.subr.mxu0 0.0
    %2677 = vmatpush1.msra.mxu0 0.0
    %2678 = vmatprep.subr.mxu0 0.0
    %2679 = vmatpush1.msra.mxu0 0.0
    %2680 = vmatprep.subr.mxu0 0.0
    %2681 = vmatpush1.msra.mxu0 0.0
    %2682 = vmatprep.subr.mxu0 0.0
    %2683 = vmatpush1.msra.mxu0 0.0
    %2684 = vmatprep.subr.mxu0 0.0
    %2685 = vmatpush1.msra.mxu0 0.0
    %2686 = vmatprep.subr.mxu0 0.0
    %2687 = vmatpush1.msra.mxu0 0.0
    %2688 = vmatprep.subr.mxu0 0.0
    %2689 = vmatpush1.msra.mxu0 0.0
    %2690 = vmatprep.subr.mxu0 0.0
    %2691 = vmatpush1.msra.mxu0 0.0
    %2692 = vmatprep.subr.mxu0 0.0
    %2693 = vmatpush1.msra.mxu0 %v2654
    %2694 = vmatprep.subr.mxu0 0.0
    %2695 = vmatpush1.msra.mxu0 %v2653
    %2696 = vmatprep.subr.mxu0 0.0
    %2697 = vmatpush1.msra.mxu0 %v2652
    %2698 = vmatprep.subr.mxu0 0.0
    %2699 = vmatpush1.msra.mxu0 %v2651
    %2700 = vmatprep.subr.mxu0 0.0
    %2701 = vmatpush2.msra.mxu0 0.0
    %2702 = vmatprep.subr.mxu0 0.0
    %2703 = vmatpush2.msra.mxu0 0.0
    %2704 = vmatprep.subr.mxu0 0.0
    %2705 = vmatpush2.msra.mxu0 0.0
    %2706 = vmatprep.subr.mxu0 0.0
    %2707 = vmatpush2.msra.mxu0 0.0
    %2708 = vmatprep.subr.mxu0 0.0
    %2709 = vmatpush2.msra.mxu0 0.0
    %2710 = vmatprep.subr.mxu0 0.0
    %2711 = vmatpush2.msra.mxu0 0.0
    %2712 = vmatprep.subr.mxu0 0.0
    %2713 = vmatpush2.msra.mxu0 0.0
    %2714 = vmatprep.subr.mxu0 0.0
    %2715 = vmatpush2.msra.mxu0 0.0
    %2716 = vmatprep.subr.mxu0 0.0
    %2717 = vmatpush2.msra.mxu0 0.0
    %2718 = vmatprep.subr.mxu0 0.0
    %2719 = vmatpush2.msra.mxu0 0.0
    %2720 = vmatprep.subr.mxu0 0.0
    %2721 = vmatpush2.msra.mxu0 0.0
    %2722 = vmatprep.subr.mxu0 0.0
    %2723 = vmatpush2.msra.mxu0 0.0
    %2724 = vmatprep.subr.mxu0 0.0
    %2725 = vmatpush2.msra.mxu0 0.0
    %2726 = vmatprep.subr.mxu0 0.0
    %2727 = vmatpush2.msra.mxu0 0.0
    %2728 = vmatprep.subr.mxu0 0.0
    %2729 = vmatpush2.msra.mxu0 0.0
    %2730 = vmatprep.subr.mxu0 0.0
    %2731 = vmatpush2.msra.mxu0 0.0
    %2732 = vmatprep.mubr.f32.mxu0 0.0
    %2733 = vmatmul.mubr.f32.gmra.mxu0 %v2663
    %v2734 = vpop.f32.mrf.mxu0
    %v2735 = vadd.f32 %v2660, %v2734
    %v2736 = vpop.f32.mrf.mxu0
    %2737 = vmatprep.mubr.f32.mxu0 0.0
    %2738 = vmatmul.mubr.f32.gmra.mxu0 %v2666
    %v2739 = vpop.f32.mrf.mxu0
    %v2740 = vadd.f32 %v2660, %v2739
    %v2741 = vpop.f32.mrf.mxu0
    %2742 = vdwg.mxu0
    %v2743 = vmax.f32 %v2735, 0.0
    %v2744 = vmax.f32 %v2740, 0.0
    %2749 = vrot.lane.b32.xlu0 %v2651, 64
    %v2750 = vpop.permute.xlu0 %2749
    %2751 = vrot.lane.b32.xlu0 %v2652, 64
    %v2752 = vpop.permute.xlu0 %2751
    %2753 = vrot.lane.b32.xlu0 %v2653, 64
    %v2754 = vpop.permute.xlu0 %2753
    %2755 = vrot.lane.b32.xlu0 %v2654, 64
    %v2756 = vpop.permute.xlu0 %2755
    %2757 = vrot.lane.b32.xlu0 %v2660, 64
    %v2758 = vpop.permute.xlu0 %2757
    %vm2760 = vcmask 523264
    %v2762 = vsel %vm2760, %v2743, 0
    %v2765 = vsel %vm2760, %v2744, 0
    %v2767 = vsel %vm2760, %v2750, 0
    %v2769 = vsel %vm2760, %v2752, 0
    %v2771 = vsel %vm2760, %v2754, 0
    %v2773 = vsel %vm2760, %v2756, 0
    %2775 = vmatprep.subr.mxu0 0.0
    %2776 = vmatpush1.xpose.msra.mxu0 0.0
    %2777 = vmatprep.subr.mxu0 0.0
    %2778 = vmatpush1.xpose.msra.mxu0 0.0
    %2779 = vmatprep.subr.mxu0 0.0
    %2780 = vmatpush1.xpose.msra.mxu0 0.0
    %2781 = vmatprep.subr.mxu0 0.0
    %2782 = vmatpush1.xpose.msra.mxu0 0.0
    %2783 = vmatprep.subr.mxu0 0.0
    %2784 = vmatpush1.xpose.msra.mxu0 0.0
    %2785 = vmatprep.subr.mxu0 0.0
    %2786 = vmatpush1.xpose.msra.mxu0 0.0
    %2787 = vmatprep.subr.mxu0 0.0
    %2788 = vmatpush1.xpose.msra.mxu0 0.0
    %2789 = vmatprep.subr.mxu0 0.0
    %2790 = vmatpush1.xpose.msra.mxu0 0.0
    %2791 = vmatprep.subr.mxu0 0.0
    %2792 = vmatpush1.xpose.msra.mxu0 0.0
    %2793 = vmatprep.subr.mxu0 0.0
    %2794 = vmatpush1.xpose.msra.mxu0 0.0
    %2795 = vmatprep.subr.mxu0 0.0
    %2796 = vmatpush1.xpose.msra.mxu0 0.0
    %2797 = vmatprep.subr.mxu0 0.0
    %2798 = vmatpush1.xpose.msra.mxu0 0.0
    %2799 = vmatprep.subr.mxu0 0.0
    %2800 = vmatpush1.xpose.msra.mxu0 %v2773
    %2801 = vmatprep.subr.mxu0 0.0
    %2802 = vmatpush1.xpose.msra.mxu0 %v2771
    %2803 = vmatprep.subr.mxu0 0.0
    %2804 = vmatpush1.xpose.msra.mxu0 %v2769
    %2805 = vmatprep.subr.mxu0 0.0
    %2806 = vmatpush1.xpose.msra.mxu0 %v2767
    %2807 = vmatprep.subr.mxu0 0.0
    %2808 = vmatpush2.xpose.msra.mxu0 0.0
    %2809 = vmatprep.subr.mxu0 0.0
    %2810 = vmatpush2.xpose.msra.mxu0 0.0
    %2811 = vmatprep.subr.mxu0 0.0
    %2812 = vmatpush2.xpose.msra.mxu0 0.0
    %2813 = vmatprep.subr.mxu0 0.0
    %2814 = vmatpush2.xpose.msra.mxu0 0.0
    %2815 = vmatprep.subr.mxu0 0.0
    %2816 = vmatpush2.xpose.msra.mxu0 0.0
    %2817 = vmatprep.subr.mxu0 0.0
    %2818 = vmatpush2.xpose.msra.mxu0 0.0
    %2819 = vmatprep.subr.mxu0 0.0
    %2820 = vmatpush2.xpose.msra.mxu0 0.0
    %2821 = vmatprep.subr.mxu0 0.0
    %2822 = vmatpush2.xpose.msra.mxu0 0.0
    %2823 = vmatprep.subr.mxu0 0.0
    %2824 = vmatpush2.xpose.msra.mxu0 0.0
    %2825 = vmatprep.subr.mxu0 0.0
    %2826 = vmatpush2.xpose.msra.mxu0 0.0
    %2827 = vmatprep.subr.mxu0 0.0
    %2828 = vmatpush2.xpose.msra.mxu0 0.0
    %2829 = vmatprep.subr.mxu0 0.0
    %2830 = vmatpush2.xpose.msra.mxu0 0.0
    %2831 = vmatprep.subr.mxu0 0.0
    %2832 = vmatpush2.xpose.msra.mxu0 0.0
    %2833 = vmatprep.subr.mxu0 0.0
    %2834 = vmatpush2.xpose.msra.mxu0 0.0
    %2835 = vmatprep.subr.mxu0 0.0
    %2836 = vmatpush2.xpose.msra.mxu0 0.0
    %2837 = vmatprep.subr.mxu0 0.0
    %2838 = vmatpush2.xpose.msra.mxu0 0.0
    %2839 = vmatprep.mubr.f32.mxu0 0.0
    %2840 = vmatmul.mubr.f32.gmra.mxu0 %v2762
    %v2841 = vpop.f32.mrf.mxu0
    %v2842 = vadd.f32 %v2758, %v2841
    %v2843 = vpop.f32.mrf.mxu0
    %2844 = vmatprep.mubr.f32.mxu0 0.0
    %2845 = vmatmul.mubr.f32.gmra.mxu0 %v2765
    %v2846 = vpop.f32.mrf.mxu0
    %v2847 = vadd.f32 %v2758, %v2846
    %v2848 = vpop.f32.mrf.mxu0
    %2849 = vdwg.mxu0
    %v2850 = vadd.f32 %v2649, %v2842
    %v2851 = vadd.f32 %v2650, %v2847
    %v2852 = vld [vmem:[#allocation7 + $0x2] sm:$0x1]
    %v2853 = vld [vmem:[#allocation7 + $0x5] sm:$0x1]
    %v2854 = vsel %vm82, %v2850, 0.0
    %2855 = vadd.xlane.f32.xlu0 %v2854
    %v2856 = vpop.xlane.xlu0 %2855
    %v2857 = vsel %vm82, %v2851, 0.0
    %2858 = vadd.xlane.f32.xlu0 %v2857
    %v2859 = vpop.xlane.xlu0 %2858
    %v2860 = vmul.f32 %v2856, %v1330
    %v2861 = vmul.f32 %v2859, %v1330
    %v2862 = vsub.f32 %v2850, %v2860
    %v2863 = vsub.f32 %v2851, %v2861
    %v2864 = vmul.f32 %v2862, %v2862
    %v2865 = vmul.f32 %v2863, %v2863
    %v2866 = vsel %vm82, %v2864, 0.0
    %2867 = vadd.xlane.f32.xlu0 %v2866
    %v2868 = vpop.xlane.xlu0 %2867
    %v2869 = vsel %vm82, %v2865, 0.0
    %2870 = vadd.xlane.f32.xlu0 %v2869
    %v2871 = vpop.xlane.xlu0 %2870
    %v2872 = vmul.f32 %v2868, %v1330
    %v2873 = vmul.f32 %v2871, %v1330
    %v2874 = vadd.f32 %v2872, 1e-05
    %v2875 = vadd.f32 %v2873, 1e-05
    %v2876 = vrsqrt.pop %v2874
    %v2877 = vrsqrt.pop %v2875
    %v2878 = vmul.f32 %v2862, %v2876
    %v2879 = vmul.f32 %v2863, %v2877
    %v2880 = vlaneseq
    %v2881 = vshrl.u32 %v2880, 7
    %v2882 = vsub.s32 0, %v2881
    %v2883 = vrot.slane %v2852, %v2882
    %v2884 = vmul.f32 %v2878, %v2883
    %v2885 = vmul.f32 %v2879, %v2883
    %v2886 = vlaneseq
    %v2887 = vshrl.u32 %v2886, 7
    %v2888 = vsub.s32 0, %v2887
    %v2889 = vrot.slane %v2853, %v2888
    %v2890 = vadd.f32 %v2884, %v2889
    %v2891 = vadd.f32 %v2885, %v2889
    %2892 = vst.msk [vmem:[#allocation8] sm:$0xff] %vm82, %v2890
    %2893 = vst.msk [vmem:[#allocation8 + $0x8] sm:$0xff] %vm82, %v2891
    // Predicated region
    $region30: #{tpu_custom_call.1} parent=1 // pred_check
      _
    $region31: #{tpu_custom_call.1} parent=1 // pred_check_branch
      %2895 = sbr.rel (0) target = $region33
    $region32: #{tpu_custom_call.1} parent=1 // pred_region
      %s2897 = ssub.s32 256, 256
      %2898 = vsyncadd [#allocation4], %s2897
      %s2899 = sshll.u32 [#allocation8], 4
      %s2900 = int_to_ptr.vmem [resolvable:$true] %s2899
      %2905 = dma.vmem_to_hbm [thread:$0]  %s2900, 256, %s4, [#allocation4], 128, 128, 8
    $region33: #{tpu_custom_call.1} parent=1 // pred_fallthru
      _
    // Predicated region
    $region34: #{tpu_custom_call.1} parent=1 // pred_check
      _
    $region35: #{tpu_custom_call.1} parent=1 // pred_check_branch
      %2907 = sbr.rel (0) target = $region37
    $region36: #{tpu_custom_call.1} parent=1 // pred_region
      %2908 = dma.done [#allocation4], 256
    $region37: #{tpu_custom_call.1} parent=1 // pred_fallthru
      _
    %2909 = vsyncpa [#allocation3], 1
    %2910 = vsyncpa [#allocation6], 1
    %2911 = vsyncpa [#allocation4], 1

</llo_original>
